<compile_context>
chip_gen: v7x
topology: tpu7x:2x2x1
jax: 0.10.0
libtpu: 0.0.40
codegen_flags: <defaults>
</compile_context>

<pallas_src>
import numpy as np

import jax
import jax.numpy as jnp
from jax.experimental import pallas as pl
from jax.experimental.pallas import tpu as pltpu


# ---------------------------------------------------------------------------
# Fused LeNet kernel: TB samples per grid step, everything VMEM-resident.
#
# Row layout (2-D, rows = (sample, spatial-row), cols = (channel, col)):
#   xf  [b*32 + r,  w           ]   input rows
#   d1  [b*32 + oh, oc*28 + ow  ]   conv1 output (dense; oh<=27 valid)
#   pw  [b*32 + r,  c*28  + q   ]   dense 2x2 pair-max of d1 (pool1 at even r,q)
#   pwc [b*16 + i,  c*28  + q   ]   pool1 rows compacted to 16/sample (i<=13 valid)
#   d2  [b*16 + i2, oc2*10 + ow2]   conv2 output (i2<=9 valid)
# ---------------------------------------------------------------------------
def _lenet_kernel(x_ref, a1_ref, b1_ref, sel1_ref, a2_ref, b2_ref, sel2_ref,
                  f1_ref, bf1_ref, w2_ref, bf2_ref, w3_ref, bf3_ref, o_ref):
    bf16 = jnp.bfloat16
    tb = o_ref.shape[0]           # samples in this block (static)
    G = tb * 32 - 4               # dense conv1 row count
    R2 = tb * 16 - 4              # dense conv2 row count

    xf = x_ref[...]                                            # (tb*32, 32) f32

    # ---- conv1 (5x5, 1->6) + bias + ReLU: single K-stacked banded matmul ----
    # lhs1[g, kh*32 + w] = xf[g + kh, w]; valid output rows g = b*32 + oh, oh<=27.
    lhs1 = jnp.concatenate([xf[kh:kh + G, :] for kh in range(5)], axis=1)  # (G,160)
    d1 = jnp.dot(lhs1.astype(bf16), a1_ref[...],
                 preferred_element_type=jnp.float32)           # (G, 168)
    d1 = jnp.maximum(d1 + b1_ref[...], 0.0)

    # ---- max-pool 2x2 #1: dense VPU pair-max (stride-2 subsample folded into
    #      SEL1 rows / A2 columns, both built at init) ------------------------
    ph = jnp.maximum(d1[0:G - 1, :], d1[1:G, :])               # pair-max over h
    pw = jnp.maximum(ph[:, 0:167], ph[:, 1:168])               # (G-1, 167)

    # ---- compact pool1 rows to 16 per sample (selection matmul) -------------
    pwc = jnp.dot(sel1_ref[...], pw.astype(bf16),
                  preferred_element_type=jnp.float32)          # (tb*16, 167)

    # ---- conv2 (5x5, 6->16) + bias + ReLU: single K-stacked banded matmul ---
    lhs2 = jnp.concatenate([pwc[kh:kh + R2, :] for kh in range(5)], axis=1)  # (R2,835)
    d2 = jnp.dot(lhs2.astype(bf16), a2_ref[...],
                 preferred_element_type=jnp.float32)           # (R2, 160)
    d2 = jnp.maximum(d2 + b2_ref[...], 0.0)

    # ---- max-pool 2x2 #2 (dense pair-max) ------------------------------------
    mh = jnp.maximum(d2[0:R2 - 1, :], d2[1:R2, :])             # (R2-1, 160)
    mw = jnp.maximum(mh[:, 0:159], mh[:, 1:160])               # (R2-1, 159)
    mwb = mw.astype(bf16)

    # ---- gather the 5 pooled rows per sample into lanes (5 tiny selection
    #      dots), then fc1 as ONE (tb, 795) x (795, 120) dot + ReLU -----------
    pieces = [jnp.dot(sel2_ref[i3], mwb, preferred_element_type=jnp.float32)
              for i3 in range(5)]                              # each (tb, 159)
    fc1_lhs = jnp.concatenate(pieces, axis=1)                  # (tb, 795)
    h = jnp.dot(fc1_lhs.astype(bf16), f1_ref[...],
                preferred_element_type=jnp.float32)
    h = jnp.maximum(h + bf1_ref[...], 0.0)                     # (tb, 120)

    # ---- fc2 (+ReLU), fc3 (lane-padded to 128 outputs) -----------------------
    h = jnp.dot(h.astype(bf16), w2_ref[...], preferred_element_type=jnp.float32)
    h = jnp.maximum(h + bf2_ref[...], 0.0)                     # (tb, 84)
    out = jnp.dot(h.astype(bf16), w3_ref[...], preferred_element_type=jnp.float32)
    o_ref[...] = out + bf3_ref[...]                            # (tb, 128)


# ---------------------------------------------------------------------------
# Parameters (PyTorch layout, same shapes as LeNetPytorch)
# ---------------------------------------------------------------------------
def init_lenet_params(key):
    ks = jax.random.split(key, 10)
    return {
        "conv1_w": 0.1 * jax.random.normal(ks[0], (6, 1, 5, 5), jnp.float32),
        "conv1_b": 0.1 * jax.random.normal(ks[1], (6,), jnp.float32),
        "conv2_w": 0.1 * jax.random.normal(ks[2], (16, 6, 5, 5), jnp.float32),
        "conv2_b": 0.1 * jax.random.normal(ks[3], (16,), jnp.float32),
        "fc1_w": 0.1 * jax.random.normal(ks[4], (120, 16 * 5 * 5), jnp.float32),
        "fc1_b": 0.1 * jax.random.normal(ks[5], (120,), jnp.float32),
        "fc2_w": 0.1 * jax.random.normal(ks[6], (84, 120), jnp.float32),
        "fc2_b": 0.1 * jax.random.normal(ks[7], (84,), jnp.float32),
        "fc3_w": 0.1 * jax.random.normal(ks[8], (10, 84), jnp.float32),
        "fc3_b": 0.1 * jax.random.normal(ks[9], (84,), jnp.float32)[:10] * 0
                 + 0.1 * jax.random.normal(ks[9], (10,), jnp.float32),
    }


def build_kernel_operands(params, tb):
    """One-time (init-time) weight pre-transform into the kernel's matrices."""
    assert tb % 8 == 0, "tb (samples per grid step) should be a multiple of 8"
    w1 = np.asarray(params["conv1_w"], np.float32)       # (6,1,5,5)
    b1 = np.asarray(params["conv1_b"], np.float32)
    w2 = np.asarray(params["conv2_w"], np.float32)       # (16,6,5,5)
    b2 = np.asarray(params["conv2_b"], np.float32)
    fc1_w = np.asarray(params["fc1_w"], np.float32)      # (120,400)
    fc1_b = np.asarray(params["fc1_b"], np.float32)
    fc2_w = np.asarray(params["fc2_w"], np.float32)      # (84,120)
    fc2_b = np.asarray(params["fc2_b"], np.float32)
    fc3_w = np.asarray(params["fc3_w"], np.float32)      # (10,84)
    fc3_b = np.asarray(params["fc3_b"], np.float32)

    # conv1 K-stacked banded matrix: A1[kh*32 + w, oc*28 + ow] = w1[oc,0,kh,w-ow]
    A1 = np.zeros((5 * 32, 6 * 28), np.float32)
    ow = np.arange(28)
    for oc in range(6):
        for kh in range(5):
            for kw in range(5):
                A1[kh * 32 + ow + kw, oc * 28 + ow] = w1[oc, 0, kh, kw]
    b1row = np.repeat(b1, 28)[None, :]                    # (1, 168)

    # pool1 row compaction: row b*16+i of pwc = dense pool row b*32 + 2*i (i<=13)
    SEL1 = np.zeros((tb * 16, tb * 32 - 5), np.float32)
    for b in range(tb):
        for i in range(14):
            SEL1[b * 16 + i, b * 32 + 2 * i] = 1.0

    # conv2 K-stacked banded matrix over pw's fused (channel, pooled-w) columns;
    # the stride-2 pooling subsample along w is folded in here for free.
    A2 = np.zeros((5 * 167, 16 * 10), np.float32)
    ow2 = np.arange(10)
    for oc2 in range(16):
        for c in range(6):
            for kh in range(5):
                for kw in range(5):
                    A2[kh * 167 + c * 28 + 2 * (ow2 + kw), oc2 * 10 + ow2] = \
                        w2[oc2, c, kh, kw]
    b2row = np.repeat(b2, 10)[None, :]                    # (1, 160)

    # pool2 row selections: pieces[i3][b] = mw row b*16 + 2*i3
    SEL2 = np.zeros((5, tb, tb * 16 - 5), np.float32)
    for i3 in range(5):
        for b in range(tb):
            SEL2[i3, b, b * 16 + 2 * i3] = 1.0

    # fc1 over the lane-concatenated pooled row space (PyTorch flatten = c2*25+i3*5+j3)
    F1 = np.zeros((5 * 159, 120), np.float32)
    for c2 in range(16):
        for i3 in range(5):
            for j3 in range(5):
                F1[i3 * 159 + c2 * 10 + 2 * j3, :] = fc1_w[:, c2 * 25 + i3 * 5 + j3]

    # fc3 lane-padded to 128 output lanes (lane-dense store; wrapper slices :10)
    W3 = np.zeros((84, 128), np.float32)
    W3[:, :10] = fc3_w.T
    b3 = np.zeros((1, 128), np.float32)
    b3[0, :10] = fc3_b

    bfl = lambda a: jnp.asarray(a, jnp.bfloat16)
    f32 = lambda a: jnp.asarray(a, jnp.float32)
    return (
        bfl(A1), f32(b1row), bfl(SEL1),
        bfl(A2), f32(b2row), bfl(SEL2),
        bfl(F1), f32(fc1_b[None, :]),
        bfl(fc2_w.T), f32(fc2_b[None, :]),
        bfl(W3), f32(b3),
    )


# ---------------------------------------------------------------------------
# Forward pass: a single pallas_call, grid over batch blocks of TB samples.
# ---------------------------------------------------------------------------
@jax.jit
def lenet_forward(x, ops):
    """x: (B, 1, 32, 32) f32 NCHW (as PyTorch). Returns (B, 10) logits."""
    assert x.shape[1:] == (1, 32, 32), "LeNet expects (B, 1, 32, 32) input"
    B = x.shape[0]
    tb = ops[2].shape[0] // 16          # infer samples-per-block from SEL1
    assert B % tb == 0, "batch must be a multiple of the per-step block size"
    xf = x.reshape(B * 32, 32)          # rows = (sample, image-row)

    def wspec(a):
        # Constant block index -> the pipeline fetches each weight block once and
        # does not re-DMA it on later grid steps (block index never changes).
        return pl.BlockSpec(a.shape, lambda i: (0,) * a.ndim)

    out = pl.pallas_call(
        _lenet_kernel,
        out_shape=jax.ShapeDtypeStruct((B, 128), jnp.float32),
        grid=(B // tb,),
        in_specs=[pl.BlockSpec((tb * 32, 32), lambda i: (i, 0))]
                 + [wspec(a) for a in ops],
        out_specs=pl.BlockSpec((tb, 128), lambda i: (i, 0)),
        compiler_params=pltpu.CompilerParams(
            dimension_semantics=("parallel",)),
    )(xf, *ops)
    return out[:, :10]


# ---------------------------------------------------------------------------
# Pure NumPy (float64) reference for a correctness check.
# ---------------------------------------------------------------------------
def _ref_forward_np(x, params):
    x = np.asarray(x, np.float64)
    w1 = np.asarray(params["conv1_w"], np.float64)
    b1 = np.asarray(params["conv1_b"], np.float64)
    w2 = np.asarray(params["conv2_w"], np.float64)
    b2 = np.asarray(params["conv2_b"], np.float64)

    def conv(a, w, b):
        B, C, H, W = a.shape
        OC, _, K, _ = w.shape
        OH, OW = H - K + 1, W - K + 1
        out = np.tile(b[None, :, None, None], (B, 1, OH, OW))
        for kh in range(K):
            for kw in range(K):
                out += np.einsum("bchw,oc->bohw",
                                 a[:, :, kh:kh + OH, kw:kw + OW], w[:, :, kh, kw])
        return out

    def pool(a):
        return np.maximum(np.maximum(a[:, :, 0::2, 0::2], a[:, :, 0::2, 1::2]),
                          np.maximum(a[:, :, 1::2, 0::2], a[:, :, 1::2, 1::2]))

    h = pool(np.maximum(conv(x, w1, b1), 0.0))
    h = pool(np.maximum(conv(h, w2, b2), 0.0))
    h = h.reshape(h.shape[0], -1)
    h = np.maximum(h @ np.asarray(params["fc1_w"], np.float64).T
                   + np.asarray(params["fc1_b"], np.float64), 0.0)
    h = np.maximum(h @ np.asarray(params["fc2_w"], np.float64).T
                   + np.asarray(params["fc2_b"], np.float64), 0.0)
    return (h @ np.asarray(params["fc3_w"], np.float64).T
            + np.asarray(params["fc3_b"], np.float64))


if __name__ == "__main__":
    key = jax.random.PRNGKey(0)
    k_x, k_p = jax.random.split(key)
    # LeNet's fc1 (16*5*5 inputs) implies 32x32 single-channel input.
    # B=16 with TB=8 samples per grid step -> 2 grid steps ("parallel" axis can
    # span both v7x TensorCores).
    B, TB = 16, 8
    x = jax.random.normal(k_x, (B, 1, 32, 32), jnp.float32)
    params = init_lenet_params(k_p)
    ops = build_kernel_operands(params, TB)      # one-time weight pre-transform

    y = lenet_forward(x, ops)
    jax.block_until_ready(y)
    assert y.shape == (B, 10) and y.dtype == jnp.float32

    ref = _ref_forward_np(x, params)
    # Tolerance covers the deliberate bf16 matmul operands (f32 accumulation).
    np.testing.assert_allclose(np.asarray(y), ref, rtol=5e-2, atol=5e-2)
    print("KERNEL_OK")
</pallas_src>

<mosaic_0001>
module attributes {stable_mosaic.version = 11 : i64} {
  func.func @_lenet_kernel(%arg0: i32, %arg1: memref<256x32xf32, #tpu.memory_space<vmem>>, %arg2: memref<160x168xbf16, #tpu.memory_space<vmem>>, %arg3: memref<1x168xf32, #tpu.memory_space<vmem>>, %arg4: memref<128x251xbf16, #tpu.memory_space<vmem>>, %arg5: memref<835x160xbf16, #tpu.memory_space<vmem>>, %arg6: memref<1x160xf32, #tpu.memory_space<vmem>>, %arg7: memref<5x8x123xbf16, #tpu.memory_space<vmem>>, %arg8: memref<795x120xbf16, #tpu.memory_space<vmem>>, %arg9: memref<1x120xf32, #tpu.memory_space<vmem>>, %arg10: memref<120x84xbf16, #tpu.memory_space<vmem>>, %arg11: memref<1x84xf32, #tpu.memory_space<vmem>>, %arg12: memref<84x128xbf16, #tpu.memory_space<vmem>>, %arg13: memref<1x128xf32, #tpu.memory_space<vmem>>, %arg14: memref<8x128xf32, #tpu.memory_space<vmem>>) attributes {dimension_semantics = [#tpu.dimension_semantics<parallel>], iteration_bounds = array<i64: 2>, scalar_prefetch = 0 : i64, scratch_operands = 0 : i64, tpu.core_type = #tpu.core_type<tc>, window_params = [{transform_indices = @transform_0, window_bounds = array<i64: 256, 32>}, {pipeline_mode = #tpu.pipeline_mode<synchronous>, transform_indices = @transform_1, window_bounds = array<i64: 160, 168>}, {pipeline_mode = #tpu.pipeline_mode<synchronous>, transform_indices = @transform_2, window_bounds = array<i64: 1, 168>}, {pipeline_mode = #tpu.pipeline_mode<synchronous>, transform_indices = @transform_3, window_bounds = array<i64: 128, 251>}, {pipeline_mode = #tpu.pipeline_mode<synchronous>, transform_indices = @transform_4, window_bounds = array<i64: 835, 160>}, {pipeline_mode = #tpu.pipeline_mode<synchronous>, transform_indices = @transform_5, window_bounds = array<i64: 1, 160>}, {pipeline_mode = #tpu.pipeline_mode<synchronous>, transform_indices = @transform_6, window_bounds = array<i64: 5, 8, 123>}, {pipeline_mode = #tpu.pipeline_mode<synchronous>, transform_indices = @transform_7, window_bounds = array<i64: 795, 120>}, {pipeline_mode = #tpu.pipeline_mode<synchronous>, transform_indices = @transform_8, window_bounds = array<i64: 1, 120>}, {pipeline_mode = #tpu.pipeline_mode<synchronous>, transform_indices = @transform_9, window_bounds = array<i64: 120, 84>}, {pipeline_mode = #tpu.pipeline_mode<synchronous>, transform_indices = @transform_10, window_bounds = array<i64: 1, 84>}, {pipeline_mode = #tpu.pipeline_mode<synchronous>, transform_indices = @transform_11, window_bounds = array<i64: 84, 128>}, {pipeline_mode = #tpu.pipeline_mode<synchronous>, transform_indices = @transform_12, window_bounds = array<i64: 1, 128>}, {transform_indices = @transform_13, window_bounds = array<i64: 8, 128>}]} {
    %c0 = arith.constant 0 : index
    %c0_0 = arith.constant 0 : index
    %0 = vector.load %arg1[%c0, %c0_0] : memref<256x32xf32, #tpu.memory_space<vmem>>, vector<256x32xf32>
    %1 = vector.extract_strided_slice %0 {offsets = [0, 0], sizes = [252, 32], strides = [1, 1]} : vector<256x32xf32> to vector<252x32xf32>
    %2 = vector.extract_strided_slice %0 {offsets = [1, 0], sizes = [252, 32], strides = [1, 1]} : vector<256x32xf32> to vector<252x32xf32>
    %3 = vector.extract_strided_slice %0 {offsets = [2, 0], sizes = [252, 32], strides = [1, 1]} : vector<256x32xf32> to vector<252x32xf32>
    %4 = vector.extract_strided_slice %0 {offsets = [3, 0], sizes = [252, 32], strides = [1, 1]} : vector<256x32xf32> to vector<252x32xf32>
    %5 = vector.extract_strided_slice %0 {offsets = [4, 0], sizes = [252, 32], strides = [1, 1]} : vector<256x32xf32> to vector<252x32xf32>
    %6 = tpu.concatenate %1, %2, %3, %4, %5 in 1 : vector<252x32xf32>, vector<252x32xf32>, vector<252x32xf32>, vector<252x32xf32>, vector<252x32xf32> -> vector<252x160xf32>
    %7 = arith.truncf %6 : vector<252x160xf32> to vector<252x160xbf16>
    %c0_1 = arith.constant 0 : index
    %c0_2 = arith.constant 0 : index
    %8 = vector.load %arg2[%c0_1, %c0_2] : memref<160x168xbf16, #tpu.memory_space<vmem>>, vector<160x168xbf16>
    %cst = arith.constant dense<0.000000e+00> : vector<252x168xf32>
    %9 = tpu.matmul %7, %8, %cst {dimension_numbers = #tpu.dot_dimension_numbers<[1], [0], [0], [1], [0, 0, 1, 1], [], []>} : vector<252x160xbf16>, vector<160x168xbf16>, vector<252x168xf32> -> vector<252x168xf32>
    %c0_3 = arith.constant 0 : index
    %c0_4 = arith.constant 0 : index
    %10 = vector.load %arg3[%c0_3, %c0_4] : memref<1x168xf32, #tpu.memory_space<vmem>>, vector<1x168xf32>
    %11 = vector.broadcast %10 : vector<1x168xf32> to vector<252x168xf32>
    %12 = arith.addf %9, %11 : vector<252x168xf32>
    %cst_5 = arith.constant 0.000000e+00 : f32
    %13 = vector.broadcast %cst_5 : f32 to vector<252x168xf32>
    %14 = arith.maximumf %12, %13 : vector<252x168xf32>
    %15 = vector.extract_strided_slice %14 {offsets = [0, 0], sizes = [251, 168], strides = [1, 1]} : vector<252x168xf32> to vector<251x168xf32>
    %16 = vector.extract_strided_slice %14 {offsets = [1, 0], sizes = [251, 168], strides = [1, 1]} : vector<252x168xf32> to vector<251x168xf32>
    %17 = arith.maximumf %15, %16 : vector<251x168xf32>
    %18 = vector.extract_strided_slice %17 {offsets = [0, 0], sizes = [251, 167], strides = [1, 1]} : vector<251x168xf32> to vector<251x167xf32>
    %19 = vector.extract_strided_slice %17 {offsets = [0, 1], sizes = [251, 167], strides = [1, 1]} : vector<251x168xf32> to vector<251x167xf32>
    %20 = arith.maximumf %18, %19 : vector<251x167xf32>
    %c0_6 = arith.constant 0 : index
    %c0_7 = arith.constant 0 : index
    %21 = vector.load %arg4[%c0_6, %c0_7] : memref<128x251xbf16, #tpu.memory_space<vmem>>, vector<128x251xbf16>
    %22 = arith.truncf %20 : vector<251x167xf32> to vector<251x167xbf16>
    %cst_8 = arith.constant dense<0.000000e+00> : vector<128x167xf32>
    %23 = tpu.matmul %21, %22, %cst_8 {dimension_numbers = #tpu.dot_dimension_numbers<[1], [0], [0], [1], [0, 0, 1, 1], [], []>} : vector<128x251xbf16>, vector<251x167xbf16>, vector<128x167xf32> -> vector<128x167xf32>
    %24 = vector.extract_strided_slice %23 {offsets = [0, 0], sizes = [124, 167], strides = [1, 1]} : vector<128x167xf32> to vector<124x167xf32>
    %25 = vector.extract_strided_slice %23 {offsets = [1, 0], sizes = [124, 167], strides = [1, 1]} : vector<128x167xf32> to vector<124x167xf32>
    %26 = vector.extract_strided_slice %23 {offsets = [2, 0], sizes = [124, 167], strides = [1, 1]} : vector<128x167xf32> to vector<124x167xf32>
    %27 = vector.extract_strided_slice %23 {offsets = [3, 0], sizes = [124, 167], strides = [1, 1]} : vector<128x167xf32> to vector<124x167xf32>
    %28 = vector.extract_strided_slice %23 {offsets = [4, 0], sizes = [124, 167], strides = [1, 1]} : vector<128x167xf32> to vector<124x167xf32>
    %29 = tpu.concatenate %24, %25, %26, %27, %28 in 1 : vector<124x167xf32>, vector<124x167xf32>, vector<124x167xf32>, vector<124x167xf32>, vector<124x167xf32> -> vector<124x835xf32>
    %30 = arith.truncf %29 : vector<124x835xf32> to vector<124x835xbf16>
    %c0_9 = arith.constant 0 : index
    %c0_10 = arith.constant 0 : index
    %31 = vector.load %arg5[%c0_9, %c0_10] : memref<835x160xbf16, #tpu.memory_space<vmem>>, vector<835x160xbf16>
    %cst_11 = arith.constant dense<0.000000e+00> : vector<124x160xf32>
    %32 = tpu.matmul %30, %31, %cst_11 {dimension_numbers = #tpu.dot_dimension_numbers<[1], [0], [0], [1], [0, 0, 1, 1], [], []>} : vector<124x835xbf16>, vector<835x160xbf16>, vector<124x160xf32> -> vector<124x160xf32>
    %c0_12 = arith.constant 0 : index
    %c0_13 = arith.constant 0 : index
    %33 = vector.load %arg6[%c0_12, %c0_13] : memref<1x160xf32, #tpu.memory_space<vmem>>, vector<1x160xf32>
    %34 = vector.broadcast %33 : vector<1x160xf32> to vector<124x160xf32>
    %35 = arith.addf %32, %34 : vector<124x160xf32>
    %cst_14 = arith.constant 0.000000e+00 : f32
    %36 = vector.broadcast %cst_14 : f32 to vector<124x160xf32>
    %37 = arith.maximumf %35, %36 : vector<124x160xf32>
    %38 = vector.extract_strided_slice %37 {offsets = [0, 0], sizes = [123, 160], strides = [1, 1]} : vector<124x160xf32> to vector<123x160xf32>
    %39 = vector.extract_strided_slice %37 {offsets = [1, 0], sizes = [123, 160], strides = [1, 1]} : vector<124x160xf32> to vector<123x160xf32>
    %40 = arith.maximumf %38, %39 : vector<123x160xf32>
    %41 = vector.extract_strided_slice %40 {offsets = [0, 0], sizes = [123, 159], strides = [1, 1]} : vector<123x160xf32> to vector<123x159xf32>
    %42 = vector.extract_strided_slice %40 {offsets = [0, 1], sizes = [123, 159], strides = [1, 1]} : vector<123x160xf32> to vector<123x159xf32>
    %43 = arith.maximumf %41, %42 : vector<123x159xf32>
    %44 = arith.truncf %43 : vector<123x159xf32> to vector<123x159xbf16>
    %c0_15 = arith.constant 0 : index
    %c0_16 = arith.constant 0 : index
    %c0_17 = arith.constant 0 : index
    %45 = vector.load %arg7[%c0_15, %c0_16, %c0_17] : memref<5x8x123xbf16, #tpu.memory_space<vmem>>, vector<1x8x123xbf16>
    %46 = vector.shape_cast %45 : vector<1x8x123xbf16> to vector<8x123xbf16>
    %cst_18 = arith.constant dense<0.000000e+00> : vector<8x159xf32>
    %47 = tpu.matmul %46, %44, %cst_18 {dimension_numbers = #tpu.dot_dimension_numbers<[1], [0], [0], [1], [0, 0, 1, 1], [], []>} : vector<8x123xbf16>, vector<123x159xbf16>, vector<8x159xf32> -> vector<8x159xf32>
    %c1 = arith.constant 1 : index
    %c0_19 = arith.constant 0 : index
    %c0_20 = arith.constant 0 : index
    %48 = vector.load %arg7[%c1, %c0_19, %c0_20] : memref<5x8x123xbf16, #tpu.memory_space<vmem>>, vector<1x8x123xbf16>
    %49 = vector.shape_cast %48 : vector<1x8x123xbf16> to vector<8x123xbf16>
    %cst_21 = arith.constant dense<0.000000e+00> : vector<8x159xf32>
    %50 = tpu.matmul %49, %44, %cst_21 {dimension_numbers = #tpu.dot_dimension_numbers<[1], [0], [0], [1], [0, 0, 1, 1], [], []>} : vector<8x123xbf16>, vector<123x159xbf16>, vector<8x159xf32> -> vector<8x159xf32>
    %c2 = arith.constant 2 : index
    %c0_22 = arith.constant 0 : index
    %c0_23 = arith.constant 0 : index
    %51 = vector.load %arg7[%c2, %c0_22, %c0_23] : memref<5x8x123xbf16, #tpu.memory_space<vmem>>, vector<1x8x123xbf16>
    %52 = vector.shape_cast %51 : vector<1x8x123xbf16> to vector<8x123xbf16>
    %cst_24 = arith.constant dense<0.000000e+00> : vector<8x159xf32>
    %53 = tpu.matmul %52, %44, %cst_24 {dimension_numbers = #tpu.dot_dimension_numbers<[1], [0], [0], [1], [0, 0, 1, 1], [], []>} : vector<8x123xbf16>, vector<123x159xbf16>, vector<8x159xf32> -> vector<8x159xf32>
    %c3 = arith.constant 3 : index
    %c0_25 = arith.constant 0 : index
    %c0_26 = arith.constant 0 : index
    %54 = vector.load %arg7[%c3, %c0_25, %c0_26] : memref<5x8x123xbf16, #tpu.memory_space<vmem>>, vector<1x8x123xbf16>
    %55 = vector.shape_cast %54 : vector<1x8x123xbf16> to vector<8x123xbf16>
    %cst_27 = arith.constant dense<0.000000e+00> : vector<8x159xf32>
    %56 = tpu.matmul %55, %44, %cst_27 {dimension_numbers = #tpu.dot_dimension_numbers<[1], [0], [0], [1], [0, 0, 1, 1], [], []>} : vector<8x123xbf16>, vector<123x159xbf16>, vector<8x159xf32> -> vector<8x159xf32>
    %c4 = arith.constant 4 : index
    %c0_28 = arith.constant 0 : index
    %c0_29 = arith.constant 0 : index
    %57 = vector.load %arg7[%c4, %c0_28, %c0_29] : memref<5x8x123xbf16, #tpu.memory_space<vmem>>, vector<1x8x123xbf16>
    %58 = vector.shape_cast %57 : vector<1x8x123xbf16> to vector<8x123xbf16>
    %cst_30 = arith.constant dense<0.000000e+00> : vector<8x159xf32>
    %59 = tpu.matmul %58, %44, %cst_30 {dimension_numbers = #tpu.dot_dimension_numbers<[1], [0], [0], [1], [0, 0, 1, 1], [], []>} : vector<8x123xbf16>, vector<123x159xbf16>, vector<8x159xf32> -> vector<8x159xf32>
    %60 = tpu.concatenate %47, %50, %53, %56, %59 in 1 : vector<8x159xf32>, vector<8x159xf32>, vector<8x159xf32>, vector<8x159xf32>, vector<8x159xf32> -> vector<8x795xf32>
    %61 = arith.truncf %60 : vector<8x795xf32> to vector<8x795xbf16>
    %c0_31 = arith.constant 0 : index
    %c0_32 = arith.constant 0 : index
    %62 = vector.load %arg8[%c0_31, %c0_32] : memref<795x120xbf16, #tpu.memory_space<vmem>>, vector<795x120xbf16>
    %cst_33 = arith.constant dense<0.000000e+00> : vector<8x120xf32>
    %63 = tpu.matmul %61, %62, %cst_33 {dimension_numbers = #tpu.dot_dimension_numbers<[1], [0], [0], [1], [0, 0, 1, 1], [], []>} : vector<8x795xbf16>, vector<795x120xbf16>, vector<8x120xf32> -> vector<8x120xf32>
    %c0_34 = arith.constant 0 : index
    %c0_35 = arith.constant 0 : index
    %64 = vector.load %arg9[%c0_34, %c0_35] : memref<1x120xf32, #tpu.memory_space<vmem>>, vector<1x120xf32>
    %65 = vector.broadcast %64 : vector<1x120xf32> to vector<8x120xf32>
    %66 = arith.addf %63, %65 : vector<8x120xf32>
    %cst_36 = arith.constant 0.000000e+00 : f32
    %67 = vector.broadcast %cst_36 : f32 to vector<8x120xf32>
    %68 = arith.maximumf %66, %67 : vector<8x120xf32>
    %69 = arith.truncf %68 : vector<8x120xf32> to vector<8x120xbf16>
    %c0_37 = arith.constant 0 : index
    %c0_38 = arith.constant 0 : index
    %70 = vector.load %arg10[%c0_37, %c0_38] : memref<120x84xbf16, #tpu.memory_space<vmem>>, vector<120x84xbf16>
    %cst_39 = arith.constant dense<0.000000e+00> : vector<8x84xf32>
    %71 = tpu.matmul %69, %70, %cst_39 {dimension_numbers = #tpu.dot_dimension_numbers<[1], [0], [0], [1], [0, 0, 1, 1], [], []>} : vector<8x120xbf16>, vector<120x84xbf16>, vector<8x84xf32> -> vector<8x84xf32>
    %c0_40 = arith.constant 0 : index
    %c0_41 = arith.constant 0 : index
    %72 = vector.load %arg11[%c0_40, %c0_41] : memref<1x84xf32, #tpu.memory_space<vmem>>, vector<1x84xf32>
    %73 = vector.broadcast %72 : vector<1x84xf32> to vector<8x84xf32>
    %74 = arith.addf %71, %73 : vector<8x84xf32>
    %cst_42 = arith.constant 0.000000e+00 : f32
    %75 = vector.broadcast %cst_42 : f32 to vector<8x84xf32>
    %76 = arith.maximumf %74, %75 : vector<8x84xf32>
    %77 = arith.truncf %76 : vector<8x84xf32> to vector<8x84xbf16>
    %c0_43 = arith.constant 0 : index
    %c0_44 = arith.constant 0 : index
    %78 = vector.load %arg12[%c0_43, %c0_44] : memref<84x128xbf16, #tpu.memory_space<vmem>>, vector<84x128xbf16>
    %cst_45 = arith.constant dense<0.000000e+00> : vector<8x128xf32>
    %79 = tpu.matmul %77, %78, %cst_45 {dimension_numbers = #tpu.dot_dimension_numbers<[1], [0], [0], [1], [0, 0, 1, 1], [], []>} : vector<8x84xbf16>, vector<84x128xbf16>, vector<8x128xf32> -> vector<8x128xf32>
    %c0_46 = arith.constant 0 : index
    %c0_47 = arith.constant 0 : index
    %80 = vector.load %arg13[%c0_46, %c0_47] : memref<1x128xf32, #tpu.memory_space<vmem>>, vector<1x128xf32>
    %81 = vector.broadcast %80 : vector<1x128xf32> to vector<8x128xf32>
    %82 = arith.addf %79, %81 : vector<8x128xf32>
    %c0_48 = arith.constant 0 : index
    %c0_49 = arith.constant 0 : index
    %83 = vector.load %arg14[%c0_48, %c0_49] : memref<8x128xf32, #tpu.memory_space<vmem>>, vector<8x128xf32>
    tpu.vector_store %arg14[%c0_48, %c0_49], %82 {strides = array<i32>} : memref<8x128xf32, #tpu.memory_space<vmem>>, vector<8x128xf32>,
    return
  }
  func.func @transform_0(%arg0: i32) -> (i32, i32) {
    %c0_i32 = arith.constant 0 : i32
    %c0_i32_0 = arith.constant 0 : i32
    return %arg0, %c0_i32 : i32, i32
  }
  func.func @transform_1(%arg0: i32) -> (i32, i32) {
    %c0_i32 = arith.constant 0 : i32
    %c0_i32_0 = arith.constant 0 : i32
    %c0_i32_1 = arith.constant 0 : i32
    return %c0_i32, %c0_i32_0 : i32, i32
  }
  func.func @transform_2(%arg0: i32) -> (i32, i32) {
    %c0_i32 = arith.constant 0 : i32
    %c0_i32_0 = arith.constant 0 : i32
    %c0_i32_1 = arith.constant 0 : i32
    return %c0_i32, %c0_i32_0 : i32, i32
  }
  func.func @transform_3(%arg0: i32) -> (i32, i32) {
    %c0_i32 = arith.constant 0 : i32
    %c0_i32_0 = arith.constant 0 : i32
    %c0_i32_1 = arith.constant 0 : i32
    return %c0_i32, %c0_i32_0 : i32, i32
  }
  func.func @transform_4(%arg0: i32) -> (i32, i32) {
    %c0_i32 = arith.constant 0 : i32
    %c0_i32_0 = arith.constant 0 : i32
    %c0_i32_1 = arith.constant 0 : i32
    return %c0_i32, %c0_i32_0 : i32, i32
  }
  func.func @transform_5(%arg0: i32) -> (i32, i32) {
    %c0_i32 = arith.constant 0 : i32
    %c0_i32_0 = arith.constant 0 : i32
    %c0_i32_1 = arith.constant 0 : i32
    return %c0_i32, %c0_i32_0 : i32, i32
  }
  func.func @transform_6(%arg0: i32) -> (i32, i32, i32) {
    %c0_i32 = arith.constant 0 : i32
    %c0_i32_0 = arith.constant 0 : i32
    %c0_i32_1 = arith.constant 0 : i32
    %c0_i32_2 = arith.constant 0 : i32
    return %c0_i32, %c0_i32_0, %c0_i32_1 : i32, i32, i32
  }
  func.func @transform_7(%arg0: i32) -> (i32, i32) {
    %c0_i32 = arith.constant 0 : i32
    %c0_i32_0 = arith.constant 0 : i32
    %c0_i32_1 = arith.constant 0 : i32
    return %c0_i32, %c0_i32_0 : i32, i32
  }
  func.func @transform_8(%arg0: i32) -> (i32, i32) {
    %c0_i32 = arith.constant 0 : i32
    %c0_i32_0 = arith.constant 0 : i32
    %c0_i32_1 = arith.constant 0 : i32
    return %c0_i32, %c0_i32_0 : i32, i32
  }
  func.func @transform_9(%arg0: i32) -> (i32, i32) {
    %c0_i32 = arith.constant 0 : i32
    %c0_i32_0 = arith.constant 0 : i32
    %c0_i32_1 = arith.constant 0 : i32
    return %c0_i32, %c0_i32_0 : i32, i32
  }
  func.func @transform_10(%arg0: i32) -> (i32, i32) {
    %c0_i32 = arith.constant 0 : i32
    %c0_i32_0 = arith.constant 0 : i32
    %c0_i32_1 = arith.constant 0 : i32
    return %c0_i32, %c0_i32_0 : i32, i32
  }
  func.func @transform_11(%arg0: i32) -> (i32, i32) {
    %c0_i32 = arith.constant 0 : i32
    %c0_i32_0 = arith.constant 0 : i32
    %c0_i32_1 = arith.constant 0 : i32
    return %c0_i32, %c0_i32_0 : i32, i32
  }
  func.func @transform_12(%arg0: i32) -> (i32, i32) {
    %c0_i32 = arith.constant 0 : i32
    %c0_i32_0 = arith.constant 0 : i32
    %c0_i32_1 = arith.constant 0 : i32
    return %c0_i32, %c0_i32_0 : i32, i32
  }
  func.func @transform_13(%arg0: i32) -> (i32, i32) {
    %c0_i32 = arith.constant 0 : i32
    %c0_i32_0 = arith.constant 0 : i32
    return %arg0, %c0_i32 : i32, i32
  }
}

</mosaic_0001>

<llo_original>
// kernel: lenet_forward.1
$region0: #{lenet_forward.1}
  #allocation0 [shape = 'u32[]', space=smem, size = 0x4, offset = 0x4, fixed_abs, tag = 'smem constant byte address 0x4 - core index']
  #allocation1 [shape = 'u32[144,128]{1,0:T(1,128)}', space=vmem, size = 0x12000, scoped, tag = 'internal scratch']
  %s0 = inlined_call_operand.vmem [shape: f32[512,32], index: 0, kind: input, shape index: {}]
  %s1 = inlined_call_operand.vmem [shape: bf16[160,168], index: 1, kind: input, shape index: {}]
  %s2 = inlined_call_operand.vmem [shape: f32[1,168], index: 2, kind: input, shape index: {}]
  %s3 = inlined_call_operand.vmem [shape: bf16[128,251], index: 3, kind: input, shape index: {}]
  %s4 = inlined_call_operand.vmem [shape: bf16[835,160], index: 4, kind: input, shape index: {}]
  %s5 = inlined_call_operand.vmem [shape: f32[1,160], index: 5, kind: input, shape index: {}]
  %s6 = inlined_call_operand.vmem [shape: bf16[5,8,123], index: 6, kind: input, shape index: {}]
  %s7 = inlined_call_operand.vmem [shape: bf16[795,120], index: 7, kind: input, shape index: {}]
  %s8 = inlined_call_operand.vmem [shape: f32[1,120], index: 8, kind: input, shape index: {}]
  %s9 = inlined_call_operand.vmem [shape: bf16[120,84], index: 9, kind: input, shape index: {}]
  %s10 = inlined_call_operand.vmem [shape: f32[1,84], index: 10, kind: input, shape index: {}]
  %s11 = inlined_call_operand.vmem [shape: bf16[84,128], index: 11, kind: input, shape index: {}]
  %s12 = inlined_call_operand.vmem [shape: f32[1,128], index: 12, kind: input, shape index: {}]
  %s13 = inlined_call_operand.hbm [shape: f32[16,128], index: 13, kind: output, shape index: {}]
  %s14 = sld [smem:[#allocation0]]
  $region85: #{lenet_forward.1} parent=0
    _
  %s16 = ssub.s32 1, %s14
  %s17 = scalar_select 0, %s16, %s14
  $region1: #{lenet_forward.1} parent=0
    #allocation2 [shape = 'u8[8192]{0}', space=vmem, size = 0x2000, scoped, tag = 'output window, operand 0']
    #allocation3 [shape = 's32[2]{0}', space=sflag, size = 0x8, scoped, tag = 'scoped memory for lenet_forward.1']
    %18 = vsyncpa [#allocation3], 0
    %s19 = scalar_lea.sflag [#allocation3], 1
    %20 = vsyncpa %s19, 0
    loop: start=0, step=1, limit=4
    $region2: #{lenet_forward.1} parent=1 // loop_pre_header
      _
    $region3: #{lenet_forward.1} parent=1 // loop_header
      %s22 = sphi 0, %s26
      %p23 = scmp.ge.s32.totalorder %s22, 4
      %s32 = sphi 0, %s34
      %s35 = sphi 0, %s32
      %s36 = sphi 0, %s35
      %s52 = sphi 0, %s36
      %s56 = sphi 0, %s56
      %s58 = sphi 0, %s56
      %s59 = sphi 0, %s58
      %s73 = sphi 0, %s59
      %s77 = sphi 0, %s77
      %s79 = sphi 0, %s77
      %s80 = sphi 0, %s79
      %s94 = sphi 0, %s80
      %s98 = sphi 0, %s98
      %s100 = sphi 0, %s98
      %s101 = sphi 0, %s100
      %s115 = sphi 0, %s101
      %s119 = sphi 0, %s119
      %s121 = sphi 0, %s119
      %s122 = sphi 0, %s121
      %s136 = sphi 0, %s122
      %s140 = sphi 0, %s140
      %s142 = sphi 0, %s140
      %s143 = sphi 0, %s142
      %s157 = sphi 0, %s143
      %s161 = sphi 0, %s161
      %s163 = sphi 0, %s161
      %s164 = sphi 0, %s163
      %s178 = sphi 0, %s164
      %s182 = sphi 0, %s182
      %s184 = sphi 0, %s182
      %s185 = sphi 0, %s184
      %s199 = sphi 0, %s185
      %s203 = sphi 0, %s203
      %s205 = sphi 0, %s203
      %s206 = sphi 0, %s205
      %s220 = sphi 0, %s206
      %s224 = sphi 0, %s224
      %s226 = sphi 0, %s224
      %s227 = sphi 0, %s226
      %s241 = sphi 0, %s227
      %s245 = sphi 0, %s245
      %s247 = sphi 0, %s245
      %s248 = sphi 0, %s247
      %s262 = sphi 0, %s248
      %s266 = sphi 0, %s266
      %s268 = sphi 0, %s266
      %s269 = sphi 0, %s268
      %s283 = sphi 0, %s269
      %s287 = sphi 0, %s287
      %s289 = sphi 0, %s287
      %s290 = sphi 0, %s289
      %s304 = sphi 0, %s290
      %s310 = sphi 0, %s312
      %s313 = sphi 0, %s310
      %s314 = sphi 0, %s313
      %s330 = sphi 0, %s314
    $region4: #{lenet_forward.1} parent=1 // loop_header_branch
      %25 = sbr.rel (%p23) target = $region8
    $region5: #{lenet_forward.1} parent=1 // loop_body
      %s27 = ssub.s32 %s22, 1
      %s28 = ssub.s32 %s22, 2
      %s29 = sadd.s32 %s22, 1
      %s30 = ssub.s32 %s22, %s29
      %p31 = scmp.eq.s32.totalorder %s30, 0
      %s33 = sadd.s32 %s32, 1
      %s34 = scalar_select %p31, %s32, %s33
      %p37 = pneg %p31
      %p38 = scmp.eq.s32.totalorder %s22, 1
      %p39 = por %p37, %p38
      %p40 = scmp.ne.s32.totalorder %s32, %s35
      %p41 = scmp.eq.s32.totalorder %s22, 0
      %p42 = por %p40, %p41
      %p43 = scmp.ne.s32.totalorder %s32, %s35
      %p44 = scmp.eq.s32.totalorder %s27, 1
      %p45 = por %p43, %p44
      %p46 = scmp.ne.s32.totalorder %s35, %s36
      %p47 = scmp.eq.s32.totalorder %s27, 0
      %p48 = por %p46, %p47
      %p49 = scmp.ne.s32.totalorder %s35, %s36
      %p50 = scmp.eq.s32.totalorder %s28, 1
      %p51 = por %p49, %p50
      %p53 = scmp.ne.s32.totalorder %s36, %s52
      %p54 = scmp.eq.s32.totalorder %s28, 0
      %p55 = por %p53, %p54
      %s57 = sadd.s32 %s56, 1
      %p60 = scmp.eq.s32.totalorder %s22, 1
      %p61 = scmp.ne.s32.totalorder %s56, %s58
      %p62 = scmp.eq.s32.totalorder %s22, 0
      %p63 = por %p61, %p62
      %p64 = scmp.ne.s32.totalorder %s56, %s58
      %p65 = scmp.eq.s32.totalorder %s27, 1
      %p66 = por %p64, %p65
      %p67 = scmp.ne.s32.totalorder %s58, %s59
      %p68 = scmp.eq.s32.totalorder %s27, 0
      %p69 = por %p67, %p68
      %p70 = scmp.ne.s32.totalorder %s58, %s59
      %p71 = scmp.eq.s32.totalorder %s28, 1
      %p72 = por %p70, %p71
      %p74 = scmp.ne.s32.totalorder %s59, %s73
      %p75 = scmp.eq.s32.totalorder %s28, 0
      %p76 = por %p74, %p75
      %s78 = sadd.s32 %s77, 1
      %p81 = scmp.eq.s32.totalorder %s22, 1
      %p82 = scmp.ne.s32.totalorder %s77, %s79
      %p83 = scmp.eq.s32.totalorder %s22, 0
      %p84 = por %p82, %p83
      %p85 = scmp.ne.s32.totalorder %s77, %s79
      %p86 = scmp.eq.s32.totalorder %s27, 1
      %p87 = por %p85, %p86
      %p88 = scmp.ne.s32.totalorder %s79, %s80
      %p89 = scmp.eq.s32.totalorder %s27, 0
      %p90 = por %p88, %p89
      %p91 = scmp.ne.s32.totalorder %s79, %s80
      %p92 = scmp.eq.s32.totalorder %s28, 1
      %p93 = por %p91, %p92
      %p95 = scmp.ne.s32.totalorder %s80, %s94
      %p96 = scmp.eq.s32.totalorder %s28, 0
      %p97 = por %p95, %p96
      %s99 = sadd.s32 %s98, 1
      %p102 = scmp.eq.s32.totalorder %s22, 1
      %p103 = scmp.ne.s32.totalorder %s98, %s100
      %p104 = scmp.eq.s32.totalorder %s22, 0
      %p105 = por %p103, %p104
      %p106 = scmp.ne.s32.totalorder %s98, %s100
      %p107 = scmp.eq.s32.totalorder %s27, 1
      %p108 = por %p106, %p107
      %p109 = scmp.ne.s32.totalorder %s100, %s101
      %p110 = scmp.eq.s32.totalorder %s27, 0
      %p111 = por %p109, %p110
      %p112 = scmp.ne.s32.totalorder %s100, %s101
      %p113 = scmp.eq.s32.totalorder %s28, 1
      %p114 = por %p112, %p113
      %p116 = scmp.ne.s32.totalorder %s101, %s115
      %p117 = scmp.eq.s32.totalorder %s28, 0
      %p118 = por %p116, %p117
      %s120 = sadd.s32 %s119, 1
      %p123 = scmp.eq.s32.totalorder %s22, 1
      %p124 = scmp.ne.s32.totalorder %s119, %s121
      %p125 = scmp.eq.s32.totalorder %s22, 0
      %p126 = por %p124, %p125
      %p127 = scmp.ne.s32.totalorder %s119, %s121
      %p128 = scmp.eq.s32.totalorder %s27, 1
      %p129 = por %p127, %p128
      %p130 = scmp.ne.s32.totalorder %s121, %s122
      %p131 = scmp.eq.s32.totalorder %s27, 0
      %p132 = por %p130, %p131
      %p133 = scmp.ne.s32.totalorder %s121, %s122
      %p134 = scmp.eq.s32.totalorder %s28, 1
      %p135 = por %p133, %p134
      %p137 = scmp.ne.s32.totalorder %s122, %s136
      %p138 = scmp.eq.s32.totalorder %s28, 0
      %p139 = por %p137, %p138
      %s141 = sadd.s32 %s140, 1
      %p144 = scmp.eq.s32.totalorder %s22, 1
      %p145 = scmp.ne.s32.totalorder %s140, %s142
      %p146 = scmp.eq.s32.totalorder %s22, 0
      %p147 = por %p145, %p146
      %p148 = scmp.ne.s32.totalorder %s140, %s142
      %p149 = scmp.eq.s32.totalorder %s27, 1
      %p150 = por %p148, %p149
      %p151 = scmp.ne.s32.totalorder %s142, %s143
      %p152 = scmp.eq.s32.totalorder %s27, 0
      %p153 = por %p151, %p152
      %p154 = scmp.ne.s32.totalorder %s142, %s143
      %p155 = scmp.eq.s32.totalorder %s28, 1
      %p156 = por %p154, %p155
      %p158 = scmp.ne.s32.totalorder %s143, %s157
      %p159 = scmp.eq.s32.totalorder %s28, 0
      %p160 = por %p158, %p159
      %s162 = sadd.s32 %s161, 1
      %p165 = scmp.eq.s32.totalorder %s22, 1
      %p166 = scmp.ne.s32.totalorder %s161, %s163
      %p167 = scmp.eq.s32.totalorder %s22, 0
      %p168 = por %p166, %p167
      %p169 = scmp.ne.s32.totalorder %s161, %s163
      %p170 = scmp.eq.s32.totalorder %s27, 1
      %p171 = por %p169, %p170
      %p172 = scmp.ne.s32.totalorder %s163, %s164
      %p173 = scmp.eq.s32.totalorder %s27, 0
      %p174 = por %p172, %p173
      %p175 = scmp.ne.s32.totalorder %s163, %s164
      %p176 = scmp.eq.s32.totalorder %s28, 1
      %p177 = por %p175, %p176
      %p179 = scmp.ne.s32.totalorder %s164, %s178
      %p180 = scmp.eq.s32.totalorder %s28, 0
      %p181 = por %p179, %p180
      %s183 = sadd.s32 %s182, 1
      %p186 = scmp.eq.s32.totalorder %s22, 1
      %p187 = scmp.ne.s32.totalorder %s182, %s184
      %p188 = scmp.eq.s32.totalorder %s22, 0
      %p189 = por %p187, %p188
      %p190 = scmp.ne.s32.totalorder %s182, %s184
      %p191 = scmp.eq.s32.totalorder %s27, 1
      %p192 = por %p190, %p191
      %p193 = scmp.ne.s32.totalorder %s184, %s185
      %p194 = scmp.eq.s32.totalorder %s27, 0
      %p195 = por %p193, %p194
      %p196 = scmp.ne.s32.totalorder %s184, %s185
      %p197 = scmp.eq.s32.totalorder %s28, 1
      %p198 = por %p196, %p197
      %p200 = scmp.ne.s32.totalorder %s185, %s199
      %p201 = scmp.eq.s32.totalorder %s28, 0
      %p202 = por %p200, %p201
      %s204 = sadd.s32 %s203, 1
      %p207 = scmp.eq.s32.totalorder %s22, 1
      %p208 = scmp.ne.s32.totalorder %s203, %s205
      %p209 = scmp.eq.s32.totalorder %s22, 0
      %p210 = por %p208, %p209
      %p211 = scmp.ne.s32.totalorder %s203, %s205
      %p212 = scmp.eq.s32.totalorder %s27, 1
      %p213 = por %p211, %p212
      %p214 = scmp.ne.s32.totalorder %s205, %s206
      %p215 = scmp.eq.s32.totalorder %s27, 0
      %p216 = por %p214, %p215
      %p217 = scmp.ne.s32.totalorder %s205, %s206
      %p218 = scmp.eq.s32.totalorder %s28, 1
      %p219 = por %p217, %p218
      %p221 = scmp.ne.s32.totalorder %s206, %s220
      %p222 = scmp.eq.s32.totalorder %s28, 0
      %p223 = por %p221, %p222
      %s225 = sadd.s32 %s224, 1
      %p228 = scmp.eq.s32.totalorder %s22, 1
      %p229 = scmp.ne.s32.totalorder %s224, %s226
      %p230 = scmp.eq.s32.totalorder %s22, 0
      %p231 = por %p229, %p230
      %p232 = scmp.ne.s32.totalorder %s224, %s226
      %p233 = scmp.eq.s32.totalorder %s27, 1
      %p234 = por %p232, %p233
      %p235 = scmp.ne.s32.totalorder %s226, %s227
      %p236 = scmp.eq.s32.totalorder %s27, 0
      %p237 = por %p235, %p236
      %p238 = scmp.ne.s32.totalorder %s226, %s227
      %p239 = scmp.eq.s32.totalorder %s28, 1
      %p240 = por %p238, %p239
      %p242 = scmp.ne.s32.totalorder %s227, %s241
      %p243 = scmp.eq.s32.totalorder %s28, 0
      %p244 = por %p242, %p243
      %s246 = sadd.s32 %s245, 1
      %p249 = scmp.eq.s32.totalorder %s22, 1
      %p250 = scmp.ne.s32.totalorder %s245, %s247
      %p251 = scmp.eq.s32.totalorder %s22, 0
      %p252 = por %p250, %p251
      %p253 = scmp.ne.s32.totalorder %s245, %s247
      %p254 = scmp.eq.s32.totalorder %s27, 1
      %p255 = por %p253, %p254
      %p256 = scmp.ne.s32.totalorder %s247, %s248
      %p257 = scmp.eq.s32.totalorder %s27, 0
      %p258 = por %p256, %p257
      %p259 = scmp.ne.s32.totalorder %s247, %s248
      %p260 = scmp.eq.s32.totalorder %s28, 1
      %p261 = por %p259, %p260
      %p263 = scmp.ne.s32.totalorder %s248, %s262
      %p264 = scmp.eq.s32.totalorder %s28, 0
      %p265 = por %p263, %p264
      %s267 = sadd.s32 %s266, 1
      %p270 = scmp.eq.s32.totalorder %s22, 1
      %p271 = scmp.ne.s32.totalorder %s266, %s268
      %p272 = scmp.eq.s32.totalorder %s22, 0
      %p273 = por %p271, %p272
      %p274 = scmp.ne.s32.totalorder %s266, %s268
      %p275 = scmp.eq.s32.totalorder %s27, 1
      %p276 = por %p274, %p275
      %p277 = scmp.ne.s32.totalorder %s268, %s269
      %p278 = scmp.eq.s32.totalorder %s27, 0
      %p279 = por %p277, %p278
      %p280 = scmp.ne.s32.totalorder %s268, %s269
      %p281 = scmp.eq.s32.totalorder %s28, 1
      %p282 = por %p280, %p281
      %p284 = scmp.ne.s32.totalorder %s269, %s283
      %p285 = scmp.eq.s32.totalorder %s28, 0
      %p286 = por %p284, %p285
      %s288 = sadd.s32 %s287, 1
      %p291 = scmp.eq.s32.totalorder %s22, 1
      %p292 = scmp.ne.s32.totalorder %s287, %s289
      %p293 = scmp.eq.s32.totalorder %s22, 0
      %p294 = por %p292, %p293
      %p295 = scmp.ne.s32.totalorder %s287, %s289
      %p296 = scmp.eq.s32.totalorder %s27, 1
      %p297 = por %p295, %p296
      %p298 = scmp.ne.s32.totalorder %s289, %s290
      %p299 = scmp.eq.s32.totalorder %s27, 0
      %p300 = por %p298, %p299
      %p301 = scmp.ne.s32.totalorder %s289, %s290
      %p302 = scmp.eq.s32.totalorder %s28, 1
      %p303 = por %p301, %p302
      %p305 = scmp.ne.s32.totalorder %s290, %s304
      %p306 = scmp.eq.s32.totalorder %s28, 0
      %p307 = por %p305, %p306
      %s308 = ssub.s32 %s22, %s29
      %p309 = scmp.eq.s32.totalorder %s308, 0
      %s311 = sadd.s32 %s310, 1
      %s312 = scalar_select %p309, %s310, %s311
      %p315 = pneg %p309
      %p316 = scmp.eq.s32.totalorder %s22, 1
      %p317 = por %p315, %p316
      %p318 = scmp.ne.s32.totalorder %s310, %s313
      %p319 = scmp.eq.s32.totalorder %s22, 0
      %p320 = por %p318, %p319
      %p321 = scmp.ne.s32.totalorder %s310, %s313
      %p322 = scmp.eq.s32.totalorder %s27, 1
      %p323 = por %p321, %p322
      %p324 = scmp.ne.s32.totalorder %s313, %s314
      %p325 = scmp.eq.s32.totalorder %s27, 0
      %p326 = por %p324, %p325
      %p327 = scmp.ne.s32.totalorder %s313, %s314
      %p328 = scmp.eq.s32.totalorder %s28, 1
      %p329 = por %p327, %p328
      %p331 = scmp.ne.s32.totalorder %s314, %s330
      %p332 = scmp.eq.s32.totalorder %s28, 0
      %p333 = por %p331, %p332
      %p334 = scmp.le.s32.totalorder 1, %s22
      %p335 = scmp.lt.s32.totalorder %s22, 3
      %p336 = pnand %p334, %p335
      %p337 = pneg %p336
      // Predicated region
      $region9: #{lenet_forward.1} parent=5 // pred_check
        _
      $region10: #{lenet_forward.1} parent=5 // pred_check_branch
        %339 = sbr.rel (%p336) target = $region12
      $region11: #{lenet_forward.1} parent=5 // pred_region
        %s340 = ssub.s32 %s22, 1
        // Predicated region
        $region13: #{lenet_forward.1} parent=11 // pred_check
          %p341 = pneg %p69
        $region14: #{lenet_forward.1} parent=11 // pred_check_branch
          %343 = sbr.rel (%p341) target = $region16
        $region15: #{lenet_forward.1} parent=11 // pred_region
          _
        $region16: #{lenet_forward.1} parent=11 // pred_fallthru
          _
        // Predicated region
        $region17: #{lenet_forward.1} parent=11 // pred_check
          %p344 = pneg %p90
        $region18: #{lenet_forward.1} parent=11 // pred_check_branch
          %346 = sbr.rel (%p344) target = $region20
        $region19: #{lenet_forward.1} parent=11 // pred_region
          _
        $region20: #{lenet_forward.1} parent=11 // pred_fallthru
          _
        // Predicated region
        $region21: #{lenet_forward.1} parent=11 // pred_check
          %p347 = pneg %p111
        $region22: #{lenet_forward.1} parent=11 // pred_check_branch
          %349 = sbr.rel (%p347) target = $region24
        $region23: #{lenet_forward.1} parent=11 // pred_region
          _
        $region24: #{lenet_forward.1} parent=11 // pred_fallthru
          _
        // Predicated region
        $region25: #{lenet_forward.1} parent=11 // pred_check
          %p350 = pneg %p132
        $region26: #{lenet_forward.1} parent=11 // pred_check_branch
          %352 = sbr.rel (%p350) target = $region28
        $region27: #{lenet_forward.1} parent=11 // pred_region
          _
        $region28: #{lenet_forward.1} parent=11 // pred_fallthru
          _
        // Predicated region
        $region29: #{lenet_forward.1} parent=11 // pred_check
          %p353 = pneg %p153
        $region30: #{lenet_forward.1} parent=11 // pred_check_branch
          %355 = sbr.rel (%p353) target = $region32
        $region31: #{lenet_forward.1} parent=11 // pred_region
          _
        $region32: #{lenet_forward.1} parent=11 // pred_fallthru
          _
        // Predicated region
        $region33: #{lenet_forward.1} parent=11 // pred_check
          %p356 = pneg %p174
        $region34: #{lenet_forward.1} parent=11 // pred_check_branch
          %358 = sbr.rel (%p356) target = $region36
        $region35: #{lenet_forward.1} parent=11 // pred_region
          _
        $region36: #{lenet_forward.1} parent=11 // pred_fallthru
          _
        // Predicated region
        $region37: #{lenet_forward.1} parent=11 // pred_check
          %p359 = pneg %p195
        $region38: #{lenet_forward.1} parent=11 // pred_check_branch
          %361 = sbr.rel (%p359) target = $region40
        $region39: #{lenet_forward.1} parent=11 // pred_region
          _
        $region40: #{lenet_forward.1} parent=11 // pred_fallthru
          _
        // Predicated region
        $region41: #{lenet_forward.1} parent=11 // pred_check
          %p362 = pneg %p216
        $region42: #{lenet_forward.1} parent=11 // pred_check_branch
          %364 = sbr.rel (%p362) target = $region44
        $region43: #{lenet_forward.1} parent=11 // pred_region
          _
        $region44: #{lenet_forward.1} parent=11 // pred_fallthru
          _
        // Predicated region
        $region45: #{lenet_forward.1} parent=11 // pred_check
          %p365 = pneg %p237
        $region46: #{lenet_forward.1} parent=11 // pred_check_branch
          %367 = sbr.rel (%p365) target = $region48
        $region47: #{lenet_forward.1} parent=11 // pred_region
          _
        $region48: #{lenet_forward.1} parent=11 // pred_fallthru
          _
        // Predicated region
        $region49: #{lenet_forward.1} parent=11 // pred_check
          %p368 = pneg %p258
        $region50: #{lenet_forward.1} parent=11 // pred_check_branch
          %370 = sbr.rel (%p368) target = $region52
        $region51: #{lenet_forward.1} parent=11 // pred_region
          _
        $region52: #{lenet_forward.1} parent=11 // pred_fallthru
          _
        // Predicated region
        $region53: #{lenet_forward.1} parent=11 // pred_check
          %p371 = pneg %p279
        $region54: #{lenet_forward.1} parent=11 // pred_check_branch
          %373 = sbr.rel (%p371) target = $region56
        $region55: #{lenet_forward.1} parent=11 // pred_region
          _
        $region56: #{lenet_forward.1} parent=11 // pred_fallthru
          _
        // Predicated region
        $region57: #{lenet_forward.1} parent=11 // pred_check
          %p374 = pneg %p300
        $region58: #{lenet_forward.1} parent=11 // pred_check_branch
          %376 = sbr.rel (%p374) target = $region60
        $region59: #{lenet_forward.1} parent=11 // pred_region
          _
        $region60: #{lenet_forward.1} parent=11 // pred_fallthru
          _
      $region12: #{lenet_forward.1} parent=5 // pred_fallthru
        _
      %p377 = scmp.lt.s32.totalorder %s22, 2
      // Predicated region
      $region61: #{lenet_forward.1} parent=5 // pred_check
        %p378 = pneg %p377
      $region62: #{lenet_forward.1} parent=5 // pred_check_branch
        %380 = sbr.rel (%p378) target = $region64
      $region63: #{lenet_forward.1} parent=5 // pred_region
        // Predicated region
        $region65: #{lenet_forward.1} parent=63 // pred_check
          %p381 = pneg %p42
        $region66: #{lenet_forward.1} parent=63 // pred_check_branch
          %383 = sbr.rel (%p381) target = $region68
        $region67: #{lenet_forward.1} parent=63 // pred_region
          %s384 = smul.u32 32, %s22
          %p385 = scmp.lt.s32.totalorder %s384, 63
          %s386 = scalar_select %p385, %s384, 63
          %s387 = smul.addr %s386, 8
          %s388 = scalar_lea.vmem %s0, %s387
          %s389 = smul.u32 32, %s22
        $region68: #{lenet_forward.1} parent=63 // pred_fallthru
          _
      $region64: #{lenet_forward.1} parent=5 // pred_fallthru
        _
      %p390 = scmp.le.s32.totalorder 1, %s22
      %p391 = scmp.lt.s32.totalorder %s22, 3
      %p392 = pnand %p390, %p391
      %p393 = pneg %p392
      // Predicated region
      $region69: #{lenet_forward.1} parent=5 // pred_check
        _
      $region70: #{lenet_forward.1} parent=5 // pred_check_branch
        %395 = sbr.rel (%p392) target = $region72
      $region71: #{lenet_forward.1} parent=5 // pred_region
        %s396 = ssub.s32 %s22, 1
        %s397 = smul.u32 32, %s27
        %p398 = scmp.lt.s32.totalorder %s397, 63
        %s399 = scalar_select %p398, %s397, 63
        %s400 = smul.addr %s399, 8
        %s401 = scalar_lea.vmem %s0, %s400
        %p402 = pneg %p48
        %p403 = pneg %p45
        %p404 = pneg %p69
        %p405 = pneg %p66
        %p406 = pneg %p90
        %p407 = pneg %p87
        %p408 = pneg %p111
        %p409 = pneg %p108
        %p410 = pneg %p132
        %p411 = pneg %p129
        %p412 = pneg %p153
        %p413 = pneg %p150
        %p414 = pneg %p174
        %p415 = pneg %p171
        %p416 = pneg %p195
        %p417 = pneg %p192
        %p418 = pneg %p216
        %p419 = pneg %p213
        %p420 = pneg %p237
        %p421 = pneg %p234
        %p422 = pneg %p258
        %p423 = pneg %p255
        %p424 = pneg %p279
        %p425 = pneg %p276
        %p426 = pneg %p300
        %p427 = pneg %p297
        %p428 = pneg %p326
        %p429 = pneg %p323
        %s430 = sand.u32 %s313, 1
        %s431 = scalar_lea.sflag [#allocation3], %s430
        %s432 = sand.u32 %s313, 1
        %s433 = smul.addr %s432, 8
        %s434 = scalar_lea.vmem [#allocation2], %s433
        %s435 = smul.u32 32, %s27
        %p436 = scmp.lt.s32.totalorder %s435, 63
        %s437 = scalar_select %p436, %s435, 63
        %s438 = smul.addr %s437, 8
        %s439 = scalar_lea.vmem %s0, %s438
        %s440 = smul.u32 32, %s27
        %v442 = vld [vmem:[%s439] sm:$0xff]
        %v443 = vld [vmem:[%s439 + $0x8] sm:$0xff]
        %v444 = vld [vmem:[%s439 + $0x10] sm:$0xff]
        %v445 = vld [vmem:[%s439 + $0x18] sm:$0xff]
        %v446 = vld [vmem:[%s439 + $0x20] sm:$0xff]
        %v447 = vld [vmem:[%s439 + $0x28] sm:$0xff]
        %v448 = vld [vmem:[%s439 + $0x30] sm:$0xff]
        %v449 = vld [vmem:[%s439 + $0x38] sm:$0xff]
        %v450 = vld [vmem:[%s439 + $0x40] sm:$0xff]
        %v451 = vld [vmem:[%s439 + $0x48] sm:$0xff]
        %v452 = vld [vmem:[%s439 + $0x50] sm:$0xff]
        %v453 = vld [vmem:[%s439 + $0x58] sm:$0xff]
        %v454 = vld [vmem:[%s439 + $0x60] sm:$0xff]
        %v455 = vld [vmem:[%s439 + $0x68] sm:$0xff]
        %v456 = vld [vmem:[%s439 + $0x70] sm:$0xff]
        %v457 = vld [vmem:[%s439 + $0x78] sm:$0xff]
        %v458 = vld [vmem:[%s439 + $0x80] sm:$0xff]
        %v459 = vld [vmem:[%s439 + $0x88] sm:$0xff]
        %v460 = vld [vmem:[%s439 + $0x90] sm:$0xff]
        %v461 = vld [vmem:[%s439 + $0x98] sm:$0xff]
        %v462 = vld [vmem:[%s439 + $0xa0] sm:$0xff]
        %v463 = vld [vmem:[%s439 + $0xa8] sm:$0xff]
        %v464 = vld [vmem:[%s439 + $0xb0] sm:$0xff]
        %v465 = vld [vmem:[%s439 + $0xb8] sm:$0xff]
        %v466 = vld [vmem:[%s439 + $0xc0] sm:$0xff]
        %v467 = vld [vmem:[%s439 + $0xc8] sm:$0xff]
        %v468 = vld [vmem:[%s439 + $0xd0] sm:$0xff]
        %v469 = vld [vmem:[%s439 + $0xd8] sm:$0xff]
        %v470 = vld [vmem:[%s439 + $0xe0] sm:$0xff]
        %v471 = vld [vmem:[%s439 + $0xe8] sm:$0xff]
        %v472 = vld [vmem:[%s439 + $0xf0] sm:$0xff]
        %v473 = vld [vmem:[%s439 + $0xf8] sm:$0xff]
        %vm506 = vcmask 1046528
        %v507 = vrot.slane %v442, 1
        %v508 = vrot.slane %v443, 1
        %v509 = vsel %vm506, %v507, %v508
        %v510 = vrot.slane %v444, 1
        %v511 = vsel %vm506, %v508, %v510
        %v512 = vrot.slane %v445, 1
        %v513 = vsel %vm506, %v510, %v512
        %v514 = vrot.slane %v446, 1
        %v515 = vsel %vm506, %v512, %v514
        %v516 = vrot.slane %v447, 1
        %v517 = vsel %vm506, %v514, %v516
        %v518 = vrot.slane %v448, 1
        %v519 = vsel %vm506, %v516, %v518
        %v520 = vrot.slane %v449, 1
        %v521 = vsel %vm506, %v518, %v520
        %v522 = vrot.slane %v450, 1
        %v523 = vsel %vm506, %v520, %v522
        %v524 = vrot.slane %v451, 1
        %v525 = vsel %vm506, %v522, %v524
        %v526 = vrot.slane %v452, 1
        %v527 = vsel %vm506, %v524, %v526
        %v528 = vrot.slane %v453, 1
        %v529 = vsel %vm506, %v526, %v528
        %v530 = vrot.slane %v454, 1
        %v531 = vsel %vm506, %v528, %v530
        %v532 = vrot.slane %v455, 1
        %v533 = vsel %vm506, %v530, %v532
        %v534 = vrot.slane %v456, 1
        %v535 = vsel %vm506, %v532, %v534
        %v536 = vrot.slane %v457, 1
        %v537 = vsel %vm506, %v534, %v536
        %v538 = vrot.slane %v458, 1
        %v539 = vsel %vm506, %v536, %v538
        %v540 = vrot.slane %v459, 1
        %v541 = vsel %vm506, %v538, %v540
        %v542 = vrot.slane %v460, 1
        %v543 = vsel %vm506, %v540, %v542
        %v544 = vrot.slane %v461, 1
        %v545 = vsel %vm506, %v542, %v544
        %v546 = vrot.slane %v462, 1
        %v547 = vsel %vm506, %v544, %v546
        %v548 = vrot.slane %v463, 1
        %v549 = vsel %vm506, %v546, %v548
        %v550 = vrot.slane %v464, 1
        %v551 = vsel %vm506, %v548, %v550
        %v552 = vrot.slane %v465, 1
        %v553 = vsel %vm506, %v550, %v552
        %v554 = vrot.slane %v466, 1
        %v555 = vsel %vm506, %v552, %v554
        %v556 = vrot.slane %v467, 1
        %v557 = vsel %vm506, %v554, %v556
        %v558 = vrot.slane %v468, 1
        %v559 = vsel %vm506, %v556, %v558
        %v560 = vrot.slane %v469, 1
        %v561 = vsel %vm506, %v558, %v560
        %v562 = vrot.slane %v470, 1
        %v563 = vsel %vm506, %v560, %v562
        %v564 = vrot.slane %v471, 1
        %v565 = vsel %vm506, %v562, %v564
        %v566 = vrot.slane %v472, 1
        %v567 = vsel %vm506, %v564, %v566
        %v568 = vrot.slane %v473, 1
        %v569 = vsel %vm506, %v566, %v568
        %570 = vrot.lane.b32.xlu0 %v509, 32
        %v571 = vpop.permute.xlu0 %570
        %572 = vrot.lane.b32.xlu0 %v511, 32
        %v573 = vpop.permute.xlu0 %572
        %574 = vrot.lane.b32.xlu0 %v513, 32
        %v575 = vpop.permute.xlu0 %574
        %576 = vrot.lane.b32.xlu0 %v515, 32
        %v577 = vpop.permute.xlu0 %576
        %578 = vrot.lane.b32.xlu0 %v517, 32
        %v579 = vpop.permute.xlu0 %578
        %580 = vrot.lane.b32.xlu0 %v519, 32
        %v581 = vpop.permute.xlu0 %580
        %582 = vrot.lane.b32.xlu0 %v521, 32
        %v583 = vpop.permute.xlu0 %582
        %584 = vrot.lane.b32.xlu0 %v523, 32
        %v585 = vpop.permute.xlu0 %584
        %586 = vrot.lane.b32.xlu0 %v525, 32
        %v587 = vpop.permute.xlu0 %586
        %588 = vrot.lane.b32.xlu0 %v527, 32
        %v589 = vpop.permute.xlu0 %588
        %590 = vrot.lane.b32.xlu0 %v529, 32
        %v591 = vpop.permute.xlu0 %590
        %592 = vrot.lane.b32.xlu0 %v531, 32
        %v593 = vpop.permute.xlu0 %592
        %594 = vrot.lane.b32.xlu0 %v533, 32
        %v595 = vpop.permute.xlu0 %594
        %596 = vrot.lane.b32.xlu0 %v535, 32
        %v597 = vpop.permute.xlu0 %596
        %598 = vrot.lane.b32.xlu0 %v537, 32
        %v599 = vpop.permute.xlu0 %598
        %600 = vrot.lane.b32.xlu0 %v539, 32
        %v601 = vpop.permute.xlu0 %600
        %602 = vrot.lane.b32.xlu0 %v541, 32
        %v603 = vpop.permute.xlu0 %602
        %604 = vrot.lane.b32.xlu0 %v543, 32
        %v605 = vpop.permute.xlu0 %604
        %606 = vrot.lane.b32.xlu0 %v545, 32
        %v607 = vpop.permute.xlu0 %606
        %608 = vrot.lane.b32.xlu0 %v547, 32
        %v609 = vpop.permute.xlu0 %608
        %610 = vrot.lane.b32.xlu0 %v549, 32
        %v611 = vpop.permute.xlu0 %610
        %612 = vrot.lane.b32.xlu0 %v551, 32
        %v613 = vpop.permute.xlu0 %612
        %614 = vrot.lane.b32.xlu0 %v553, 32
        %v615 = vpop.permute.xlu0 %614
        %616 = vrot.lane.b32.xlu0 %v555, 32
        %v617 = vpop.permute.xlu0 %616
        %618 = vrot.lane.b32.xlu0 %v557, 32
        %v619 = vpop.permute.xlu0 %618
        %620 = vrot.lane.b32.xlu0 %v559, 32
        %v621 = vpop.permute.xlu0 %620
        %622 = vrot.lane.b32.xlu0 %v561, 32
        %v623 = vpop.permute.xlu0 %622
        %624 = vrot.lane.b32.xlu0 %v563, 32
        %v625 = vpop.permute.xlu0 %624
        %626 = vrot.lane.b32.xlu0 %v565, 32
        %v627 = vpop.permute.xlu0 %626
        %628 = vrot.lane.b32.xlu0 %v567, 32
        %v629 = vpop.permute.xlu0 %628
        %630 = vrot.lane.b32.xlu0 %v569, 32
        %v631 = vpop.permute.xlu0 %630
        %632 = vrot.lane.b32.xlu0 %v568, 32
        %v633 = vpop.permute.xlu0 %632
        %vm666 = vcmask 1045504
        %v667 = vrot.slane %v442, 2
        %v668 = vrot.slane %v443, 2
        %v669 = vsel %vm666, %v667, %v668
        %v670 = vrot.slane %v444, 2
        %v671 = vsel %vm666, %v668, %v670
        %v672 = vrot.slane %v445, 2
        %v673 = vsel %vm666, %v670, %v672
        %v674 = vrot.slane %v446, 2
        %v675 = vsel %vm666, %v672, %v674
        %v676 = vrot.slane %v447, 2
        %v677 = vsel %vm666, %v674, %v676
        %v678 = vrot.slane %v448, 2
        %v679 = vsel %vm666, %v676, %v678
        %v680 = vrot.slane %v449, 2
        %v681 = vsel %vm666, %v678, %v680
        %v682 = vrot.slane %v450, 2
        %v683 = vsel %vm666, %v680, %v682
        %v684 = vrot.slane %v451, 2
        %v685 = vsel %vm666, %v682, %v684
        %v686 = vrot.slane %v452, 2
        %v687 = vsel %vm666, %v684, %v686
        %v688 = vrot.slane %v453, 2
        %v689 = vsel %vm666, %v686, %v688
        %v690 = vrot.slane %v454, 2
        %v691 = vsel %vm666, %v688, %v690
        %v692 = vrot.slane %v455, 2
        %v693 = vsel %vm666, %v690, %v692
        %v694 = vrot.slane %v456, 2
        %v695 = vsel %vm666, %v692, %v694
        %v696 = vrot.slane %v457, 2
        %v697 = vsel %vm666, %v694, %v696
        %v698 = vrot.slane %v458, 2
        %v699 = vsel %vm666, %v696, %v698
        %v700 = vrot.slane %v459, 2
        %v701 = vsel %vm666, %v698, %v700
        %v702 = vrot.slane %v460, 2
        %v703 = vsel %vm666, %v700, %v702
        %v704 = vrot.slane %v461, 2
        %v705 = vsel %vm666, %v702, %v704
        %v706 = vrot.slane %v462, 2
        %v707 = vsel %vm666, %v704, %v706
        %v708 = vrot.slane %v463, 2
        %v709 = vsel %vm666, %v706, %v708
        %v710 = vrot.slane %v464, 2
        %v711 = vsel %vm666, %v708, %v710
        %v712 = vrot.slane %v465, 2
        %v713 = vsel %vm666, %v710, %v712
        %v714 = vrot.slane %v466, 2
        %v715 = vsel %vm666, %v712, %v714
        %v716 = vrot.slane %v467, 2
        %v717 = vsel %vm666, %v714, %v716
        %v718 = vrot.slane %v468, 2
        %v719 = vsel %vm666, %v716, %v718
        %v720 = vrot.slane %v469, 2
        %v721 = vsel %vm666, %v718, %v720
        %v722 = vrot.slane %v470, 2
        %v723 = vsel %vm666, %v720, %v722
        %v724 = vrot.slane %v471, 2
        %v725 = vsel %vm666, %v722, %v724
        %v726 = vrot.slane %v472, 2
        %v727 = vsel %vm666, %v724, %v726
        %v728 = vrot.slane %v473, 2
        %v729 = vsel %vm666, %v726, %v728
        %730 = vrot.lane.b32.xlu0 %v669, 64
        %v731 = vpop.permute.xlu0 %730
        %732 = vrot.lane.b32.xlu0 %v671, 64
        %v733 = vpop.permute.xlu0 %732
        %734 = vrot.lane.b32.xlu0 %v673, 64
        %v735 = vpop.permute.xlu0 %734
        %736 = vrot.lane.b32.xlu0 %v675, 64
        %v737 = vpop.permute.xlu0 %736
        %738 = vrot.lane.b32.xlu0 %v677, 64
        %v739 = vpop.permute.xlu0 %738
        %740 = vrot.lane.b32.xlu0 %v679, 64
        %v741 = vpop.permute.xlu0 %740
        %742 = vrot.lane.b32.xlu0 %v681, 64
        %v743 = vpop.permute.xlu0 %742
        %744 = vrot.lane.b32.xlu0 %v683, 64
        %v745 = vpop.permute.xlu0 %744
        %746 = vrot.lane.b32.xlu0 %v685, 64
        %v747 = vpop.permute.xlu0 %746
        %748 = vrot.lane.b32.xlu0 %v687, 64
        %v749 = vpop.permute.xlu0 %748
        %750 = vrot.lane.b32.xlu0 %v689, 64
        %v751 = vpop.permute.xlu0 %750
        %752 = vrot.lane.b32.xlu0 %v691, 64
        %v753 = vpop.permute.xlu0 %752
        %754 = vrot.lane.b32.xlu0 %v693, 64
        %v755 = vpop.permute.xlu0 %754
        %756 = vrot.lane.b32.xlu0 %v695, 64
        %v757 = vpop.permute.xlu0 %756
        %758 = vrot.lane.b32.xlu0 %v697, 64
        %v759 = vpop.permute.xlu0 %758
        %760 = vrot.lane.b32.xlu0 %v699, 64
        %v761 = vpop.permute.xlu0 %760
        %762 = vrot.lane.b32.xlu0 %v701, 64
        %v763 = vpop.permute.xlu0 %762
        %764 = vrot.lane.b32.xlu0 %v703, 64
        %v765 = vpop.permute.xlu0 %764
        %766 = vrot.lane.b32.xlu0 %v705, 64
        %v767 = vpop.permute.xlu0 %766
        %768 = vrot.lane.b32.xlu0 %v707, 64
        %v769 = vpop.permute.xlu0 %768
        %770 = vrot.lane.b32.xlu0 %v709, 64
        %v771 = vpop.permute.xlu0 %770
        %772 = vrot.lane.b32.xlu0 %v711, 64
        %v773 = vpop.permute.xlu0 %772
        %774 = vrot.lane.b32.xlu0 %v713, 64
        %v775 = vpop.permute.xlu0 %774
        %776 = vrot.lane.b32.xlu0 %v715, 64
        %v777 = vpop.permute.xlu0 %776
        %778 = vrot.lane.b32.xlu0 %v717, 64
        %v779 = vpop.permute.xlu0 %778
        %780 = vrot.lane.b32.xlu0 %v719, 64
        %v781 = vpop.permute.xlu0 %780
        %782 = vrot.lane.b32.xlu0 %v721, 64
        %v783 = vpop.permute.xlu0 %782
        %784 = vrot.lane.b32.xlu0 %v723, 64
        %v785 = vpop.permute.xlu0 %784
        %786 = vrot.lane.b32.xlu0 %v725, 64
        %v787 = vpop.permute.xlu0 %786
        %788 = vrot.lane.b32.xlu0 %v727, 64
        %v789 = vpop.permute.xlu0 %788
        %790 = vrot.lane.b32.xlu0 %v729, 64
        %v791 = vpop.permute.xlu0 %790
        %792 = vrot.lane.b32.xlu0 %v728, 64
        %v793 = vpop.permute.xlu0 %792
        %vm826 = vcmask 1044480
        %v827 = vrot.slane %v442, 3
        %v828 = vrot.slane %v443, 3
        %v829 = vsel %vm826, %v827, %v828
        %v830 = vrot.slane %v444, 3
        %v831 = vsel %vm826, %v828, %v830
        %v832 = vrot.slane %v445, 3
        %v833 = vsel %vm826, %v830, %v832
        %v834 = vrot.slane %v446, 3
        %v835 = vsel %vm826, %v832, %v834
        %v836 = vrot.slane %v447, 3
        %v837 = vsel %vm826, %v834, %v836
        %v838 = vrot.slane %v448, 3
        %v839 = vsel %vm826, %v836, %v838
        %v840 = vrot.slane %v449, 3
        %v841 = vsel %vm826, %v838, %v840
        %v842 = vrot.slane %v450, 3
        %v843 = vsel %vm826, %v840, %v842
        %v844 = vrot.slane %v451, 3
        %v845 = vsel %vm826, %v842, %v844
        %v846 = vrot.slane %v452, 3
        %v847 = vsel %vm826, %v844, %v846
        %v848 = vrot.slane %v453, 3
        %v849 = vsel %vm826, %v846, %v848
        %v850 = vrot.slane %v454, 3
        %v851 = vsel %vm826, %v848, %v850
        %v852 = vrot.slane %v455, 3
        %v853 = vsel %vm826, %v850, %v852
        %v854 = vrot.slane %v456, 3
        %v855 = vsel %vm826, %v852, %v854
        %v856 = vrot.slane %v457, 3
        %v857 = vsel %vm826, %v854, %v856
        %v858 = vrot.slane %v458, 3
        %v859 = vsel %vm826, %v856, %v858
        %v860 = vrot.slane %v459, 3
        %v861 = vsel %vm826, %v858, %v860
        %v862 = vrot.slane %v460, 3
        %v863 = vsel %vm826, %v860, %v862
        %v864 = vrot.slane %v461, 3
        %v865 = vsel %vm826, %v862, %v864
        %v866 = vrot.slane %v462, 3
        %v867 = vsel %vm826, %v864, %v866
        %v868 = vrot.slane %v463, 3
        %v869 = vsel %vm826, %v866, %v868
        %v870 = vrot.slane %v464, 3
        %v871 = vsel %vm826, %v868, %v870
        %v872 = vrot.slane %v465, 3
        %v873 = vsel %vm826, %v870, %v872
        %v874 = vrot.slane %v466, 3
        %v875 = vsel %vm826, %v872, %v874
        %v876 = vrot.slane %v467, 3
        %v877 = vsel %vm826, %v874, %v876
        %v878 = vrot.slane %v468, 3
        %v879 = vsel %vm826, %v876, %v878
        %v880 = vrot.slane %v469, 3
        %v881 = vsel %vm826, %v878, %v880
        %v882 = vrot.slane %v470, 3
        %v883 = vsel %vm826, %v880, %v882
        %v884 = vrot.slane %v471, 3
        %v885 = vsel %vm826, %v882, %v884
        %v886 = vrot.slane %v472, 3
        %v887 = vsel %vm826, %v884, %v886
        %v888 = vrot.slane %v473, 3
        %v889 = vsel %vm826, %v886, %v888
        %890 = vrot.lane.b32.xlu0 %v829, 96
        %v891 = vpop.permute.xlu0 %890
        %892 = vrot.lane.b32.xlu0 %v831, 96
        %v893 = vpop.permute.xlu0 %892
        %894 = vrot.lane.b32.xlu0 %v833, 96
        %v895 = vpop.permute.xlu0 %894
        %896 = vrot.lane.b32.xlu0 %v835, 96
        %v897 = vpop.permute.xlu0 %896
        %898 = vrot.lane.b32.xlu0 %v837, 96
        %v899 = vpop.permute.xlu0 %898
        %900 = vrot.lane.b32.xlu0 %v839, 96
        %v901 = vpop.permute.xlu0 %900
        %902 = vrot.lane.b32.xlu0 %v841, 96
        %v903 = vpop.permute.xlu0 %902
        %904 = vrot.lane.b32.xlu0 %v843, 96
        %v905 = vpop.permute.xlu0 %904
        %906 = vrot.lane.b32.xlu0 %v845, 96
        %v907 = vpop.permute.xlu0 %906
        %908 = vrot.lane.b32.xlu0 %v847, 96
        %v909 = vpop.permute.xlu0 %908
        %910 = vrot.lane.b32.xlu0 %v849, 96
        %v911 = vpop.permute.xlu0 %910
        %912 = vrot.lane.b32.xlu0 %v851, 96
        %v913 = vpop.permute.xlu0 %912
        %914 = vrot.lane.b32.xlu0 %v853, 96
        %v915 = vpop.permute.xlu0 %914
        %916 = vrot.lane.b32.xlu0 %v855, 96
        %v917 = vpop.permute.xlu0 %916
        %918 = vrot.lane.b32.xlu0 %v857, 96
        %v919 = vpop.permute.xlu0 %918
        %920 = vrot.lane.b32.xlu0 %v859, 96
        %v921 = vpop.permute.xlu0 %920
        %922 = vrot.lane.b32.xlu0 %v861, 96
        %v923 = vpop.permute.xlu0 %922
        %924 = vrot.lane.b32.xlu0 %v863, 96
        %v925 = vpop.permute.xlu0 %924
        %926 = vrot.lane.b32.xlu0 %v865, 96
        %v927 = vpop.permute.xlu0 %926
        %928 = vrot.lane.b32.xlu0 %v867, 96
        %v929 = vpop.permute.xlu0 %928
        %930 = vrot.lane.b32.xlu0 %v869, 96
        %v931 = vpop.permute.xlu0 %930
        %932 = vrot.lane.b32.xlu0 %v871, 96
        %v933 = vpop.permute.xlu0 %932
        %934 = vrot.lane.b32.xlu0 %v873, 96
        %v935 = vpop.permute.xlu0 %934
        %936 = vrot.lane.b32.xlu0 %v875, 96
        %v937 = vpop.permute.xlu0 %936
        %938 = vrot.lane.b32.xlu0 %v877, 96
        %v939 = vpop.permute.xlu0 %938
        %940 = vrot.lane.b32.xlu0 %v879, 96
        %v941 = vpop.permute.xlu0 %940
        %942 = vrot.lane.b32.xlu0 %v881, 96
        %v943 = vpop.permute.xlu0 %942
        %944 = vrot.lane.b32.xlu0 %v883, 96
        %v945 = vpop.permute.xlu0 %944
        %946 = vrot.lane.b32.xlu0 %v885, 96
        %v947 = vpop.permute.xlu0 %946
        %948 = vrot.lane.b32.xlu0 %v887, 96
        %v949 = vpop.permute.xlu0 %948
        %950 = vrot.lane.b32.xlu0 %v889, 96
        %v951 = vpop.permute.xlu0 %950
        %952 = vrot.lane.b32.xlu0 %v888, 96
        %v953 = vpop.permute.xlu0 %952
        %vm986 = vcmask 1043456
        %v987 = vrot.slane %v442, 4
        %v988 = vrot.slane %v443, 4
        %v989 = vsel %vm986, %v987, %v988
        %v990 = vrot.slane %v444, 4
        %v991 = vsel %vm986, %v988, %v990
        %v992 = vrot.slane %v445, 4
        %v993 = vsel %vm986, %v990, %v992
        %v994 = vrot.slane %v446, 4
        %v995 = vsel %vm986, %v992, %v994
        %v996 = vrot.slane %v447, 4
        %v997 = vsel %vm986, %v994, %v996
        %v998 = vrot.slane %v448, 4
        %v999 = vsel %vm986, %v996, %v998
        %v1000 = vrot.slane %v449, 4
        %v1001 = vsel %vm986, %v998, %v1000
        %v1002 = vrot.slane %v450, 4
        %v1003 = vsel %vm986, %v1000, %v1002
        %v1004 = vrot.slane %v451, 4
        %v1005 = vsel %vm986, %v1002, %v1004
        %v1006 = vrot.slane %v452, 4
        %v1007 = vsel %vm986, %v1004, %v1006
        %v1008 = vrot.slane %v453, 4
        %v1009 = vsel %vm986, %v1006, %v1008
        %v1010 = vrot.slane %v454, 4
        %v1011 = vsel %vm986, %v1008, %v1010
        %v1012 = vrot.slane %v455, 4
        %v1013 = vsel %vm986, %v1010, %v1012
        %v1014 = vrot.slane %v456, 4
        %v1015 = vsel %vm986, %v1012, %v1014
        %v1016 = vrot.slane %v457, 4
        %v1017 = vsel %vm986, %v1014, %v1016
        %v1018 = vrot.slane %v458, 4
        %v1019 = vsel %vm986, %v1016, %v1018
        %v1020 = vrot.slane %v459, 4
        %v1021 = vsel %vm986, %v1018, %v1020
        %v1022 = vrot.slane %v460, 4
        %v1023 = vsel %vm986, %v1020, %v1022
        %v1024 = vrot.slane %v461, 4
        %v1025 = vsel %vm986, %v1022, %v1024
        %v1026 = vrot.slane %v462, 4
        %v1027 = vsel %vm986, %v1024, %v1026
        %v1028 = vrot.slane %v463, 4
        %v1029 = vsel %vm986, %v1026, %v1028
        %v1030 = vrot.slane %v464, 4
        %v1031 = vsel %vm986, %v1028, %v1030
        %v1032 = vrot.slane %v465, 4
        %v1033 = vsel %vm986, %v1030, %v1032
        %v1034 = vrot.slane %v466, 4
        %v1035 = vsel %vm986, %v1032, %v1034
        %v1036 = vrot.slane %v467, 4
        %v1037 = vsel %vm986, %v1034, %v1036
        %v1038 = vrot.slane %v468, 4
        %v1039 = vsel %vm986, %v1036, %v1038
        %v1040 = vrot.slane %v469, 4
        %v1041 = vsel %vm986, %v1038, %v1040
        %v1042 = vrot.slane %v470, 4
        %v1043 = vsel %vm986, %v1040, %v1042
        %v1044 = vrot.slane %v471, 4
        %v1045 = vsel %vm986, %v1042, %v1044
        %v1046 = vrot.slane %v472, 4
        %v1047 = vsel %vm986, %v1044, %v1046
        %v1048 = vrot.slane %v473, 4
        %v1049 = vsel %vm986, %v1046, %v1048
        %vm1082 = vcmask 261120
        %v1083 = vsel %vm1082, %v442, %v571
        %v1084 = vsel %vm1082, %v443, %v573
        %v1085 = vsel %vm1082, %v444, %v575
        %v1086 = vsel %vm1082, %v445, %v577
        %v1087 = vsel %vm1082, %v446, %v579
        %v1088 = vsel %vm1082, %v447, %v581
        %v1089 = vsel %vm1082, %v448, %v583
        %v1090 = vsel %vm1082, %v449, %v585
        %v1091 = vsel %vm1082, %v450, %v587
        %v1092 = vsel %vm1082, %v451, %v589
        %v1093 = vsel %vm1082, %v452, %v591
        %v1094 = vsel %vm1082, %v453, %v593
        %v1095 = vsel %vm1082, %v454, %v595
        %v1096 = vsel %vm1082, %v455, %v597
        %v1097 = vsel %vm1082, %v456, %v599
        %v1098 = vsel %vm1082, %v457, %v601
        %v1099 = vsel %vm1082, %v458, %v603
        %v1100 = vsel %vm1082, %v459, %v605
        %v1101 = vsel %vm1082, %v460, %v607
        %v1102 = vsel %vm1082, %v461, %v609
        %v1103 = vsel %vm1082, %v462, %v611
        %v1104 = vsel %vm1082, %v463, %v613
        %v1105 = vsel %vm1082, %v464, %v615
        %v1106 = vsel %vm1082, %v465, %v617
        %v1107 = vsel %vm1082, %v466, %v619
        %v1108 = vsel %vm1082, %v467, %v621
        %v1109 = vsel %vm1082, %v468, %v623
        %v1110 = vsel %vm1082, %v469, %v625
        %v1111 = vsel %vm1082, %v470, %v627
        %v1112 = vsel %vm1082, %v471, %v629
        %v1113 = vsel %vm1082, %v472, %v631
        %v1114 = vsel %vm1082, %v473, %v633
        %vm1115 = vcmask 523264
        %v1116 = vsel %vm1115, %v1083, %v731
        %v1117 = vsel %vm1115, %v1084, %v733
        %v1118 = vsel %vm1115, %v1085, %v735
        %v1119 = vsel %vm1115, %v1086, %v737
        %v1120 = vsel %vm1115, %v1087, %v739
        %v1121 = vsel %vm1115, %v1088, %v741
        %v1122 = vsel %vm1115, %v1089, %v743
        %v1123 = vsel %vm1115, %v1090, %v745
        %v1124 = vsel %vm1115, %v1091, %v747
        %v1125 = vsel %vm1115, %v1092, %v749
        %v1126 = vsel %vm1115, %v1093, %v751
        %v1127 = vsel %vm1115, %v1094, %v753
        %v1128 = vsel %vm1115, %v1095, %v755
        %v1129 = vsel %vm1115, %v1096, %v757
        %v1130 = vsel %vm1115, %v1097, %v759
        %v1131 = vsel %vm1115, %v1098, %v761
        %v1132 = vsel %vm1115, %v1099, %v763
        %v1133 = vsel %vm1115, %v1100, %v765
        %v1134 = vsel %vm1115, %v1101, %v767
        %v1135 = vsel %vm1115, %v1102, %v769
        %v1136 = vsel %vm1115, %v1103, %v771
        %v1137 = vsel %vm1115, %v1104, %v773
        %v1138 = vsel %vm1115, %v1105, %v775
        %v1139 = vsel %vm1115, %v1106, %v777
        %v1140 = vsel %vm1115, %v1107, %v779
        %v1141 = vsel %vm1115, %v1108, %v781
        %v1142 = vsel %vm1115, %v1109, %v783
        %v1143 = vsel %vm1115, %v1110, %v785
        %v1144 = vsel %vm1115, %v1111, %v787
        %v1145 = vsel %vm1115, %v1112, %v789
        %v1146 = vsel %vm1115, %v1113, %v791
        %v1147 = vsel %vm1115, %v1114, %v793
        %vm1148 = vcmask 785408
        %v1149 = vsel %vm1148, %v1116, %v891
        %v1150 = vsel %vm1148, %v1117, %v893
        %v1151 = vsel %vm1148, %v1118, %v895
        %v1152 = vsel %vm1148, %v1119, %v897
        %v1153 = vsel %vm1148, %v1120, %v899
        %v1154 = vsel %vm1148, %v1121, %v901
        %v1155 = vsel %vm1148, %v1122, %v903
        %v1156 = vsel %vm1148, %v1123, %v905
        %v1157 = vsel %vm1148, %v1124, %v907
        %v1158 = vsel %vm1148, %v1125, %v909
        %v1159 = vsel %vm1148, %v1126, %v911
        %v1160 = vsel %vm1148, %v1127, %v913
        %v1161 = vsel %vm1148, %v1128, %v915
        %v1162 = vsel %vm1148, %v1129, %v917
        %v1163 = vsel %vm1148, %v1130, %v919
        %v1164 = vsel %vm1148, %v1131, %v921
        %v1165 = vsel %vm1148, %v1132, %v923
        %v1166 = vsel %vm1148, %v1133, %v925
        %v1167 = vsel %vm1148, %v1134, %v927
        %v1168 = vsel %vm1148, %v1135, %v929
        %v1169 = vsel %vm1148, %v1136, %v931
        %v1170 = vsel %vm1148, %v1137, %v933
        %v1171 = vsel %vm1148, %v1138, %v935
        %v1172 = vsel %vm1148, %v1139, %v937
        %v1173 = vsel %vm1148, %v1140, %v939
        %v1174 = vsel %vm1148, %v1141, %v941
        %v1175 = vsel %vm1148, %v1142, %v943
        %v1176 = vsel %vm1148, %v1143, %v945
        %v1177 = vsel %vm1148, %v1144, %v947
        %v1178 = vsel %vm1148, %v1145, %v949
        %v1179 = vsel %vm1148, %v1146, %v951
        %v1180 = vsel %vm1148, %v1147, %v953
        %v1181 = vpack.c.bf16 %v1150, %v1149
        %v1182 = vpack.c.bf16 %v991, %v989
        %v1183 = vpack.c.bf16 %v1152, %v1151
        %v1184 = vpack.c.bf16 %v995, %v993
        %v1185 = vpack.c.bf16 %v1154, %v1153
        %v1186 = vpack.c.bf16 %v999, %v997
        %v1187 = vpack.c.bf16 %v1156, %v1155
        %v1188 = vpack.c.bf16 %v1003, %v1001
        %v1189 = vpack.c.bf16 %v1158, %v1157
        %v1190 = vpack.c.bf16 %v1007, %v1005
        %v1191 = vpack.c.bf16 %v1160, %v1159
        %v1192 = vpack.c.bf16 %v1011, %v1009
        %v1193 = vpack.c.bf16 %v1162, %v1161
        %v1194 = vpack.c.bf16 %v1015, %v1013
        %v1195 = vpack.c.bf16 %v1164, %v1163
        %v1196 = vpack.c.bf16 %v1019, %v1017
        %v1197 = vpack.c.bf16 %v1166, %v1165
        %v1198 = vpack.c.bf16 %v1023, %v1021
        %v1199 = vpack.c.bf16 %v1168, %v1167
        %v1200 = vpack.c.bf16 %v1027, %v1025
        %v1201 = vpack.c.bf16 %v1170, %v1169
        %v1202 = vpack.c.bf16 %v1031, %v1029
        %v1203 = vpack.c.bf16 %v1172, %v1171
        %v1204 = vpack.c.bf16 %v1035, %v1033
        %v1205 = vpack.c.bf16 %v1174, %v1173
        %v1206 = vpack.c.bf16 %v1039, %v1037
        %v1207 = vpack.c.bf16 %v1176, %v1175
        %v1208 = vpack.c.bf16 %v1043, %v1041
        %v1209 = vpack.c.bf16 %v1178, %v1177
        %v1210 = vpack.c.bf16 %v1047, %v1045
        %v1211 = vpack.c.bf16 %v1180, %v1179
        %v1212 = vpack.c.bf16 %v1048, %v1049
        %v1213 = vld [vmem:[%s1] sm:$0xff]
        %v1214 = vld [vmem:[%s1 + $0x8] sm:$0xff]
        %v1215 = vld [vmem:[%s1 + $0x10] sm:$0xff]
        %v1216 = vld [vmem:[%s1 + $0x18] sm:$0xff]
        %v1217 = vld [vmem:[%s1 + $0x20] sm:$0xff]
        %v1218 = vld [vmem:[%s1 + $0x28] sm:$0xff]
        %v1219 = vld [vmem:[%s1 + $0x30] sm:$0xff]
        %v1220 = vld [vmem:[%s1 + $0x38] sm:$0xff]
        %v1221 = vld [vmem:[%s1 + $0x40] sm:$0xff]
        %v1222 = vld [vmem:[%s1 + $0x48] sm:$0xff]
        %v1223 = vld [vmem:[%s1 + $0x50] sm:$0xff]
        %v1224 = vld [vmem:[%s1 + $0x58] sm:$0xff]
        %v1225 = vld [vmem:[%s1 + $0x60] sm:$0xff]
        %v1226 = vld [vmem:[%s1 + $0x68] sm:$0xff]
        %v1227 = vld [vmem:[%s1 + $0x70] sm:$0xff]
        %v1228 = vld [vmem:[%s1 + $0x78] sm:$0xff]
        %v1229 = vld [vmem:[%s1 + $0x80] sm:$0xff]
        %v1230 = vld [vmem:[%s1 + $0x88] sm:$0xff]
        %v1231 = vld [vmem:[%s1 + $0x90] sm:$0xff]
        %v1232 = vld [vmem:[%s1 + $0x98] sm:$0xff]
        %v1233 = vld [vmem:[%s2] sm:$0x3]
        %v1235 = vlaneseq
        %v1236 = vshrl.u32 %v1235, 7
        %v1237 = vsub.s32 0, %v1236
        %v1238 = vrot.slane %v1233, %v1237
        %v1239 = vlaneseq
        %v1240 = vshrl.u32 %v1239, 7
        %v1241 = vsub.s32 1, %v1240
        %v1242 = vrot.slane %v1233, %v1241
        %v1265 = vunpack.c.l.b16 %v1213
        %v1266 = vunpack.c.h.b16 %v1213
        %v1267 = vunpack.c.l.b16 %v1214
        %v1268 = vunpack.c.h.b16 %v1214
        %v1269 = vunpack.c.l.b16 %v1215
        %v1270 = vunpack.c.h.b16 %v1215
        %v1271 = vunpack.c.l.b16 %v1216
        %v1272 = vunpack.c.h.b16 %v1216
        %v1273 = vunpack.c.l.b16 %v1217
        %v1274 = vunpack.c.h.b16 %v1217
        %v1275 = vunpack.c.l.b16 %v1218
        %v1276 = vunpack.c.h.b16 %v1218
        %v1277 = vunpack.c.l.b16 %v1219
        %v1278 = vunpack.c.h.b16 %v1219
        %v1279 = vunpack.c.l.b16 %v1220
        %v1280 = vunpack.c.h.b16 %v1220
        %v1281 = vunpack.c.l.b16 %v1221
        %v1282 = vunpack.c.h.b16 %v1221
        %v1283 = vunpack.c.l.b16 %v1222
        %v1284 = vunpack.c.h.b16 %v1222
        %v1285 = vunpack.c.l.b16 %v1223
        %v1286 = vunpack.c.h.b16 %v1223
        %v1287 = vunpack.c.l.b16 %v1224
        %v1288 = vunpack.c.h.b16 %v1224
        %v1289 = vunpack.c.l.b16 %v1225
        %v1290 = vunpack.c.h.b16 %v1225
        %v1291 = vunpack.c.l.b16 %v1226
        %v1292 = vunpack.c.h.b16 %v1226
        %v1293 = vunpack.c.l.b16 %v1227
        %v1294 = vunpack.c.h.b16 %v1227
        %v1295 = vunpack.c.l.b16 %v1228
        %v1296 = vunpack.c.h.b16 %v1228
        %v1297 = vunpack.c.l.b16 %v1229
        %v1298 = vunpack.c.h.b16 %v1229
        %v1299 = vunpack.c.l.b16 %v1230
        %v1300 = vunpack.c.h.b16 %v1230
        %v1301 = vunpack.c.l.b16 %v1231
        %v1302 = vunpack.c.h.b16 %v1231
        %v1303 = vunpack.c.l.b16 %v1232
        %v1304 = vunpack.c.h.b16 %v1232
        %v1305 = vpack.c.b16 %v1267, %v1265
        %v1306 = vpack.c.b16 %v1268, %v1266
        %v1307 = vpack.c.b16 %v1271, %v1269
        %v1308 = vpack.c.b16 %v1272, %v1270
        %v1309 = vpack.c.b16 %v1275, %v1273
        %v1310 = vpack.c.b16 %v1276, %v1274
        %v1311 = vpack.c.b16 %v1279, %v1277
        %v1312 = vpack.c.b16 %v1280, %v1278
        %v1313 = vpack.c.b16 %v1283, %v1281
        %v1314 = vpack.c.b16 %v1284, %v1282
        %v1315 = vpack.c.b16 %v1287, %v1285
        %v1316 = vpack.c.b16 %v1288, %v1286
        %v1317 = vpack.c.b16 %v1291, %v1289
        %v1318 = vpack.c.b16 %v1292, %v1290
        %v1319 = vpack.c.b16 %v1295, %v1293
        %v1320 = vpack.c.b16 %v1296, %v1294
        %v1321 = vpack.c.b16 %v1299, %v1297
        %v1322 = vpack.c.b16 %v1300, %v1298
        %v1323 = vpack.c.b16 %v1303, %v1301
        %v1324 = vpack.c.b16 %v1304, %v1302
        %v1346 = vsel %vm1082, %v1182, 0
        %v1349 = vsel %vm1082, %v1184, 0
        %v1352 = vsel %vm1082, %v1186, 0
        %v1355 = vsel %vm1082, %v1188, 0
        %v1358 = vsel %vm1082, %v1190, 0
        %v1361 = vsel %vm1082, %v1192, 0
        %v1364 = vsel %vm1082, %v1194, 0
        %v1367 = vsel %vm1082, %v1196, 0
        %v1370 = vsel %vm1082, %v1198, 0
        %v1373 = vsel %vm1082, %v1200, 0
        %v1376 = vsel %vm1082, %v1202, 0
        %v1379 = vsel %vm1082, %v1204, 0
        %v1382 = vsel %vm1082, %v1206, 0
        %v1385 = vsel %vm1082, %v1208, 0
        %v1388 = vsel %vm1082, %v1210, 0
        %v1391 = vsel %vm1082, %v1212, 0
        %1393 = vmatprep.subr.bf16.mxu0 %v1306
        %1394 = vmatpush1.bf16.msra.mxu0 %v1305
        %1395 = vmatprep.subr.bf16.mxu0 %v1308
        %1396 = vmatpush1.bf16.msra.mxu0 %v1307
        %1397 = vmatprep.subr.bf16.mxu0 %v1310
        %1398 = vmatpush1.bf16.msra.mxu0 %v1309
        %1399 = vmatprep.subr.bf16.mxu0 %v1312
        %1400 = vmatpush1.bf16.msra.mxu0 %v1311
        %1401 = vmatprep.subr.bf16.mxu0 %v1314
        %1402 = vmatpush1.bf16.msra.mxu0 %v1313
        %1403 = vmatprep.subr.bf16.mxu0 %v1316
        %1404 = vmatpush1.bf16.msra.mxu0 %v1315
        %1405 = vmatprep.subr.bf16.mxu0 %v1318
        %1406 = vmatpush1.bf16.msra.mxu0 %v1317
        %1407 = vmatprep.subr.bf16.mxu0 %v1320
        %1408 = vmatpush1.bf16.msra.mxu0 %v1319
        %1409 = vmatprep.subr.bf16.mxu0 %v1322
        %1410 = vmatpush1.bf16.msra.mxu0 %v1321
        %1411 = vmatprep.subr.bf16.mxu0 %v1324
        %1412 = vmatpush1.bf16.msra.mxu0 %v1323
        %1413 = vmatprep.subr.bf16.mxu0 0
        %1414 = vmatpush1.bf16.msra.mxu0 0
        %1415 = vmatprep.subr.bf16.mxu0 0
        %1416 = vmatpush1.bf16.msra.mxu0 0
        %1417 = vmatprep.subr.bf16.mxu0 0
        %1418 = vmatpush1.bf16.msra.mxu0 0
        %1419 = vmatprep.subr.bf16.mxu0 0
        %1420 = vmatpush1.bf16.msra.mxu0 0
        %1421 = vmatprep.subr.bf16.mxu0 0
        %1422 = vmatpush1.bf16.msra.mxu0 0
        %1423 = vmatprep.subr.bf16.mxu0 0
        %1424 = vmatpush1.bf16.msra.mxu0 0
        %1425 = vmatprep.mubr.bf16.mxu0 %v1346
        %1426 = vmatmul.mubr.bf16.gmra.mrb[0].mxu0 %v1181
        %v1427 = vpop.f32.mrb[0].mxu0
        %v1428 = vadd.f32 %v1238, %v1427
        %v1429 = vpop.f32.mrb[0].mxu0
        %v1430 = vadd.f32 %v1242, %v1429
        %v1431 = vpop.f32.mrb[0].mxu0
        %v1432 = vadd.f32 %v1238, %v1431
        %v1433 = vpop.f32.mrb[0].mxu0
        %v1434 = vadd.f32 %v1242, %v1433
        %1435 = vmatprep.mubr.bf16.mxu0 %v1349
        %1436 = vmatmul.mubr.bf16.gmra.mrb[0].mxu0 %v1183
        %v1437 = vpop.f32.mrb[0].mxu0
        %v1438 = vadd.f32 %v1238, %v1437
        %v1439 = vpop.f32.mrb[0].mxu0
        %v1440 = vadd.f32 %v1242, %v1439
        %v1441 = vpop.f32.mrb[0].mxu0
        %v1442 = vadd.f32 %v1238, %v1441
        %v1443 = vpop.f32.mrb[0].mxu0
        %v1444 = vadd.f32 %v1242, %v1443
        %1445 = vmatprep.mubr.bf16.mxu0 %v1352
        %1446 = vmatmul.mubr.bf16.gmra.mrb[0].mxu0 %v1185
        %v1447 = vpop.f32.mrb[0].mxu0
        %v1448 = vadd.f32 %v1238, %v1447
        %v1449 = vpop.f32.mrb[0].mxu0
        %v1450 = vadd.f32 %v1242, %v1449
        %v1451 = vpop.f32.mrb[0].mxu0
        %v1452 = vadd.f32 %v1238, %v1451
        %v1453 = vpop.f32.mrb[0].mxu0
        %v1454 = vadd.f32 %v1242, %v1453
        %1455 = vmatprep.mubr.bf16.mxu0 %v1355
        %1456 = vmatmul.mubr.bf16.gmra.mrb[0].mxu0 %v1187
        %v1457 = vpop.f32.mrb[0].mxu0
        %v1458 = vadd.f32 %v1238, %v1457
        %v1459 = vpop.f32.mrb[0].mxu0
        %v1460 = vadd.f32 %v1242, %v1459
        %v1461 = vpop.f32.mrb[0].mxu0
        %v1462 = vadd.f32 %v1238, %v1461
        %v1463 = vpop.f32.mrb[0].mxu0
        %v1464 = vadd.f32 %v1242, %v1463
        %1465 = vmatprep.mubr.bf16.mxu0 %v1358
        %1466 = vmatmul.mubr.bf16.gmra.mrb[0].mxu0 %v1189
        %v1467 = vpop.f32.mrb[0].mxu0
        %v1468 = vadd.f32 %v1238, %v1467
        %v1469 = vpop.f32.mrb[0].mxu0
        %v1470 = vadd.f32 %v1242, %v1469
        %v1471 = vpop.f32.mrb[0].mxu0
        %v1472 = vadd.f32 %v1238, %v1471
        %v1473 = vpop.f32.mrb[0].mxu0
        %v1474 = vadd.f32 %v1242, %v1473
        %1475 = vmatprep.mubr.bf16.mxu0 %v1361
        %1476 = vmatmul.mubr.bf16.gmra.mrb[0].mxu0 %v1191
        %v1477 = vpop.f32.mrb[0].mxu0
        %v1478 = vadd.f32 %v1238, %v1477
        %v1479 = vpop.f32.mrb[0].mxu0
        %v1480 = vadd.f32 %v1242, %v1479
        %v1481 = vpop.f32.mrb[0].mxu0
        %v1482 = vadd.f32 %v1238, %v1481
        %v1483 = vpop.f32.mrb[0].mxu0
        %v1484 = vadd.f32 %v1242, %v1483
        %1485 = vmatprep.mubr.bf16.mxu0 %v1364
        %1486 = vmatmul.mubr.bf16.gmra.mrb[0].mxu0 %v1193
        %v1487 = vpop.f32.mrb[0].mxu0
        %v1488 = vadd.f32 %v1238, %v1487
        %v1489 = vpop.f32.mrb[0].mxu0
        %v1490 = vadd.f32 %v1242, %v1489
        %v1491 = vpop.f32.mrb[0].mxu0
        %v1492 = vadd.f32 %v1238, %v1491
        %v1493 = vpop.f32.mrb[0].mxu0
        %v1494 = vadd.f32 %v1242, %v1493
        %1495 = vmatprep.mubr.bf16.mxu0 %v1367
        %1496 = vmatmul.mubr.bf16.gmra.mrb[0].mxu0 %v1195
        %v1497 = vpop.f32.mrb[0].mxu0
        %v1498 = vadd.f32 %v1238, %v1497
        %v1499 = vpop.f32.mrb[0].mxu0
        %v1500 = vadd.f32 %v1242, %v1499
        %v1501 = vpop.f32.mrb[0].mxu0
        %v1502 = vadd.f32 %v1238, %v1501
        %v1503 = vpop.f32.mrb[0].mxu0
        %v1504 = vadd.f32 %v1242, %v1503
        %1505 = vmatprep.mubr.bf16.mxu0 %v1370
        %1506 = vmatmul.mubr.bf16.gmra.mrb[0].mxu0 %v1197
        %v1507 = vpop.f32.mrb[0].mxu0
        %v1508 = vadd.f32 %v1238, %v1507
        %v1509 = vpop.f32.mrb[0].mxu0
        %v1510 = vadd.f32 %v1242, %v1509
        %v1511 = vpop.f32.mrb[0].mxu0
        %v1512 = vadd.f32 %v1238, %v1511
        %v1513 = vpop.f32.mrb[0].mxu0
        %v1514 = vadd.f32 %v1242, %v1513
        %1515 = vmatprep.mubr.bf16.mxu0 %v1373
        %1516 = vmatmul.mubr.bf16.gmra.mrb[0].mxu0 %v1199
        %v1517 = vpop.f32.mrb[0].mxu0
        %v1518 = vadd.f32 %v1238, %v1517
        %v1519 = vpop.f32.mrb[0].mxu0
        %v1520 = vadd.f32 %v1242, %v1519
        %v1521 = vpop.f32.mrb[0].mxu0
        %v1522 = vadd.f32 %v1238, %v1521
        %v1523 = vpop.f32.mrb[0].mxu0
        %v1524 = vadd.f32 %v1242, %v1523
        %1525 = vmatprep.mubr.bf16.mxu0 %v1376
        %1526 = vmatmul.mubr.bf16.gmra.mrb[0].mxu0 %v1201
        %v1527 = vpop.f32.mrb[0].mxu0
        %v1528 = vadd.f32 %v1238, %v1527
        %v1529 = vpop.f32.mrb[0].mxu0
        %v1530 = vadd.f32 %v1242, %v1529
        %v1531 = vpop.f32.mrb[0].mxu0
        %v1532 = vadd.f32 %v1238, %v1531
        %v1533 = vpop.f32.mrb[0].mxu0
        %v1534 = vadd.f32 %v1242, %v1533
        %1535 = vmatprep.mubr.bf16.mxu0 %v1379
        %1536 = vmatmul.mubr.bf16.gmra.mrb[0].mxu0 %v1203
        %v1537 = vpop.f32.mrb[0].mxu0
        %v1538 = vadd.f32 %v1238, %v1537
        %v1539 = vpop.f32.mrb[0].mxu0
        %v1540 = vadd.f32 %v1242, %v1539
        %v1541 = vpop.f32.mrb[0].mxu0
        %v1542 = vadd.f32 %v1238, %v1541
        %v1543 = vpop.f32.mrb[0].mxu0
        %v1544 = vadd.f32 %v1242, %v1543
        %1545 = vmatprep.mubr.bf16.mxu0 %v1382
        %1546 = vmatmul.mubr.bf16.gmra.mrb[0].mxu0 %v1205
        %v1547 = vpop.f32.mrb[0].mxu0
        %v1548 = vadd.f32 %v1238, %v1547
        %v1549 = vpop.f32.mrb[0].mxu0
        %v1550 = vadd.f32 %v1242, %v1549
        %v1551 = vpop.f32.mrb[0].mxu0
        %v1552 = vadd.f32 %v1238, %v1551
        %v1553 = vpop.f32.mrb[0].mxu0
        %v1554 = vadd.f32 %v1242, %v1553
        %1555 = vmatprep.mubr.bf16.mxu0 %v1385
        %1556 = vmatmul.mubr.bf16.gmra.mrb[0].mxu0 %v1207
        %v1557 = vpop.f32.mrb[0].mxu0
        %v1558 = vadd.f32 %v1238, %v1557
        %v1559 = vpop.f32.mrb[0].mxu0
        %v1560 = vadd.f32 %v1242, %v1559
        %v1561 = vpop.f32.mrb[0].mxu0
        %v1562 = vadd.f32 %v1238, %v1561
        %v1563 = vpop.f32.mrb[0].mxu0
        %v1564 = vadd.f32 %v1242, %v1563
        %1565 = vmatprep.mubr.bf16.mxu0 %v1388
        %1566 = vmatmul.mubr.bf16.gmra.mrb[0].mxu0 %v1209
        %v1567 = vpop.f32.mrb[0].mxu0
        %v1568 = vadd.f32 %v1238, %v1567
        %v1569 = vpop.f32.mrb[0].mxu0
        %v1570 = vadd.f32 %v1242, %v1569
        %v1571 = vpop.f32.mrb[0].mxu0
        %v1572 = vadd.f32 %v1238, %v1571
        %v1573 = vpop.f32.mrb[0].mxu0
        %v1574 = vadd.f32 %v1242, %v1573
        %1575 = vmatprep.mubr.bf16.mxu0 %v1391
        %1576 = vmatmul.mubr.bf16.gmra.mrb[0].mxu0 %v1211
        %v1577 = vpop.f32.mrb[0].mxu0
        %v1578 = vadd.f32 %v1238, %v1577
        %v1579 = vpop.f32.mrb[0].mxu0
        %v1580 = vadd.f32 %v1242, %v1579
        %v1581 = vpop.f32.mrb[0].mxu0
        %v1582 = vadd.f32 %v1238, %v1581
        %v1583 = vpop.f32.mrb[0].mxu0
        %v1584 = vadd.f32 %v1242, %v1583
        %1585 = vdwg.mxu0
        %v1586 = vmax.f32 %v1428, 0.0
        %v1587 = vmax.f32 %v1430, 0.0
        %v1588 = vmax.f32 %v1432, 0.0
        %v1589 = vmax.f32 %v1434, 0.0
        %v1590 = vmax.f32 %v1438, 0.0
        %v1591 = vmax.f32 %v1440, 0.0
        %v1592 = vmax.f32 %v1442, 0.0
        %v1593 = vmax.f32 %v1444, 0.0
        %v1594 = vmax.f32 %v1448, 0.0
        %v1595 = vmax.f32 %v1450, 0.0
        %v1596 = vmax.f32 %v1452, 0.0
        %v1597 = vmax.f32 %v1454, 0.0
        %v1598 = vmax.f32 %v1458, 0.0
        %v1599 = vmax.f32 %v1460, 0.0
        %v1600 = vmax.f32 %v1462, 0.0
        %v1601 = vmax.f32 %v1464, 0.0
        %v1602 = vmax.f32 %v1468, 0.0
        %v1603 = vmax.f32 %v1470, 0.0
        %v1604 = vmax.f32 %v1472, 0.0
        %v1605 = vmax.f32 %v1474, 0.0
        %v1606 = vmax.f32 %v1478, 0.0
        %v1607 = vmax.f32 %v1480, 0.0
        %v1608 = vmax.f32 %v1482, 0.0
        %v1609 = vmax.f32 %v1484, 0.0
        %v1610 = vmax.f32 %v1488, 0.0
        %v1611 = vmax.f32 %v1490, 0.0
        %v1612 = vmax.f32 %v1492, 0.0
        %v1613 = vmax.f32 %v1494, 0.0
        %v1614 = vmax.f32 %v1498, 0.0
        %v1615 = vmax.f32 %v1500, 0.0
        %v1616 = vmax.f32 %v1502, 0.0
        %v1617 = vmax.f32 %v1504, 0.0
        %v1618 = vmax.f32 %v1508, 0.0
        %v1619 = vmax.f32 %v1510, 0.0
        %v1620 = vmax.f32 %v1512, 0.0
        %v1621 = vmax.f32 %v1514, 0.0
        %v1622 = vmax.f32 %v1518, 0.0
        %v1623 = vmax.f32 %v1520, 0.0
        %v1624 = vmax.f32 %v1522, 0.0
        %v1625 = vmax.f32 %v1524, 0.0
        %v1626 = vmax.f32 %v1528, 0.0
        %v1627 = vmax.f32 %v1530, 0.0
        %v1628 = vmax.f32 %v1532, 0.0
        %v1629 = vmax.f32 %v1534, 0.0
        %v1630 = vmax.f32 %v1538, 0.0
        %v1631 = vmax.f32 %v1540, 0.0
        %v1632 = vmax.f32 %v1542, 0.0
        %v1633 = vmax.f32 %v1544, 0.0
        %v1634 = vmax.f32 %v1548, 0.0
        %v1635 = vmax.f32 %v1550, 0.0
        %v1636 = vmax.f32 %v1552, 0.0
        %v1637 = vmax.f32 %v1554, 0.0
        %v1638 = vmax.f32 %v1558, 0.0
        %v1639 = vmax.f32 %v1560, 0.0
        %v1640 = vmax.f32 %v1562, 0.0
        %v1641 = vmax.f32 %v1564, 0.0
        %v1642 = vmax.f32 %v1568, 0.0
        %v1643 = vmax.f32 %v1570, 0.0
        %v1644 = vmax.f32 %v1572, 0.0
        %v1645 = vmax.f32 %v1574, 0.0
        %v1646 = vmax.f32 %v1578, 0.0
        %v1647 = vmax.f32 %v1580, 0.0
        %v1648 = vmax.f32 %v1582, 0.0
        %v1649 = vmax.f32 %v1584, 0.0
        %v1714 = vrot.slane %v1586, 1
        %v1715 = vrot.slane %v1588, 1
        %v1716 = vsel %vm506, %v1714, %v1715
        %v1717 = vrot.slane %v1587, 1
        %v1718 = vrot.slane %v1589, 1
        %v1719 = vsel %vm506, %v1717, %v1718
        %v1720 = vrot.slane %v1590, 1
        %v1721 = vsel %vm506, %v1715, %v1720
        %v1722 = vrot.slane %v1591, 1
        %v1723 = vsel %vm506, %v1718, %v1722
        %v1724 = vrot.slane %v1592, 1
        %v1725 = vsel %vm506, %v1720, %v1724
        %v1726 = vrot.slane %v1593, 1
        %v1727 = vsel %vm506, %v1722, %v1726
        %v1728 = vrot.slane %v1594, 1
        %v1729 = vsel %vm506, %v1724, %v1728
        %v1730 = vrot.slane %v1595, 1
        %v1731 = vsel %vm506, %v1726, %v1730
        %v1732 = vrot.slane %v1596, 1
        %v1733 = vsel %vm506, %v1728, %v1732
        %v1734 = vrot.slane %v1597, 1
        %v1735 = vsel %vm506, %v1730, %v1734
        %v1736 = vrot.slane %v1598, 1
        %v1737 = vsel %vm506, %v1732, %v1736
        %v1738 = vrot.slane %v1599, 1
        %v1739 = vsel %vm506, %v1734, %v1738
        %v1740 = vrot.slane %v1600, 1
        %v1741 = vsel %vm506, %v1736, %v1740
        %v1742 = vrot.slane %v1601, 1
        %v1743 = vsel %vm506, %v1738, %v1742
        %v1744 = vrot.slane %v1602, 1
        %v1745 = vsel %vm506, %v1740, %v1744
        %v1746 = vrot.slane %v1603, 1
        %v1747 = vsel %vm506, %v1742, %v1746
        %v1748 = vrot.slane %v1604, 1
        %v1749 = vsel %vm506, %v1744, %v1748
        %v1750 = vrot.slane %v1605, 1
        %v1751 = vsel %vm506, %v1746, %v1750
        %v1752 = vrot.slane %v1606, 1
        %v1753 = vsel %vm506, %v1748, %v1752
        %v1754 = vrot.slane %v1607, 1
        %v1755 = vsel %vm506, %v1750, %v1754
        %v1756 = vrot.slane %v1608, 1
        %v1757 = vsel %vm506, %v1752, %v1756
        %v1758 = vrot.slane %v1609, 1
        %v1759 = vsel %vm506, %v1754, %v1758
        %v1760 = vrot.slane %v1610, 1
        %v1761 = vsel %vm506, %v1756, %v1760
        %v1762 = vrot.slane %v1611, 1
        %v1763 = vsel %vm506, %v1758, %v1762
        %v1764 = vrot.slane %v1612, 1
        %v1765 = vsel %vm506, %v1760, %v1764
        %v1766 = vrot.slane %v1613, 1
        %v1767 = vsel %vm506, %v1762, %v1766
        %v1768 = vrot.slane %v1614, 1
        %v1769 = vsel %vm506, %v1764, %v1768
        %v1770 = vrot.slane %v1615, 1
        %v1771 = vsel %vm506, %v1766, %v1770
        %v1772 = vrot.slane %v1616, 1
        %v1773 = vsel %vm506, %v1768, %v1772
        %v1774 = vrot.slane %v1617, 1
        %v1775 = vsel %vm506, %v1770, %v1774
        %v1776 = vrot.slane %v1618, 1
        %v1777 = vsel %vm506, %v1772, %v1776
        %v1778 = vrot.slane %v1619, 1
        %v1779 = vsel %vm506, %v1774, %v1778
        %v1780 = vrot.slane %v1620, 1
        %v1781 = vsel %vm506, %v1776, %v1780
        %v1782 = vrot.slane %v1621, 1
        %v1783 = vsel %vm506, %v1778, %v1782
        %v1784 = vrot.slane %v1622, 1
        %v1785 = vsel %vm506, %v1780, %v1784
        %v1786 = vrot.slane %v1623, 1
        %v1787 = vsel %vm506, %v1782, %v1786
        %v1788 = vrot.slane %v1624, 1
        %v1789 = vsel %vm506, %v1784, %v1788
        %v1790 = vrot.slane %v1625, 1
        %v1791 = vsel %vm506, %v1786, %v1790
        %v1792 = vrot.slane %v1626, 1
        %v1793 = vsel %vm506, %v1788, %v1792
        %v1794 = vrot.slane %v1627, 1
        %v1795 = vsel %vm506, %v1790, %v1794
        %v1796 = vrot.slane %v1628, 1
        %v1797 = vsel %vm506, %v1792, %v1796
        %v1798 = vrot.slane %v1629, 1
        %v1799 = vsel %vm506, %v1794, %v1798
        %v1800 = vrot.slane %v1630, 1
        %v1801 = vsel %vm506, %v1796, %v1800
        %v1802 = vrot.slane %v1631, 1
        %v1803 = vsel %vm506, %v1798, %v1802
        %v1804 = vrot.slane %v1632, 1
        %v1805 = vsel %vm506, %v1800, %v1804
        %v1806 = vrot.slane %v1633, 1
        %v1807 = vsel %vm506, %v1802, %v1806
        %v1808 = vrot.slane %v1634, 1
        %v1809 = vsel %vm506, %v1804, %v1808
        %v1810 = vrot.slane %v1635, 1
        %v1811 = vsel %vm506, %v1806, %v1810
        %v1812 = vrot.slane %v1636, 1
        %v1813 = vsel %vm506, %v1808, %v1812
        %v1814 = vrot.slane %v1637, 1
        %v1815 = vsel %vm506, %v1810, %v1814
        %v1816 = vrot.slane %v1638, 1
        %v1817 = vsel %vm506, %v1812, %v1816
        %v1818 = vrot.slane %v1639, 1
        %v1819 = vsel %vm506, %v1814, %v1818
        %v1820 = vrot.slane %v1640, 1
        %v1821 = vsel %vm506, %v1816, %v1820
        %v1822 = vrot.slane %v1641, 1
        %v1823 = vsel %vm506, %v1818, %v1822
        %v1824 = vrot.slane %v1642, 1
        %v1825 = vsel %vm506, %v1820, %v1824
        %v1826 = vrot.slane %v1643, 1
        %v1827 = vsel %vm506, %v1822, %v1826
        %v1828 = vrot.slane %v1644, 1
        %v1829 = vsel %vm506, %v1824, %v1828
        %v1830 = vrot.slane %v1645, 1
        %v1831 = vsel %vm506, %v1826, %v1830
        %v1832 = vrot.slane %v1646, 1
        %v1833 = vsel %vm506, %v1828, %v1832
        %v1834 = vrot.slane %v1647, 1
        %v1835 = vsel %vm506, %v1830, %v1834
        %v1836 = vrot.slane %v1648, 1
        %v1837 = vsel %vm506, %v1832, %v1836
        %v1838 = vrot.slane %v1649, 1
        %v1839 = vsel %vm506, %v1834, %v1838
        %v1904 = vmax.f32 %v1586, %v1716
        %v1905 = vmax.f32 %v1587, %v1719
        %v1906 = vmax.f32 %v1588, %v1721
        %v1907 = vmax.f32 %v1589, %v1723
        %v1908 = vmax.f32 %v1590, %v1725
        %v1909 = vmax.f32 %v1591, %v1727
        %v1910 = vmax.f32 %v1592, %v1729
        %v1911 = vmax.f32 %v1593, %v1731
        %v1912 = vmax.f32 %v1594, %v1733
        %v1913 = vmax.f32 %v1595, %v1735
        %v1914 = vmax.f32 %v1596, %v1737
        %v1915 = vmax.f32 %v1597, %v1739
        %v1916 = vmax.f32 %v1598, %v1741
        %v1917 = vmax.f32 %v1599, %v1743
        %v1918 = vmax.f32 %v1600, %v1745
        %v1919 = vmax.f32 %v1601, %v1747
        %v1920 = vmax.f32 %v1602, %v1749
        %v1921 = vmax.f32 %v1603, %v1751
        %v1922 = vmax.f32 %v1604, %v1753
        %v1923 = vmax.f32 %v1605, %v1755
        %v1924 = vmax.f32 %v1606, %v1757
        %v1925 = vmax.f32 %v1607, %v1759
        %v1926 = vmax.f32 %v1608, %v1761
        %v1927 = vmax.f32 %v1609, %v1763
        %v1928 = vmax.f32 %v1610, %v1765
        %v1929 = vmax.f32 %v1611, %v1767
        %v1930 = vmax.f32 %v1612, %v1769
        %v1931 = vmax.f32 %v1613, %v1771
        %v1932 = vmax.f32 %v1614, %v1773
        %v1933 = vmax.f32 %v1615, %v1775
        %v1934 = vmax.f32 %v1616, %v1777
        %v1935 = vmax.f32 %v1617, %v1779
        %v1936 = vmax.f32 %v1618, %v1781
        %v1937 = vmax.f32 %v1619, %v1783
        %v1938 = vmax.f32 %v1620, %v1785
        %v1939 = vmax.f32 %v1621, %v1787
        %v1940 = vmax.f32 %v1622, %v1789
        %v1941 = vmax.f32 %v1623, %v1791
        %v1942 = vmax.f32 %v1624, %v1793
        %v1943 = vmax.f32 %v1625, %v1795
        %v1944 = vmax.f32 %v1626, %v1797
        %v1945 = vmax.f32 %v1627, %v1799
        %v1946 = vmax.f32 %v1628, %v1801
        %v1947 = vmax.f32 %v1629, %v1803
        %v1948 = vmax.f32 %v1630, %v1805
        %v1949 = vmax.f32 %v1631, %v1807
        %v1950 = vmax.f32 %v1632, %v1809
        %v1951 = vmax.f32 %v1633, %v1811
        %v1952 = vmax.f32 %v1634, %v1813
        %v1953 = vmax.f32 %v1635, %v1815
        %v1954 = vmax.f32 %v1636, %v1817
        %v1955 = vmax.f32 %v1637, %v1819
        %v1956 = vmax.f32 %v1638, %v1821
        %v1957 = vmax.f32 %v1639, %v1823
        %v1958 = vmax.f32 %v1640, %v1825
        %v1959 = vmax.f32 %v1641, %v1827
        %v1960 = vmax.f32 %v1642, %v1829
        %v1961 = vmax.f32 %v1643, %v1831
        %v1962 = vmax.f32 %v1644, %v1833
        %v1963 = vmax.f32 %v1645, %v1835
        %v1964 = vmax.f32 %v1646, %v1837
        %v1965 = vmax.f32 %v1647, %v1839
        %v1966 = vmax.f32 %v1648, %v1836
        %v1967 = vmax.f32 %v1649, %v1838
        %2032 = vrot.lane.b32.xlu0 %v1904, 127
        %v2033 = vpop.permute.xlu0 %2032
        %2034 = vrot.lane.b32.xlu0 %v1905, 127
        %v2035 = vpop.permute.xlu0 %2034
        %2036 = vrot.lane.b32.xlu0 %v1906, 127
        %v2037 = vpop.permute.xlu0 %2036
        %2038 = vrot.lane.b32.xlu0 %v1907, 127
        %v2039 = vpop.permute.xlu0 %2038
        %2040 = vrot.lane.b32.xlu0 %v1908, 127
        %v2041 = vpop.permute.xlu0 %2040
        %2042 = vrot.lane.b32.xlu0 %v1909, 127
        %v2043 = vpop.permute.xlu0 %2042
        %2044 = vrot.lane.b32.xlu0 %v1910, 127
        %v2045 = vpop.permute.xlu0 %2044
        %2046 = vrot.lane.b32.xlu0 %v1911, 127
        %v2047 = vpop.permute.xlu0 %2046
        %2048 = vrot.lane.b32.xlu0 %v1912, 127
        %v2049 = vpop.permute.xlu0 %2048
        %2050 = vrot.lane.b32.xlu0 %v1913, 127
        %v2051 = vpop.permute.xlu0 %2050
        %2052 = vrot.lane.b32.xlu0 %v1914, 127
        %v2053 = vpop.permute.xlu0 %2052
        %2054 = vrot.lane.b32.xlu0 %v1915, 127
        %v2055 = vpop.permute.xlu0 %2054
        %2056 = vrot.lane.b32.xlu0 %v1916, 127
        %v2057 = vpop.permute.xlu0 %2056
        %2058 = vrot.lane.b32.xlu0 %v1917, 127
        %v2059 = vpop.permute.xlu0 %2058
        %2060 = vrot.lane.b32.xlu0 %v1918, 127
        %v2061 = vpop.permute.xlu0 %2060
        %2062 = vrot.lane.b32.xlu0 %v1919, 127
        %v2063 = vpop.permute.xlu0 %2062
        %2064 = vrot.lane.b32.xlu0 %v1920, 127
        %v2065 = vpop.permute.xlu0 %2064
        %2066 = vrot.lane.b32.xlu0 %v1921, 127
        %v2067 = vpop.permute.xlu0 %2066
        %2068 = vrot.lane.b32.xlu0 %v1922, 127
        %v2069 = vpop.permute.xlu0 %2068
        %2070 = vrot.lane.b32.xlu0 %v1923, 127
        %v2071 = vpop.permute.xlu0 %2070
        %2072 = vrot.lane.b32.xlu0 %v1924, 127
        %v2073 = vpop.permute.xlu0 %2072
        %2074 = vrot.lane.b32.xlu0 %v1925, 127
        %v2075 = vpop.permute.xlu0 %2074
        %2076 = vrot.lane.b32.xlu0 %v1926, 127
        %v2077 = vpop.permute.xlu0 %2076
        %2078 = vrot.lane.b32.xlu0 %v1927, 127
        %v2079 = vpop.permute.xlu0 %2078
        %2080 = vrot.lane.b32.xlu0 %v1928, 127
        %v2081 = vpop.permute.xlu0 %2080
        %2082 = vrot.lane.b32.xlu0 %v1929, 127
        %v2083 = vpop.permute.xlu0 %2082
        %2084 = vrot.lane.b32.xlu0 %v1930, 127
        %v2085 = vpop.permute.xlu0 %2084
        %2086 = vrot.lane.b32.xlu0 %v1931, 127
        %v2087 = vpop.permute.xlu0 %2086
        %2088 = vrot.lane.b32.xlu0 %v1932, 127
        %v2089 = vpop.permute.xlu0 %2088
        %2090 = vrot.lane.b32.xlu0 %v1933, 127
        %v2091 = vpop.permute.xlu0 %2090
        %2092 = vrot.lane.b32.xlu0 %v1934, 127
        %v2093 = vpop.permute.xlu0 %2092
        %2094 = vrot.lane.b32.xlu0 %v1935, 127
        %v2095 = vpop.permute.xlu0 %2094
        %2096 = vrot.lane.b32.xlu0 %v1936, 127
        %v2097 = vpop.permute.xlu0 %2096
        %2098 = vrot.lane.b32.xlu0 %v1937, 127
        %v2099 = vpop.permute.xlu0 %2098
        %2100 = vrot.lane.b32.xlu0 %v1938, 127
        %v2101 = vpop.permute.xlu0 %2100
        %2102 = vrot.lane.b32.xlu0 %v1939, 127
        %v2103 = vpop.permute.xlu0 %2102
        %2104 = vrot.lane.b32.xlu0 %v1940, 127
        %v2105 = vpop.permute.xlu0 %2104
        %2106 = vrot.lane.b32.xlu0 %v1941, 127
        %v2107 = vpop.permute.xlu0 %2106
        %2108 = vrot.lane.b32.xlu0 %v1942, 127
        %v2109 = vpop.permute.xlu0 %2108
        %2110 = vrot.lane.b32.xlu0 %v1943, 127
        %v2111 = vpop.permute.xlu0 %2110
        %2112 = vrot.lane.b32.xlu0 %v1944, 127
        %v2113 = vpop.permute.xlu0 %2112
        %2114 = vrot.lane.b32.xlu0 %v1945, 127
        %v2115 = vpop.permute.xlu0 %2114
        %2116 = vrot.lane.b32.xlu0 %v1946, 127
        %v2117 = vpop.permute.xlu0 %2116
        %2118 = vrot.lane.b32.xlu0 %v1947, 127
        %v2119 = vpop.permute.xlu0 %2118
        %2120 = vrot.lane.b32.xlu0 %v1948, 127
        %v2121 = vpop.permute.xlu0 %2120
        %2122 = vrot.lane.b32.xlu0 %v1949, 127
        %v2123 = vpop.permute.xlu0 %2122
        %2124 = vrot.lane.b32.xlu0 %v1950, 127
        %v2125 = vpop.permute.xlu0 %2124
        %2126 = vrot.lane.b32.xlu0 %v1951, 127
        %v2127 = vpop.permute.xlu0 %2126
        %2128 = vrot.lane.b32.xlu0 %v1952, 127
        %v2129 = vpop.permute.xlu0 %2128
        %2130 = vrot.lane.b32.xlu0 %v1953, 127
        %v2131 = vpop.permute.xlu0 %2130
        %2132 = vrot.lane.b32.xlu0 %v1954, 127
        %v2133 = vpop.permute.xlu0 %2132
        %2134 = vrot.lane.b32.xlu0 %v1955, 127
        %v2135 = vpop.permute.xlu0 %2134
        %2136 = vrot.lane.b32.xlu0 %v1956, 127
        %v2137 = vpop.permute.xlu0 %2136
        %2138 = vrot.lane.b32.xlu0 %v1957, 127
        %v2139 = vpop.permute.xlu0 %2138
        %2140 = vrot.lane.b32.xlu0 %v1958, 127
        %v2141 = vpop.permute.xlu0 %2140
        %2142 = vrot.lane.b32.xlu0 %v1959, 127
        %v2143 = vpop.permute.xlu0 %2142
        %2144 = vrot.lane.b32.xlu0 %v1960, 127
        %v2145 = vpop.permute.xlu0 %2144
        %2146 = vrot.lane.b32.xlu0 %v1961, 127
        %v2147 = vpop.permute.xlu0 %2146
        %2148 = vrot.lane.b32.xlu0 %v1962, 127
        %v2149 = vpop.permute.xlu0 %2148
        %2150 = vrot.lane.b32.xlu0 %v1963, 127
        %v2151 = vpop.permute.xlu0 %2150
        %2152 = vrot.lane.b32.xlu0 %v1964, 127
        %v2153 = vpop.permute.xlu0 %2152
        %2154 = vrot.lane.b32.xlu0 %v1965, 127
        %v2155 = vpop.permute.xlu0 %2154
        %2156 = vrot.lane.b32.xlu0 %v1966, 127
        %v2157 = vpop.permute.xlu0 %2156
        %2158 = vrot.lane.b32.xlu0 %v1967, 127
        %v2159 = vpop.permute.xlu0 %2158
        %vm2160 = vcmask 1039360
        %v2161 = vsel %vm2160, %v2033, %v2035
        %v2162 = vsel %vm2160, %v2037, %v2039
        %v2163 = vsel %vm2160, %v2041, %v2043
        %v2164 = vsel %vm2160, %v2045, %v2047
        %v2165 = vsel %vm2160, %v2049, %v2051
        %v2166 = vsel %vm2160, %v2053, %v2055
        %v2167 = vsel %vm2160, %v2057, %v2059
        %v2168 = vsel %vm2160, %v2061, %v2063
        %v2169 = vsel %vm2160, %v2065, %v2067
        %v2170 = vsel %vm2160, %v2069, %v2071
        %v2171 = vsel %vm2160, %v2073, %v2075
        %v2172 = vsel %vm2160, %v2077, %v2079
        %v2173 = vsel %vm2160, %v2081, %v2083
        %v2174 = vsel %vm2160, %v2085, %v2087
        %v2175 = vsel %vm2160, %v2089, %v2091
        %v2176 = vsel %vm2160, %v2093, %v2095
        %v2177 = vsel %vm2160, %v2097, %v2099
        %v2178 = vsel %vm2160, %v2101, %v2103
        %v2179 = vsel %vm2160, %v2105, %v2107
        %v2180 = vsel %vm2160, %v2109, %v2111
        %v2181 = vsel %vm2160, %v2113, %v2115
        %v2182 = vsel %vm2160, %v2117, %v2119
        %v2183 = vsel %vm2160, %v2121, %v2123
        %v2184 = vsel %vm2160, %v2125, %v2127
        %v2185 = vsel %vm2160, %v2129, %v2131
        %v2186 = vsel %vm2160, %v2133, %v2135
        %v2187 = vsel %vm2160, %v2137, %v2139
        %v2188 = vsel %vm2160, %v2141, %v2143
        %v2189 = vsel %vm2160, %v2145, %v2147
        %v2190 = vsel %vm2160, %v2149, %v2151
        %v2191 = vsel %vm2160, %v2153, %v2155
        %v2192 = vsel %vm2160, %v2157, %v2159
        %v2257 = vmax.f32 %v1904, %v2161
        %v2258 = vmax.f32 %v1905, %v2035
        %v2259 = vmax.f32 %v1906, %v2162
        %v2260 = vmax.f32 %v1907, %v2039
        %v2261 = vmax.f32 %v1908, %v2163
        %v2262 = vmax.f32 %v1909, %v2043
        %v2263 = vmax.f32 %v1910, %v2164
        %v2264 = vmax.f32 %v1911, %v2047
        %v2265 = vmax.f32 %v1912, %v2165
        %v2266 = vmax.f32 %v1913, %v2051
        %v2267 = vmax.f32 %v1914, %v2166
        %v2268 = vmax.f32 %v1915, %v2055
        %v2269 = vmax.f32 %v1916, %v2167
        %v2270 = vmax.f32 %v1917, %v2059
        %v2271 = vmax.f32 %v1918, %v2168
        %v2272 = vmax.f32 %v1919, %v2063
        %v2273 = vmax.f32 %v1920, %v2169
        %v2274 = vmax.f32 %v1921, %v2067
        %v2275 = vmax.f32 %v1922, %v2170
        %v2276 = vmax.f32 %v1923, %v2071
        %v2277 = vmax.f32 %v1924, %v2171
        %v2278 = vmax.f32 %v1925, %v2075
        %v2279 = vmax.f32 %v1926, %v2172
        %v2280 = vmax.f32 %v1927, %v2079
        %v2281 = vmax.f32 %v1928, %v2173
        %v2282 = vmax.f32 %v1929, %v2083
        %v2283 = vmax.f32 %v1930, %v2174
        %v2284 = vmax.f32 %v1931, %v2087
        %v2285 = vmax.f32 %v1932, %v2175
        %v2286 = vmax.f32 %v1933, %v2091
        %v2287 = vmax.f32 %v1934, %v2176
        %v2288 = vmax.f32 %v1935, %v2095
        %v2289 = vmax.f32 %v1936, %v2177
        %v2290 = vmax.f32 %v1937, %v2099
        %v2291 = vmax.f32 %v1938, %v2178
        %v2292 = vmax.f32 %v1939, %v2103
        %v2293 = vmax.f32 %v1940, %v2179
        %v2294 = vmax.f32 %v1941, %v2107
        %v2295 = vmax.f32 %v1942, %v2180
        %v2296 = vmax.f32 %v1943, %v2111
        %v2297 = vmax.f32 %v1944, %v2181
        %v2298 = vmax.f32 %v1945, %v2115
        %v2299 = vmax.f32 %v1946, %v2182
        %v2300 = vmax.f32 %v1947, %v2119
        %v2301 = vmax.f32 %v1948, %v2183
        %v2302 = vmax.f32 %v1949, %v2123
        %v2303 = vmax.f32 %v1950, %v2184
        %v2304 = vmax.f32 %v1951, %v2127
        %v2305 = vmax.f32 %v1952, %v2185
        %v2306 = vmax.f32 %v1953, %v2131
        %v2307 = vmax.f32 %v1954, %v2186
        %v2308 = vmax.f32 %v1955, %v2135
        %v2309 = vmax.f32 %v1956, %v2187
        %v2310 = vmax.f32 %v1957, %v2139
        %v2311 = vmax.f32 %v1958, %v2188
        %v2312 = vmax.f32 %v1959, %v2143
        %v2313 = vmax.f32 %v1960, %v2189
        %v2314 = vmax.f32 %v1961, %v2147
        %v2315 = vmax.f32 %v1962, %v2190
        %v2316 = vmax.f32 %v1963, %v2151
        %v2317 = vmax.f32 %v1964, %v2191
        %v2318 = vmax.f32 %v1965, %v2155
        %v2319 = vmax.f32 %v1966, %v2192
        %v2320 = vmax.f32 %v1967, %v2159
        %v2321 = vld [vmem:[%s3] sm:$0xff]
        %v2322 = vld [vmem:[%s3 + $0x8] sm:$0xff]
        %v2323 = vld [vmem:[%s3 + $0x10] sm:$0xff]
        %v2324 = vld [vmem:[%s3 + $0x18] sm:$0xff]
        %v2325 = vld [vmem:[%s3 + $0x20] sm:$0xff]
        %v2326 = vld [vmem:[%s3 + $0x28] sm:$0xff]
        %v2327 = vld [vmem:[%s3 + $0x30] sm:$0xff]
        %v2328 = vld [vmem:[%s3 + $0x38] sm:$0xff]
        %v2329 = vld [vmem:[%s3 + $0x40] sm:$0xff]
        %v2330 = vld [vmem:[%s3 + $0x48] sm:$0xff]
        %v2331 = vld [vmem:[%s3 + $0x50] sm:$0xff]
        %v2332 = vld [vmem:[%s3 + $0x58] sm:$0xff]
        %v2333 = vld [vmem:[%s3 + $0x60] sm:$0xff]
        %v2334 = vld [vmem:[%s3 + $0x68] sm:$0xff]
        %v2335 = vld [vmem:[%s3 + $0x70] sm:$0xff]
        %v2336 = vld [vmem:[%s3 + $0x78] sm:$0xff]
        %v2337 = vpack.c.bf16 %v2259, %v2257
        %v2338 = vpack.c.bf16 %v2260, %v2258
        %v2339 = vpack.c.bf16 %v2263, %v2261
        %v2340 = vpack.c.bf16 %v2264, %v2262
        %v2341 = vpack.c.bf16 %v2267, %v2265
        %v2342 = vpack.c.bf16 %v2268, %v2266
        %v2343 = vpack.c.bf16 %v2271, %v2269
        %v2344 = vpack.c.bf16 %v2272, %v2270
        %v2345 = vpack.c.bf16 %v2275, %v2273
        %v2346 = vpack.c.bf16 %v2276, %v2274
        %v2347 = vpack.c.bf16 %v2279, %v2277
        %v2348 = vpack.c.bf16 %v2280, %v2278
        %v2349 = vpack.c.bf16 %v2283, %v2281
        %v2350 = vpack.c.bf16 %v2284, %v2282
        %v2351 = vpack.c.bf16 %v2287, %v2285
        %v2352 = vpack.c.bf16 %v2288, %v2286
        %v2353 = vpack.c.bf16 %v2291, %v2289
        %v2354 = vpack.c.bf16 %v2292, %v2290
        %v2355 = vpack.c.bf16 %v2295, %v2293
        %v2356 = vpack.c.bf16 %v2296, %v2294
        %v2357 = vpack.c.bf16 %v2299, %v2297
        %v2358 = vpack.c.bf16 %v2300, %v2298
        %v2359 = vpack.c.bf16 %v2303, %v2301
        %v2360 = vpack.c.bf16 %v2304, %v2302
        %v2361 = vpack.c.bf16 %v2307, %v2305
        %v2362 = vpack.c.bf16 %v2308, %v2306
        %v2363 = vpack.c.bf16 %v2311, %v2309
        %v2364 = vpack.c.bf16 %v2312, %v2310
        %v2365 = vpack.c.bf16 %v2315, %v2313
        %v2366 = vpack.c.bf16 %v2316, %v2314
        %v2367 = vpack.c.bf16 %v2319, %v2317
        %v2368 = vpack.c.bf16 %v2320, %v2318
        %v2385 = vunpack.c.l.b16 %v2321
        %v2386 = vunpack.c.h.b16 %v2321
        %v2387 = vunpack.c.l.b16 %v2322
        %v2388 = vunpack.c.h.b16 %v2322
        %v2389 = vunpack.c.l.b16 %v2323
        %v2390 = vunpack.c.h.b16 %v2323
        %v2391 = vunpack.c.l.b16 %v2324
        %v2392 = vunpack.c.h.b16 %v2324
        %v2393 = vunpack.c.l.b16 %v2325
        %v2394 = vunpack.c.h.b16 %v2325
        %v2395 = vunpack.c.l.b16 %v2326
        %v2396 = vunpack.c.h.b16 %v2326
        %v2397 = vunpack.c.l.b16 %v2327
        %v2398 = vunpack.c.h.b16 %v2327
        %v2399 = vunpack.c.l.b16 %v2328
        %v2400 = vunpack.c.h.b16 %v2328
        %v2401 = vunpack.c.l.b16 %v2329
        %v2402 = vunpack.c.h.b16 %v2329
        %v2403 = vunpack.c.l.b16 %v2330
        %v2404 = vunpack.c.h.b16 %v2330
        %v2405 = vunpack.c.l.b16 %v2331
        %v2406 = vunpack.c.h.b16 %v2331
        %v2407 = vunpack.c.l.b16 %v2332
        %v2408 = vunpack.c.h.b16 %v2332
        %v2409 = vunpack.c.l.b16 %v2333
        %v2410 = vunpack.c.h.b16 %v2333
        %v2411 = vunpack.c.l.b16 %v2334
        %v2412 = vunpack.c.h.b16 %v2334
        %v2413 = vunpack.c.l.b16 %v2335
        %v2414 = vunpack.c.h.b16 %v2335
        %v2415 = vunpack.c.l.b16 %v2336
        %v2416 = vunpack.c.h.b16 %v2336
        %v2417 = vpack.c.b16 %v2387, %v2385
        %v2418 = vpack.c.b16 %v2388, %v2386
        %v2419 = vpack.c.b16 %v2391, %v2389
        %v2420 = vpack.c.b16 %v2392, %v2390
        %v2421 = vpack.c.b16 %v2395, %v2393
        %v2422 = vpack.c.b16 %v2396, %v2394
        %v2423 = vpack.c.b16 %v2399, %v2397
        %v2424 = vpack.c.b16 %v2400, %v2398
        %v2425 = vpack.c.b16 %v2403, %v2401
        %v2426 = vpack.c.b16 %v2404, %v2402
        %v2427 = vpack.c.b16 %v2407, %v2405
        %v2428 = vpack.c.b16 %v2408, %v2406
        %v2429 = vpack.c.b16 %v2411, %v2409
        %v2430 = vpack.c.b16 %v2412, %v2410
        %v2431 = vpack.c.b16 %v2415, %v2413
        %v2432 = vpack.c.b16 %v2416, %v2414
        %vm2441 = vcmask 1006592
        %v2443 = vsel %vm2441, %v2418, 0
        %v2446 = vsel %vm2441, %v2420, 0
        %v2449 = vsel %vm2441, %v2422, 0
        %v2452 = vsel %vm2441, %v2424, 0
        %v2455 = vsel %vm2441, %v2426, 0
        %v2458 = vsel %vm2441, %v2428, 0
        %v2461 = vsel %vm2441, %v2430, 0
        %v2464 = vsel %vm2441, %v2432, 0
        %v2466 = vsel %vm826, 4294967295, 65535
        %v2467 = vsel %vm666, %v2466, 0
        %v2469 = vand.u32 %v2367, %v2467
        %v2472 = vand.u32 %v2368, %v2467
        %2474 = vmatprep.subr.bf16.mxu0 %v2338
        %2475 = vmatpush1.bf16.msra.mxu0 %v2337
        %2476 = vmatprep.subr.bf16.mxu0 %v2340
        %2477 = vmatpush1.bf16.msra.mxu0 %v2339
        %2478 = vmatprep.subr.bf16.mxu0 %v2342
        %2479 = vmatpush1.bf16.msra.mxu0 %v2341
        %2480 = vmatprep.subr.bf16.mxu0 %v2344
        %2481 = vmatpush1.bf16.msra.mxu0 %v2343
        %2482 = vmatprep.subr.bf16.mxu0 %v2346
        %2483 = vmatpush1.bf16.msra.mxu0 %v2345
        %2484 = vmatprep.subr.bf16.mxu0 %v2348
        %2485 = vmatpush1.bf16.msra.mxu0 %v2347
        %2486 = vmatprep.subr.bf16.mxu0 %v2350
        %2487 = vmatpush1.bf16.msra.mxu0 %v2349
        %2488 = vmatprep.subr.bf16.mxu0 %v2352
        %2489 = vmatpush1.bf16.msra.mxu0 %v2351
        %2490 = vmatprep.subr.bf16.mxu0 %v2354
        %2491 = vmatpush1.bf16.msra.mxu0 %v2353
        %2492 = vmatprep.subr.bf16.mxu0 %v2356
        %2493 = vmatpush1.bf16.msra.mxu0 %v2355
        %2494 = vmatprep.subr.bf16.mxu0 %v2358
        %2495 = vmatpush1.bf16.msra.mxu0 %v2357
        %2496 = vmatprep.subr.bf16.mxu0 %v2360
        %2497 = vmatpush1.bf16.msra.mxu0 %v2359
        %2498 = vmatprep.subr.bf16.mxu0 %v2362
        %2499 = vmatpush1.bf16.msra.mxu0 %v2361
        %2500 = vmatprep.subr.bf16.mxu0 %v2364
        %2501 = vmatpush1.bf16.msra.mxu0 %v2363
        %2502 = vmatprep.subr.bf16.mxu0 %v2366
        %2503 = vmatpush1.bf16.msra.mxu0 %v2365
        %2504 = vmatprep.subr.bf16.mxu0 %v2472
        %2505 = vmatpush1.bf16.msra.mxu0 %v2469
        %2506 = vmatprep.mubr.bf16.mxu0 %v2443
        %2507 = vmatmul.mubr.bf16.gmra.mrb[0].mxu0 %v2417
        %v2508 = vpop.f32.mrb[0].mxu0
        %v2509 = vadd.f32 0.0, %v2508
        %v2510 = vpop.f32.mrb[0].mxu0
        %v2511 = vadd.f32 0.0, %v2510
        %v2512 = vpop.f32.mrb[0].mxu0
        %v2513 = vadd.f32 0.0, %v2512
        %v2514 = vpop.f32.mrb[0].mxu0
        %v2515 = vadd.f32 0.0, %v2514
        %2516 = vmatprep.mubr.bf16.mxu0 %v2446
        %2517 = vmatmul.mubr.bf16.gmra.mrb[0].mxu0 %v2419
        %v2518 = vpop.f32.mrb[0].mxu0
        %v2519 = vadd.f32 0.0, %v2518
        %v2520 = vpop.f32.mrb[0].mxu0
        %v2521 = vadd.f32 0.0, %v2520
        %v2522 = vpop.f32.mrb[0].mxu0
        %v2523 = vadd.f32 0.0, %v2522
        %v2524 = vpop.f32.mrb[0].mxu0
        %v2525 = vadd.f32 0.0, %v2524
        %2526 = vmatprep.mubr.bf16.mxu0 %v2449
        %2527 = vmatmul.mubr.bf16.gmra.mrb[0].mxu0 %v2421
        %v2528 = vpop.f32.mrb[0].mxu0
        %v2529 = vadd.f32 0.0, %v2528
        %v2530 = vpop.f32.mrb[0].mxu0
        %v2531 = vadd.f32 0.0, %v2530
        %v2532 = vpop.f32.mrb[0].mxu0
        %v2533 = vadd.f32 0.0, %v2532
        %v2534 = vpop.f32.mrb[0].mxu0
        %v2535 = vadd.f32 0.0, %v2534
        %2536 = vmatprep.mubr.bf16.mxu0 %v2452
        %2537 = vmatmul.mubr.bf16.gmra.mrb[0].mxu0 %v2423
        %v2538 = vpop.f32.mrb[0].mxu0
        %v2539 = vadd.f32 0.0, %v2538
        %v2540 = vpop.f32.mrb[0].mxu0
        %v2541 = vadd.f32 0.0, %v2540
        %v2542 = vpop.f32.mrb[0].mxu0
        %v2543 = vadd.f32 0.0, %v2542
        %v2544 = vpop.f32.mrb[0].mxu0
        %v2545 = vadd.f32 0.0, %v2544
        %2546 = vmatprep.mubr.bf16.mxu0 %v2455
        %2547 = vmatmul.mubr.bf16.gmra.mrb[0].mxu0 %v2425
        %v2548 = vpop.f32.mrb[0].mxu0
        %v2549 = vadd.f32 0.0, %v2548
        %v2550 = vpop.f32.mrb[0].mxu0
        %v2551 = vadd.f32 0.0, %v2550
        %v2552 = vpop.f32.mrb[0].mxu0
        %v2553 = vadd.f32 0.0, %v2552
        %v2554 = vpop.f32.mrb[0].mxu0
        %v2555 = vadd.f32 0.0, %v2554
        %2556 = vmatprep.mubr.bf16.mxu0 %v2458
        %2557 = vmatmul.mubr.bf16.gmra.mrb[0].mxu0 %v2427
        %v2558 = vpop.f32.mrb[0].mxu0
        %v2559 = vadd.f32 0.0, %v2558
        %v2560 = vpop.f32.mrb[0].mxu0
        %v2561 = vadd.f32 0.0, %v2560
        %v2562 = vpop.f32.mrb[0].mxu0
        %v2563 = vadd.f32 0.0, %v2562
        %v2564 = vpop.f32.mrb[0].mxu0
        %v2565 = vadd.f32 0.0, %v2564
        %2566 = vmatprep.mubr.bf16.mxu0 %v2461
        %2567 = vmatmul.mubr.bf16.gmra.mrb[0].mxu0 %v2429
        %v2568 = vpop.f32.mrb[0].mxu0
        %v2569 = vadd.f32 0.0, %v2568
        %v2570 = vpop.f32.mrb[0].mxu0
        %v2571 = vadd.f32 0.0, %v2570
        %v2572 = vpop.f32.mrb[0].mxu0
        %v2573 = vadd.f32 0.0, %v2572
        %v2574 = vpop.f32.mrb[0].mxu0
        %v2575 = vadd.f32 0.0, %v2574
        %2576 = vmatprep.mubr.bf16.mxu0 %v2464
        %2577 = vmatmul.mubr.bf16.gmra.mrb[0].mxu0 %v2431
        %v2578 = vpop.f32.mrb[0].mxu0
        %v2579 = vadd.f32 0.0, %v2578
        %v2580 = vpop.f32.mrb[0].mxu0
        %v2581 = vadd.f32 0.0, %v2580
        %v2582 = vpop.f32.mrb[0].mxu0
        %v2583 = vadd.f32 0.0, %v2582
        %v2584 = vpop.f32.mrb[0].mxu0
        %v2585 = vadd.f32 0.0, %v2584
        %2586 = vdwg.mxu0
        %v2619 = vrot.slane %v2509, 1
        %v2620 = vrot.slane %v2513, 1
        %v2621 = vsel %vm506, %v2619, %v2620
        %v2622 = vrot.slane %v2511, 1
        %v2623 = vrot.slane %v2515, 1
        %v2624 = vsel %vm506, %v2622, %v2623
        %v2625 = vrot.slane %v2519, 1
        %v2626 = vsel %vm506, %v2620, %v2625
        %v2627 = vrot.slane %v2521, 1
        %v2628 = vsel %vm506, %v2623, %v2627
        %v2629 = vrot.slane %v2523, 1
        %v2630 = vsel %vm506, %v2625, %v2629
        %v2631 = vrot.slane %v2525, 1
        %v2632 = vsel %vm506, %v2627, %v2631
        %v2633 = vrot.slane %v2529, 1
        %v2634 = vsel %vm506, %v2629, %v2633
        %v2635 = vrot.slane %v2531, 1
        %v2636 = vsel %vm506, %v2631, %v2635
        %v2637 = vrot.slane %v2533, 1
        %v2638 = vsel %vm506, %v2633, %v2637
        %v2639 = vrot.slane %v2535, 1
        %v2640 = vsel %vm506, %v2635, %v2639
        %v2641 = vrot.slane %v2539, 1
        %v2642 = vsel %vm506, %v2637, %v2641
        %v2643 = vrot.slane %v2541, 1
        %v2644 = vsel %vm506, %v2639, %v2643
        %v2645 = vrot.slane %v2543, 1
        %v2646 = vsel %vm506, %v2641, %v2645
        %v2647 = vrot.slane %v2545, 1
        %v2648 = vsel %vm506, %v2643, %v2647
        %v2649 = vrot.slane %v2549, 1
        %v2650 = vsel %vm506, %v2645, %v2649
        %v2651 = vrot.slane %v2551, 1
        %v2652 = vsel %vm506, %v2647, %v2651
        %v2653 = vrot.slane %v2553, 1
        %v2654 = vsel %vm506, %v2649, %v2653
        %v2655 = vrot.slane %v2555, 1
        %v2656 = vsel %vm506, %v2651, %v2655
        %v2657 = vrot.slane %v2559, 1
        %v2658 = vsel %vm506, %v2653, %v2657
        %v2659 = vrot.slane %v2561, 1
        %v2660 = vsel %vm506, %v2655, %v2659
        %v2661 = vrot.slane %v2563, 1
        %v2662 = vsel %vm506, %v2657, %v2661
        %v2663 = vrot.slane %v2565, 1
        %v2664 = vsel %vm506, %v2659, %v2663
        %v2665 = vrot.slane %v2569, 1
        %v2666 = vsel %vm506, %v2661, %v2665
        %v2667 = vrot.slane %v2571, 1
        %v2668 = vsel %vm506, %v2663, %v2667
        %v2669 = vrot.slane %v2573, 1
        %v2670 = vsel %vm506, %v2665, %v2669
        %v2671 = vrot.slane %v2575, 1
        %v2672 = vsel %vm506, %v2667, %v2671
        %v2673 = vrot.slane %v2579, 1
        %v2674 = vsel %vm506, %v2669, %v2673
        %v2675 = vrot.slane %v2581, 1
        %v2676 = vsel %vm506, %v2671, %v2675
        %v2677 = vrot.slane %v2583, 1
        %v2678 = vsel %vm506, %v2673, %v2677
        %v2679 = vrot.slane %v2585, 1
        %v2680 = vsel %vm506, %v2675, %v2679
        %2681 = vrot.lane.b32.xlu0 %v2621, 39
        %v2682 = vpop.permute.xlu0 %2681
        %2683 = vrot.lane.b32.xlu0 %v2624, 39
        %v2684 = vpop.permute.xlu0 %2683
        %2685 = vrot.lane.b32.xlu0 %v2626, 39
        %v2686 = vpop.permute.xlu0 %2685
        %2687 = vrot.lane.b32.xlu0 %v2628, 39
        %v2688 = vpop.permute.xlu0 %2687
        %2689 = vrot.lane.b32.xlu0 %v2630, 39
        %v2690 = vpop.permute.xlu0 %2689
        %2691 = vrot.lane.b32.xlu0 %v2632, 39
        %v2692 = vpop.permute.xlu0 %2691
        %2693 = vrot.lane.b32.xlu0 %v2634, 39
        %v2694 = vpop.permute.xlu0 %2693
        %2695 = vrot.lane.b32.xlu0 %v2636, 39
        %v2696 = vpop.permute.xlu0 %2695
        %2697 = vrot.lane.b32.xlu0 %v2638, 39
        %v2698 = vpop.permute.xlu0 %2697
        %2699 = vrot.lane.b32.xlu0 %v2640, 39
        %v2700 = vpop.permute.xlu0 %2699
        %2701 = vrot.lane.b32.xlu0 %v2642, 39
        %v2702 = vpop.permute.xlu0 %2701
        %2703 = vrot.lane.b32.xlu0 %v2644, 39
        %v2704 = vpop.permute.xlu0 %2703
        %2705 = vrot.lane.b32.xlu0 %v2646, 39
        %v2706 = vpop.permute.xlu0 %2705
        %2707 = vrot.lane.b32.xlu0 %v2648, 39
        %v2708 = vpop.permute.xlu0 %2707
        %2709 = vrot.lane.b32.xlu0 %v2650, 39
        %v2710 = vpop.permute.xlu0 %2709
        %2711 = vrot.lane.b32.xlu0 %v2652, 39
        %v2712 = vpop.permute.xlu0 %2711
        %2713 = vrot.lane.b32.xlu0 %v2654, 39
        %v2714 = vpop.permute.xlu0 %2713
        %2715 = vrot.lane.b32.xlu0 %v2656, 39
        %v2716 = vpop.permute.xlu0 %2715
        %2717 = vrot.lane.b32.xlu0 %v2658, 39
        %v2718 = vpop.permute.xlu0 %2717
        %2719 = vrot.lane.b32.xlu0 %v2660, 39
        %v2720 = vpop.permute.xlu0 %2719
        %2721 = vrot.lane.b32.xlu0 %v2662, 39
        %v2722 = vpop.permute.xlu0 %2721
        %2723 = vrot.lane.b32.xlu0 %v2664, 39
        %v2724 = vpop.permute.xlu0 %2723
        %2725 = vrot.lane.b32.xlu0 %v2666, 39
        %v2726 = vpop.permute.xlu0 %2725
        %2727 = vrot.lane.b32.xlu0 %v2668, 39
        %v2728 = vpop.permute.xlu0 %2727
        %2729 = vrot.lane.b32.xlu0 %v2670, 39
        %v2730 = vpop.permute.xlu0 %2729
        %2731 = vrot.lane.b32.xlu0 %v2672, 39
        %v2732 = vpop.permute.xlu0 %2731
        %2733 = vrot.lane.b32.xlu0 %v2674, 39
        %v2734 = vpop.permute.xlu0 %2733
        %2735 = vrot.lane.b32.xlu0 %v2676, 39
        %v2736 = vpop.permute.xlu0 %2735
        %2737 = vrot.lane.b32.xlu0 %v2678, 39
        %v2738 = vpop.permute.xlu0 %2737
        %2739 = vrot.lane.b32.xlu0 %v2680, 39
        %v2740 = vpop.permute.xlu0 %2739
        %2741 = vrot.lane.b32.xlu0 %v2677, 39
        %v2742 = vpop.permute.xlu0 %2741
        %2743 = vrot.lane.b32.xlu0 %v2679, 39
        %v2744 = vpop.permute.xlu0 %2743
        %vm2745 = vcmask 318464
        %v2746 = vsel %vm2745, %v2682, %v2684
        %v2747 = vsel %vm2745, %v2686, %v2688
        %v2748 = vsel %vm2745, %v2690, %v2692
        %v2749 = vsel %vm2745, %v2694, %v2696
        %v2750 = vsel %vm2745, %v2698, %v2700
        %v2751 = vsel %vm2745, %v2702, %v2704
        %v2752 = vsel %vm2745, %v2706, %v2708
        %v2753 = vsel %vm2745, %v2710, %v2712
        %v2754 = vsel %vm2745, %v2714, %v2716
        %v2755 = vsel %vm2745, %v2718, %v2720
        %v2756 = vsel %vm2745, %v2722, %v2724
        %v2757 = vsel %vm2745, %v2726, %v2728
        %v2758 = vsel %vm2745, %v2730, %v2732
        %v2759 = vsel %vm2745, %v2734, %v2736
        %v2760 = vsel %vm2745, %v2738, %v2740
        %v2761 = vsel %vm2745, %v2742, %v2744
        %v2794 = vrot.slane %v2509, 2
        %v2795 = vrot.slane %v2513, 2
        %v2796 = vsel %vm666, %v2794, %v2795
        %v2797 = vrot.slane %v2511, 2
        %v2798 = vrot.slane %v2515, 2
        %v2799 = vsel %vm666, %v2797, %v2798
        %v2800 = vrot.slane %v2519, 2
        %v2801 = vsel %vm666, %v2795, %v2800
        %v2802 = vrot.slane %v2521, 2
        %v2803 = vsel %vm666, %v2798, %v2802
        %v2804 = vrot.slane %v2523, 2
        %v2805 = vsel %vm666, %v2800, %v2804
        %v2806 = vrot.slane %v2525, 2
        %v2807 = vsel %vm666, %v2802, %v2806
        %v2808 = vrot.slane %v2529, 2
        %v2809 = vsel %vm666, %v2804, %v2808
        %v2810 = vrot.slane %v2531, 2
        %v2811 = vsel %vm666, %v2806, %v2810
        %v2812 = vrot.slane %v2533, 2
        %v2813 = vsel %vm666, %v2808, %v2812
        %v2814 = vrot.slane %v2535, 2
        %v2815 = vsel %vm666, %v2810, %v2814
        %v2816 = vrot.slane %v2539, 2
        %v2817 = vsel %vm666, %v2812, %v2816
        %v2818 = vrot.slane %v2541, 2
        %v2819 = vsel %vm666, %v2814, %v2818
        %v2820 = vrot.slane %v2543, 2
        %v2821 = vsel %vm666, %v2816, %v2820
        %v2822 = vrot.slane %v2545, 2
        %v2823 = vsel %vm666, %v2818, %v2822
        %v2824 = vrot.slane %v2549, 2
        %v2825 = vsel %vm666, %v2820, %v2824
        %v2826 = vrot.slane %v2551, 2
        %v2827 = vsel %vm666, %v2822, %v2826
        %v2828 = vrot.slane %v2553, 2
        %v2829 = vsel %vm666, %v2824, %v2828
        %v2830 = vrot.slane %v2555, 2
        %v2831 = vsel %vm666, %v2826, %v2830
        %v2832 = vrot.slane %v2559, 2
        %v2833 = vsel %vm666, %v2828, %v2832
        %v2834 = vrot.slane %v2561, 2
        %v2835 = vsel %vm666, %v2830, %v2834
        %v2836 = vrot.slane %v2563, 2
        %v2837 = vsel %vm666, %v2832, %v2836
        %v2838 = vrot.slane %v2565, 2
        %v2839 = vsel %vm666, %v2834, %v2838
        %v2840 = vrot.slane %v2569, 2
        %v2841 = vsel %vm666, %v2836, %v2840
        %v2842 = vrot.slane %v2571, 2
        %v2843 = vsel %vm666, %v2838, %v2842
        %v2844 = vrot.slane %v2573, 2
        %v2845 = vsel %vm666, %v2840, %v2844
        %v2846 = vrot.slane %v2575, 2
        %v2847 = vsel %vm666, %v2842, %v2846
        %v2848 = vrot.slane %v2579, 2
        %v2849 = vsel %vm666, %v2844, %v2848
        %v2850 = vrot.slane %v2581, 2
        %v2851 = vsel %vm666, %v2846, %v2850
        %v2852 = vrot.slane %v2583, 2
        %v2853 = vsel %vm666, %v2848, %v2852
        %v2854 = vrot.slane %v2585, 2
        %v2855 = vsel %vm666, %v2850, %v2854
        %2856 = vrot.lane.b32.xlu0 %v2796, 78
        %v2857 = vpop.permute.xlu0 %2856
        %2858 = vrot.lane.b32.xlu0 %v2799, 78
        %v2859 = vpop.permute.xlu0 %2858
        %2860 = vrot.lane.b32.xlu0 %v2801, 78
        %v2861 = vpop.permute.xlu0 %2860
        %2862 = vrot.lane.b32.xlu0 %v2803, 78
        %v2863 = vpop.permute.xlu0 %2862
        %2864 = vrot.lane.b32.xlu0 %v2805, 78
        %v2865 = vpop.permute.xlu0 %2864
        %2866 = vrot.lane.b32.xlu0 %v2807, 78
        %v2867 = vpop.permute.xlu0 %2866
        %2868 = vrot.lane.b32.xlu0 %v2809, 78
        %v2869 = vpop.permute.xlu0 %2868
        %2870 = vrot.lane.b32.xlu0 %v2811, 78
        %v2871 = vpop.permute.xlu0 %2870
        %2872 = vrot.lane.b32.xlu0 %v2813, 78
        %v2873 = vpop.permute.xlu0 %2872
        %2874 = vrot.lane.b32.xlu0 %v2815, 78
        %v2875 = vpop.permute.xlu0 %2874
        %2876 = vrot.lane.b32.xlu0 %v2817, 78
        %v2877 = vpop.permute.xlu0 %2876
        %2878 = vrot.lane.b32.xlu0 %v2819, 78
        %v2879 = vpop.permute.xlu0 %2878
        %2880 = vrot.lane.b32.xlu0 %v2821, 78
        %v2881 = vpop.permute.xlu0 %2880
        %2882 = vrot.lane.b32.xlu0 %v2823, 78
        %v2883 = vpop.permute.xlu0 %2882
        %2884 = vrot.lane.b32.xlu0 %v2825, 78
        %v2885 = vpop.permute.xlu0 %2884
        %2886 = vrot.lane.b32.xlu0 %v2827, 78
        %v2887 = vpop.permute.xlu0 %2886
        %2888 = vrot.lane.b32.xlu0 %v2829, 78
        %v2889 = vpop.permute.xlu0 %2888
        %2890 = vrot.lane.b32.xlu0 %v2831, 78
        %v2891 = vpop.permute.xlu0 %2890
        %2892 = vrot.lane.b32.xlu0 %v2833, 78
        %v2893 = vpop.permute.xlu0 %2892
        %2894 = vrot.lane.b32.xlu0 %v2835, 78
        %v2895 = vpop.permute.xlu0 %2894
        %2896 = vrot.lane.b32.xlu0 %v2837, 78
        %v2897 = vpop.permute.xlu0 %2896
        %2898 = vrot.lane.b32.xlu0 %v2839, 78
        %v2899 = vpop.permute.xlu0 %2898
        %2900 = vrot.lane.b32.xlu0 %v2841, 78
        %v2901 = vpop.permute.xlu0 %2900
        %2902 = vrot.lane.b32.xlu0 %v2843, 78
        %v2903 = vpop.permute.xlu0 %2902
        %2904 = vrot.lane.b32.xlu0 %v2845, 78
        %v2905 = vpop.permute.xlu0 %2904
        %2906 = vrot.lane.b32.xlu0 %v2847, 78
        %v2907 = vpop.permute.xlu0 %2906
        %2908 = vrot.lane.b32.xlu0 %v2849, 78
        %v2909 = vpop.permute.xlu0 %2908
        %2910 = vrot.lane.b32.xlu0 %v2851, 78
        %v2911 = vpop.permute.xlu0 %2910
        %2912 = vrot.lane.b32.xlu0 %v2853, 78
        %v2913 = vpop.permute.xlu0 %2912
        %2914 = vrot.lane.b32.xlu0 %v2855, 78
        %v2915 = vpop.permute.xlu0 %2914
        %2916 = vrot.lane.b32.xlu0 %v2852, 78
        %v2917 = vpop.permute.xlu0 %2916
        %2918 = vrot.lane.b32.xlu0 %v2854, 78
        %v2919 = vpop.permute.xlu0 %2918
        %vm2920 = vcmask 637952
        %v2921 = vsel %vm2920, %v2857, %v2859
        %v2922 = vsel %vm2920, %v2861, %v2863
        %v2923 = vsel %vm2920, %v2865, %v2867
        %v2924 = vsel %vm2920, %v2869, %v2871
        %v2925 = vsel %vm2920, %v2873, %v2875
        %v2926 = vsel %vm2920, %v2877, %v2879
        %v2927 = vsel %vm2920, %v2881, %v2883
        %v2928 = vsel %vm2920, %v2885, %v2887
        %v2929 = vsel %vm2920, %v2889, %v2891
        %v2930 = vsel %vm2920, %v2893, %v2895
        %v2931 = vsel %vm2920, %v2897, %v2899
        %v2932 = vsel %vm2920, %v2901, %v2903
        %v2933 = vsel %vm2920, %v2905, %v2907
        %v2934 = vsel %vm2920, %v2909, %v2911
        %v2935 = vsel %vm2920, %v2913, %v2915
        %v2936 = vsel %vm2920, %v2917, %v2919
        %v2969 = vrot.slane %v2509, 3
        %v2970 = vrot.slane %v2513, 3
        %v2971 = vsel %vm826, %v2969, %v2970
        %v2972 = vrot.slane %v2511, 3
        %v2973 = vrot.slane %v2515, 3
        %v2974 = vsel %vm826, %v2972, %v2973
        %v2975 = vrot.slane %v2519, 3
        %v2976 = vsel %vm826, %v2970, %v2975
        %v2977 = vrot.slane %v2521, 3
        %v2978 = vsel %vm826, %v2973, %v2977
        %v2979 = vrot.slane %v2523, 3
        %v2980 = vsel %vm826, %v2975, %v2979
        %v2981 = vrot.slane %v2525, 3
        %v2982 = vsel %vm826, %v2977, %v2981
        %v2983 = vrot.slane %v2529, 3
        %v2984 = vsel %vm826, %v2979, %v2983
        %v2985 = vrot.slane %v2531, 3
        %v2986 = vsel %vm826, %v2981, %v2985
        %v2987 = vrot.slane %v2533, 3
        %v2988 = vsel %vm826, %v2983, %v2987
        %v2989 = vrot.slane %v2535, 3
        %v2990 = vsel %vm826, %v2985, %v2989
        %v2991 = vrot.slane %v2539, 3
        %v2992 = vsel %vm826, %v2987, %v2991
        %v2993 = vrot.slane %v2541, 3
        %v2994 = vsel %vm826, %v2989, %v2993
        %v2995 = vrot.slane %v2543, 3
        %v2996 = vsel %vm826, %v2991, %v2995
        %v2997 = vrot.slane %v2545, 3
        %v2998 = vsel %vm826, %v2993, %v2997
        %v2999 = vrot.slane %v2549, 3
        %v3000 = vsel %vm826, %v2995, %v2999
        %v3001 = vrot.slane %v2551, 3
        %v3002 = vsel %vm826, %v2997, %v3001
        %v3003 = vrot.slane %v2553, 3
        %v3004 = vsel %vm826, %v2999, %v3003
        %v3005 = vrot.slane %v2555, 3
        %v3006 = vsel %vm826, %v3001, %v3005
        %v3007 = vrot.slane %v2559, 3
        %v3008 = vsel %vm826, %v3003, %v3007
        %v3009 = vrot.slane %v2561, 3
        %v3010 = vsel %vm826, %v3005, %v3009
        %v3011 = vrot.slane %v2563, 3
        %v3012 = vsel %vm826, %v3007, %v3011
        %v3013 = vrot.slane %v2565, 3
        %v3014 = vsel %vm826, %v3009, %v3013
        %v3015 = vrot.slane %v2569, 3
        %v3016 = vsel %vm826, %v3011, %v3015
        %v3017 = vrot.slane %v2571, 3
        %v3018 = vsel %vm826, %v3013, %v3017
        %v3019 = vrot.slane %v2573, 3
        %v3020 = vsel %vm826, %v3015, %v3019
        %v3021 = vrot.slane %v2575, 3
        %v3022 = vsel %vm826, %v3017, %v3021
        %v3023 = vrot.slane %v2579, 3
        %v3024 = vsel %vm826, %v3019, %v3023
        %v3025 = vrot.slane %v2581, 3
        %v3026 = vsel %vm826, %v3021, %v3025
        %v3027 = vrot.slane %v2583, 3
        %v3028 = vsel %vm826, %v3023, %v3027
        %v3029 = vrot.slane %v2585, 3
        %v3030 = vsel %vm826, %v3025, %v3029
        %3031 = vrot.lane.b32.xlu0 %v2971, 117
        %v3032 = vpop.permute.xlu0 %3031
        %3033 = vrot.lane.b32.xlu0 %v2974, 117
        %v3034 = vpop.permute.xlu0 %3033
        %3035 = vrot.lane.b32.xlu0 %v2976, 117
        %v3036 = vpop.permute.xlu0 %3035
        %3037 = vrot.lane.b32.xlu0 %v2978, 117
        %v3038 = vpop.permute.xlu0 %3037
        %3039 = vrot.lane.b32.xlu0 %v2980, 117
        %v3040 = vpop.permute.xlu0 %3039
        %3041 = vrot.lane.b32.xlu0 %v2982, 117
        %v3042 = vpop.permute.xlu0 %3041
        %3043 = vrot.lane.b32.xlu0 %v2984, 117
        %v3044 = vpop.permute.xlu0 %3043
        %3045 = vrot.lane.b32.xlu0 %v2986, 117
        %v3046 = vpop.permute.xlu0 %3045
        %3047 = vrot.lane.b32.xlu0 %v2988, 117
        %v3048 = vpop.permute.xlu0 %3047
        %3049 = vrot.lane.b32.xlu0 %v2990, 117
        %v3050 = vpop.permute.xlu0 %3049
        %3051 = vrot.lane.b32.xlu0 %v2992, 117
        %v3052 = vpop.permute.xlu0 %3051
        %3053 = vrot.lane.b32.xlu0 %v2994, 117
        %v3054 = vpop.permute.xlu0 %3053
        %3055 = vrot.lane.b32.xlu0 %v2996, 117
        %v3056 = vpop.permute.xlu0 %3055
        %3057 = vrot.lane.b32.xlu0 %v2998, 117
        %v3058 = vpop.permute.xlu0 %3057
        %3059 = vrot.lane.b32.xlu0 %v3000, 117
        %v3060 = vpop.permute.xlu0 %3059
        %3061 = vrot.lane.b32.xlu0 %v3002, 117
        %v3062 = vpop.permute.xlu0 %3061
        %3063 = vrot.lane.b32.xlu0 %v3004, 117
        %v3064 = vpop.permute.xlu0 %3063
        %3065 = vrot.lane.b32.xlu0 %v3006, 117
        %v3066 = vpop.permute.xlu0 %3065
        %3067 = vrot.lane.b32.xlu0 %v3008, 117
        %v3068 = vpop.permute.xlu0 %3067
        %3069 = vrot.lane.b32.xlu0 %v3010, 117
        %v3070 = vpop.permute.xlu0 %3069
        %3071 = vrot.lane.b32.xlu0 %v3012, 117
        %v3072 = vpop.permute.xlu0 %3071
        %3073 = vrot.lane.b32.xlu0 %v3014, 117
        %v3074 = vpop.permute.xlu0 %3073
        %3075 = vrot.lane.b32.xlu0 %v3016, 117
        %v3076 = vpop.permute.xlu0 %3075
        %3077 = vrot.lane.b32.xlu0 %v3018, 117
        %v3078 = vpop.permute.xlu0 %3077
        %3079 = vrot.lane.b32.xlu0 %v3020, 117
        %v3080 = vpop.permute.xlu0 %3079
        %3081 = vrot.lane.b32.xlu0 %v3022, 117
        %v3082 = vpop.permute.xlu0 %3081
        %3083 = vrot.lane.b32.xlu0 %v3024, 117
        %v3084 = vpop.permute.xlu0 %3083
        %3085 = vrot.lane.b32.xlu0 %v3026, 117
        %v3086 = vpop.permute.xlu0 %3085
        %3087 = vrot.lane.b32.xlu0 %v3028, 117
        %v3088 = vpop.permute.xlu0 %3087
        %3089 = vrot.lane.b32.xlu0 %v3030, 117
        %v3090 = vpop.permute.xlu0 %3089
        %3091 = vrot.lane.b32.xlu0 %v3027, 117
        %v3092 = vpop.permute.xlu0 %3091
        %3093 = vrot.lane.b32.xlu0 %v3029, 117
        %v3094 = vpop.permute.xlu0 %3093
        %vm3095 = vcmask 957440
        %v3096 = vsel %vm3095, %v3032, %v3034
        %v3097 = vsel %vm3095, %v3036, %v3038
        %v3098 = vsel %vm3095, %v3040, %v3042
        %v3099 = vsel %vm3095, %v3044, %v3046
        %v3100 = vsel %vm3095, %v3048, %v3050
        %v3101 = vsel %vm3095, %v3052, %v3054
        %v3102 = vsel %vm3095, %v3056, %v3058
        %v3103 = vsel %vm3095, %v3060, %v3062
        %v3104 = vsel %vm3095, %v3064, %v3066
        %v3105 = vsel %vm3095, %v3068, %v3070
        %v3106 = vsel %vm3095, %v3072, %v3074
        %v3107 = vsel %vm3095, %v3076, %v3078
        %v3108 = vsel %vm3095, %v3080, %v3082
        %v3109 = vsel %vm3095, %v3084, %v3086
        %v3110 = vsel %vm3095, %v3088, %v3090
        %v3111 = vsel %vm3095, %v3092, %v3094
        %v3160 = vrot.slane %v2509, 4
        %v3161 = vrot.slane %v2513, 4
        %v3162 = vsel %vm986, %v3160, %v3161
        %v3163 = vrot.slane %v2511, 4
        %v3164 = vrot.slane %v2515, 4
        %v3165 = vsel %vm986, %v3163, %v3164
        %v3166 = vrot.slane %v2519, 4
        %v3167 = vsel %vm986, %v3161, %v3166
        %v3168 = vrot.slane %v2521, 4
        %v3169 = vsel %vm986, %v3164, %v3168
        %v3170 = vrot.slane %v2523, 4
        %v3171 = vsel %vm986, %v3166, %v3170
        %v3172 = vrot.slane %v2525, 4
        %v3173 = vsel %vm986, %v3168, %v3172
        %v3174 = vrot.slane %v2529, 4
        %v3175 = vsel %vm986, %v3170, %v3174
        %v3176 = vrot.slane %v2531, 4
        %v3177 = vsel %vm986, %v3172, %v3176
        %v3178 = vrot.slane %v2533, 4
        %v3179 = vsel %vm986, %v3174, %v3178
        %v3180 = vrot.slane %v2535, 4
        %v3181 = vsel %vm986, %v3176, %v3180
        %v3182 = vrot.slane %v2539, 4
        %v3183 = vsel %vm986, %v3178, %v3182
        %v3184 = vrot.slane %v2541, 4
        %v3185 = vsel %vm986, %v3180, %v3184
        %v3186 = vrot.slane %v2543, 4
        %v3187 = vsel %vm986, %v3182, %v3186
        %v3188 = vrot.slane %v2545, 4
        %v3189 = vsel %vm986, %v3184, %v3188
        %v3190 = vrot.slane %v2549, 4
        %v3191 = vsel %vm986, %v3186, %v3190
        %v3192 = vrot.slane %v2551, 4
        %v3193 = vsel %vm986, %v3188, %v3192
        %v3194 = vrot.slane %v2553, 4
        %v3195 = vsel %vm986, %v3190, %v3194
        %v3196 = vrot.slane %v2555, 4
        %v3197 = vsel %vm986, %v3192, %v3196
        %v3198 = vrot.slane %v2559, 4
        %v3199 = vsel %vm986, %v3194, %v3198
        %v3200 = vrot.slane %v2561, 4
        %v3201 = vsel %vm986, %v3196, %v3200
        %v3202 = vrot.slane %v2563, 4
        %v3203 = vsel %vm986, %v3198, %v3202
        %v3204 = vrot.slane %v2565, 4
        %v3205 = vsel %vm986, %v3200, %v3204
        %v3206 = vrot.slane %v2569, 4
        %v3207 = vsel %vm986, %v3202, %v3206
        %v3208 = vrot.slane %v2571, 4
        %v3209 = vsel %vm986, %v3204, %v3208
        %v3210 = vrot.slane %v2573, 4
        %v3211 = vsel %vm986, %v3206, %v3210
        %v3212 = vrot.slane %v2575, 4
        %v3213 = vsel %vm986, %v3208, %v3212
        %v3214 = vrot.slane %v2579, 4
        %v3215 = vsel %vm986, %v3210, %v3214
        %v3216 = vrot.slane %v2581, 4
        %v3217 = vsel %vm986, %v3212, %v3216
        %v3218 = vrot.slane %v2583, 4
        %v3219 = vsel %vm986, %v3214, %v3218
        %v3220 = vrot.slane %v2585, 4
        %v3221 = vsel %vm986, %v3216, %v3220
        %3222 = vrot.lane.b32.xlu0 %v3162, 28
        %v3223 = vpop.permute.xlu0 %3222
        %3224 = vrot.lane.b32.xlu0 %v3165, 28
        %v3225 = vpop.permute.xlu0 %3224
        %3226 = vrot.lane.b32.xlu0 %v3167, 28
        %v3227 = vpop.permute.xlu0 %3226
        %3228 = vrot.lane.b32.xlu0 %v3169, 28
        %v3229 = vpop.permute.xlu0 %3228
        %3230 = vrot.lane.b32.xlu0 %v3171, 28
        %v3231 = vpop.permute.xlu0 %3230
        %3232 = vrot.lane.b32.xlu0 %v3173, 28
        %v3233 = vpop.permute.xlu0 %3232
        %3234 = vrot.lane.b32.xlu0 %v3175, 28
        %v3235 = vpop.permute.xlu0 %3234
        %3236 = vrot.lane.b32.xlu0 %v3177, 28
        %v3237 = vpop.permute.xlu0 %3236
        %3238 = vrot.lane.b32.xlu0 %v3179, 28
        %v3239 = vpop.permute.xlu0 %3238
        %3240 = vrot.lane.b32.xlu0 %v3181, 28
        %v3241 = vpop.permute.xlu0 %3240
        %3242 = vrot.lane.b32.xlu0 %v3183, 28
        %v3243 = vpop.permute.xlu0 %3242
        %3244 = vrot.lane.b32.xlu0 %v3185, 28
        %v3245 = vpop.permute.xlu0 %3244
        %3246 = vrot.lane.b32.xlu0 %v3187, 28
        %v3247 = vpop.permute.xlu0 %3246
        %3248 = vrot.lane.b32.xlu0 %v3189, 28
        %v3249 = vpop.permute.xlu0 %3248
        %3250 = vrot.lane.b32.xlu0 %v3191, 28
        %v3251 = vpop.permute.xlu0 %3250
        %3252 = vrot.lane.b32.xlu0 %v3193, 28
        %v3253 = vpop.permute.xlu0 %3252
        %3254 = vrot.lane.b32.xlu0 %v3195, 28
        %v3255 = vpop.permute.xlu0 %3254
        %3256 = vrot.lane.b32.xlu0 %v3197, 28
        %v3257 = vpop.permute.xlu0 %3256
        %3258 = vrot.lane.b32.xlu0 %v3199, 28
        %v3259 = vpop.permute.xlu0 %3258
        %3260 = vrot.lane.b32.xlu0 %v3201, 28
        %v3261 = vpop.permute.xlu0 %3260
        %3262 = vrot.lane.b32.xlu0 %v3203, 28
        %v3263 = vpop.permute.xlu0 %3262
        %3264 = vrot.lane.b32.xlu0 %v3205, 28
        %v3265 = vpop.permute.xlu0 %3264
        %3266 = vrot.lane.b32.xlu0 %v3207, 28
        %v3267 = vpop.permute.xlu0 %3266
        %3268 = vrot.lane.b32.xlu0 %v3209, 28
        %v3269 = vpop.permute.xlu0 %3268
        %3270 = vrot.lane.b32.xlu0 %v3211, 28
        %v3271 = vpop.permute.xlu0 %3270
        %3272 = vrot.lane.b32.xlu0 %v3213, 28
        %v3273 = vpop.permute.xlu0 %3272
        %3274 = vrot.lane.b32.xlu0 %v3215, 28
        %v3275 = vpop.permute.xlu0 %3274
        %3276 = vrot.lane.b32.xlu0 %v3217, 28
        %v3277 = vpop.permute.xlu0 %3276
        %3278 = vrot.lane.b32.xlu0 %v3219, 28
        %v3279 = vpop.permute.xlu0 %3278
        %3280 = vrot.lane.b32.xlu0 %v3221, 28
        %v3281 = vpop.permute.xlu0 %3280
        %3282 = vrot.lane.b32.xlu0 %v3218, 28
        %v3283 = vpop.permute.xlu0 %3282
        %3284 = vrot.lane.b32.xlu0 %v3220, 28
        %v3285 = vpop.permute.xlu0 %3284
        %vm3286 = vcmask 228352
        %v3287 = vsel %vm3286, %v3223, %v3225
        %v3288 = vsel %vm3286, %v3227, %v3229
        %v3289 = vsel %vm3286, %v3231, %v3233
        %v3290 = vsel %vm3286, %v3235, %v3237
        %v3291 = vsel %vm3286, %v3239, %v3241
        %v3292 = vsel %vm3286, %v3243, %v3245
        %v3293 = vsel %vm3286, %v3247, %v3249
        %v3294 = vsel %vm3286, %v3251, %v3253
        %v3295 = vsel %vm3286, %v3255, %v3257
        %v3296 = vsel %vm3286, %v3259, %v3261
        %v3297 = vsel %vm3286, %v3263, %v3265
        %v3298 = vsel %vm3286, %v3267, %v3269
        %v3299 = vsel %vm3286, %v3271, %v3273
        %v3300 = vsel %vm3286, %v3275, %v3277
        %v3301 = vsel %vm3286, %v3279, %v3281
        %v3302 = vsel %vm3286, %v3283, %v3285
        %v3335 = vsel %vm2745, %v2511, %v2682
        %v3336 = vsel %vm2745, %v2515, %v2686
        %v3337 = vsel %vm2745, %v2521, %v2690
        %v3338 = vsel %vm2745, %v2525, %v2694
        %v3339 = vsel %vm2745, %v2531, %v2698
        %v3340 = vsel %vm2745, %v2535, %v2702
        %v3341 = vsel %vm2745, %v2541, %v2706
        %v3342 = vsel %vm2745, %v2545, %v2710
        %v3343 = vsel %vm2745, %v2551, %v2714
        %v3344 = vsel %vm2745, %v2555, %v2718
        %v3345 = vsel %vm2745, %v2561, %v2722
        %v3346 = vsel %vm2745, %v2565, %v2726
        %v3347 = vsel %vm2745, %v2571, %v2730
        %v3348 = vsel %vm2745, %v2575, %v2734
        %v3349 = vsel %vm2745, %v2581, %v2738
        %v3350 = vsel %vm2745, %v2585, %v2742
        %v3351 = vsel %vm2920, %v2746, %v2857
        %v3352 = vsel %vm2920, %v2747, %v2861
        %v3353 = vsel %vm2920, %v2748, %v2865
        %v3354 = vsel %vm2920, %v2749, %v2869
        %v3355 = vsel %vm2920, %v2750, %v2873
        %v3356 = vsel %vm2920, %v2751, %v2877
        %v3357 = vsel %vm2920, %v2752, %v2881
        %v3358 = vsel %vm2920, %v2753, %v2885
        %v3359 = vsel %vm2920, %v2754, %v2889
        %v3360 = vsel %vm2920, %v2755, %v2893
        %v3361 = vsel %vm2920, %v2756, %v2897
        %v3362 = vsel %vm2920, %v2757, %v2901
        %v3363 = vsel %vm2920, %v2758, %v2905
        %v3364 = vsel %vm2920, %v2759, %v2909
        %v3365 = vsel %vm2920, %v2760, %v2913
        %v3366 = vsel %vm2920, %v2761, %v2917
        %v3367 = vsel %vm3095, %v2921, %v3032
        %v3368 = vsel %vm3095, %v2922, %v3036
        %v3369 = vsel %vm3095, %v2923, %v3040
        %v3370 = vsel %vm3095, %v2924, %v3044
        %v3371 = vsel %vm3095, %v2925, %v3048
        %v3372 = vsel %vm3095, %v2926, %v3052
        %v3373 = vsel %vm3095, %v2927, %v3056
        %v3374 = vsel %vm3095, %v2928, %v3060
        %v3375 = vsel %vm3095, %v2929, %v3064
        %v3376 = vsel %vm3095, %v2930, %v3068
        %v3377 = vsel %vm3095, %v2931, %v3072
        %v3378 = vsel %vm3095, %v2932, %v3076
        %v3379 = vsel %vm3095, %v2933, %v3080
        %v3380 = vsel %vm3095, %v2934, %v3084
        %v3381 = vsel %vm3095, %v2935, %v3088
        %v3382 = vsel %vm3095, %v2936, %v3092
        %v3383 = vsel %vm3286, %v3034, %v3223
        %v3384 = vsel %vm3286, %v3038, %v3227
        %v3385 = vsel %vm3286, %v3042, %v3231
        %v3386 = vsel %vm3286, %v3046, %v3235
        %v3387 = vsel %vm3286, %v3050, %v3239
        %v3388 = vsel %vm3286, %v3054, %v3243
        %v3389 = vsel %vm3286, %v3058, %v3247
        %v3390 = vsel %vm3286, %v3062, %v3251
        %v3391 = vsel %vm3286, %v3066, %v3255
        %v3392 = vsel %vm3286, %v3070, %v3259
        %v3393 = vsel %vm3286, %v3074, %v3263
        %v3394 = vsel %vm3286, %v3078, %v3267
        %v3395 = vsel %vm3286, %v3082, %v3271
        %v3396 = vsel %vm3286, %v3086, %v3275
        %v3397 = vsel %vm3286, %v3090, %v3279
        %v3398 = vsel %vm3286, %v3094, %v3283
        %v3399 = vpack.c.bf16 %v2513, %v2509
        %v3400 = vpack.c.bf16 %v3336, %v3335
        %v3401 = vpack.c.bf16 %v3352, %v3351
        %v3402 = vpack.c.bf16 %v3368, %v3367
        %v3403 = vpack.c.bf16 %v3097, %v3096
        %v3404 = vpack.c.bf16 %v3384, %v3383
        %v3405 = vpack.c.bf16 %v3288, %v3287
        %v3406 = vpack.c.bf16 %v2523, %v2519
        %v3407 = vpack.c.bf16 %v3338, %v3337
        %v3408 = vpack.c.bf16 %v3354, %v3353
        %v3409 = vpack.c.bf16 %v3370, %v3369
        %v3410 = vpack.c.bf16 %v3099, %v3098
        %v3411 = vpack.c.bf16 %v3386, %v3385
        %v3412 = vpack.c.bf16 %v3290, %v3289
        %v3413 = vpack.c.bf16 %v2533, %v2529
        %v3414 = vpack.c.bf16 %v3340, %v3339
        %v3415 = vpack.c.bf16 %v3356, %v3355
        %v3416 = vpack.c.bf16 %v3372, %v3371
        %v3417 = vpack.c.bf16 %v3101, %v3100
        %v3418 = vpack.c.bf16 %v3388, %v3387
        %v3419 = vpack.c.bf16 %v3292, %v3291
        %v3420 = vpack.c.bf16 %v2543, %v2539
        %v3421 = vpack.c.bf16 %v3342, %v3341
        %v3422 = vpack.c.bf16 %v3358, %v3357
        %v3423 = vpack.c.bf16 %v3374, %v3373
        %v3424 = vpack.c.bf16 %v3103, %v3102
        %v3425 = vpack.c.bf16 %v3390, %v3389
        %v3426 = vpack.c.bf16 %v3294, %v3293
        %v3427 = vpack.c.bf16 %v2553, %v2549
        %v3428 = vpack.c.bf16 %v3344, %v3343
        %v3429 = vpack.c.bf16 %v3360, %v3359
        %v3430 = vpack.c.bf16 %v3376, %v3375
        %v3431 = vpack.c.bf16 %v3105, %v3104
        %v3432 = vpack.c.bf16 %v3392, %v3391
        %v3433 = vpack.c.bf16 %v3296, %v3295
        %v3434 = vpack.c.bf16 %v2563, %v2559
        %v3435 = vpack.c.bf16 %v3346, %v3345
        %v3436 = vpack.c.bf16 %v3362, %v3361
        %v3437 = vpack.c.bf16 %v3378, %v3377
        %v3438 = vpack.c.bf16 %v3107, %v3106
        %v3439 = vpack.c.bf16 %v3394, %v3393
        %v3440 = vpack.c.bf16 %v3298, %v3297
        %v3441 = vpack.c.bf16 %v2573, %v2569
        %v3442 = vpack.c.bf16 %v3348, %v3347
        %v3443 = vpack.c.bf16 %v3364, %v3363
        %v3444 = vpack.c.bf16 %v3380, %v3379
        %v3445 = vpack.c.bf16 %v3109, %v3108
        %v3446 = vpack.c.bf16 %v3396, %v3395
        %v3447 = vpack.c.bf16 %v3300, %v3299
        %v3448 = vpack.c.bf16 %v2583, %v2579
        %v3449 = vpack.c.bf16 %v3350, %v3349
        %v3450 = vpack.c.bf16 %v3366, %v3365
        %v3451 = vpack.c.bf16 %v3382, %v3381
        %v3452 = vpack.c.bf16 %v3111, %v3110
        %v3453 = vpack.c.bf16 %v3398, %v3397
        %v3454 = vpack.c.bf16 %v3302, %v3301
        %v3455 = vld [vmem:[%s4] sm:$0xff]
        %v3456 = vld [vmem:[%s4 + $0x8] sm:$0xff]
        %v3457 = vld [vmem:[%s4 + $0x10] sm:$0xff]
        %v3458 = vld [vmem:[%s4 + $0x18] sm:$0xff]
        %v3459 = vld [vmem:[%s4 + $0x20] sm:$0xff]
        %v3460 = vld [vmem:[%s4 + $0x28] sm:$0xff]
        %v3461 = vld [vmem:[%s4 + $0x30] sm:$0xff]
        %v3462 = vld [vmem:[%s4 + $0x38] sm:$0xff]
        %v3463 = vld [vmem:[%s4 + $0x40] sm:$0xff]
        %v3464 = vld [vmem:[%s4 + $0x48] sm:$0xff]
        %v3465 = vld [vmem:[%s4 + $0x50] sm:$0xff]
        %v3466 = vld [vmem:[%s4 + $0x58] sm:$0xff]
        %v3467 = vld [vmem:[%s4 + $0x60] sm:$0xff]
        %v3468 = vld [vmem:[%s4 + $0x68] sm:$0xff]
        %v3469 = vld [vmem:[%s4 + $0x70] sm:$0xff]
        %v3470 = vld [vmem:[%s4 + $0x78] sm:$0xff]
        %v3471 = vld [vmem:[%s4 + $0x80] sm:$0xff]
        %v3472 = vld [vmem:[%s4 + $0x88] sm:$0xff]
        %v3473 = vld [vmem:[%s4 + $0x90] sm:$0xff]
        %v3474 = vld [vmem:[%s4 + $0x98] sm:$0xff]
        %v3475 = vld [vmem:[%s4 + $0xa0] sm:$0xff]
        %v3476 = vld [vmem:[%s4 + $0xa8] sm:$0xff]
        %v3477 = vld [vmem:[%s4 + $0xb0] sm:$0xff]
        %v3478 = vld [vmem:[%s4 + $0xb8] sm:$0xff]
        %v3479 = vld [vmem:[%s4 + $0xc0] sm:$0xff]
        %v3480 = vld [vmem:[%s4 + $0xc8] sm:$0xff]
        %v3481 = vld [vmem:[%s4 + $0xd0] sm:$0xff]
        %v3482 = vld [vmem:[%s4 + $0xd8] sm:$0xff]
        %v3483 = vld [vmem:[%s4 + $0xe0] sm:$0xff]
        %v3484 = vld [vmem:[%s4 + $0xe8] sm:$0xff]
        %v3485 = vld [vmem:[%s4 + $0xf0] sm:$0xff]
        %v3486 = vld [vmem:[%s4 + $0xf8] sm:$0xff]
        %v3487 = vld [vmem:[%s4 + $0x100] sm:$0xff]
        %v3488 = vld [vmem:[%s4 + $0x108] sm:$0xff]
        %v3489 = vld [vmem:[%s4 + $0x110] sm:$0xff]
        %v3490 = vld [vmem:[%s4 + $0x118] sm:$0xff]
        %v3491 = vld [vmem:[%s4 + $0x120] sm:$0xff]
        %v3492 = vld [vmem:[%s4 + $0x128] sm:$0xff]
        %v3493 = vld [vmem:[%s4 + $0x130] sm:$0xff]
        %v3494 = vld [vmem:[%s4 + $0x138] sm:$0xff]
        %v3495 = vld [vmem:[%s4 + $0x140] sm:$0xff]
        %v3496 = vld [vmem:[%s4 + $0x148] sm:$0xff]
        %v3497 = vld [vmem:[%s4 + $0x150] sm:$0xff]
        %v3498 = vld [vmem:[%s4 + $0x158] sm:$0xff]
        %v3499 = vld [vmem:[%s4 + $0x160] sm:$0xff]
        %v3500 = vld [vmem:[%s4 + $0x168] sm:$0xff]
        %v3501 = vld [vmem:[%s4 + $0x170] sm:$0xff]
        %v3502 = vld [vmem:[%s4 + $0x178] sm:$0xff]
        %v3503 = vld [vmem:[%s4 + $0x180] sm:$0xff]
        %v3504 = vld [vmem:[%s4 + $0x188] sm:$0xff]
        %v3505 = vld [vmem:[%s4 + $0x190] sm:$0xff]
        %v3506 = vld [vmem:[%s4 + $0x198] sm:$0xff]
        %v3507 = vld [vmem:[%s4 + $0x1a0] sm:$0xff]
        %v3508 = vld [vmem:[%s4 + $0x1a8] sm:$0xff]
        %v3509 = vld [vmem:[%s4 + $0x1b0] sm:$0xff]
        %v3510 = vld [vmem:[%s4 + $0x1b8] sm:$0xff]
        %v3511 = vld [vmem:[%s4 + $0x1c0] sm:$0xff]
        %v3512 = vld [vmem:[%s4 + $0x1c8] sm:$0xff]
        %v3513 = vld [vmem:[%s4 + $0x1d0] sm:$0xff]
        %v3514 = vld [vmem:[%s4 + $0x1d8] sm:$0xff]
        %v3515 = vld [vmem:[%s4 + $0x1e0] sm:$0xff]
        %v3516 = vld [vmem:[%s4 + $0x1e8] sm:$0xff]
        %v3517 = vld [vmem:[%s4 + $0x1f0] sm:$0xff]
        %v3518 = vld [vmem:[%s4 + $0x1f8] sm:$0xff]
        %v3519 = vld [vmem:[%s4 + $0x200] sm:$0xff]
        %v3520 = vld [vmem:[%s4 + $0x208] sm:$0xff]
        %v3521 = vld [vmem:[%s4 + $0x210] sm:$0xff]
        %v3522 = vld [vmem:[%s4 + $0x218] sm:$0xff]
        %v3523 = vld [vmem:[%s4 + $0x220] sm:$0xff]
        %v3524 = vld [vmem:[%s4 + $0x228] sm:$0xff]
        %v3525 = vld [vmem:[%s4 + $0x230] sm:$0xff]
        %v3526 = vld [vmem:[%s4 + $0x238] sm:$0xff]
        %v3527 = vld [vmem:[%s4 + $0x240] sm:$0xff]
        %v3528 = vld [vmem:[%s4 + $0x248] sm:$0xff]
        %v3529 = vld [vmem:[%s4 + $0x250] sm:$0xff]
        %v3530 = vld [vmem:[%s4 + $0x258] sm:$0xff]
        %v3531 = vld [vmem:[%s4 + $0x260] sm:$0xff]
        %v3532 = vld [vmem:[%s4 + $0x268] sm:$0xff]
        %v3533 = vld [vmem:[%s4 + $0x270] sm:$0xff]
        %v3534 = vld [vmem:[%s4 + $0x278] sm:$0xff]
        %v3535 = vld [vmem:[%s4 + $0x280] sm:$0xff]
        %v3536 = vld [vmem:[%s4 + $0x288] sm:$0xff]
        %v3537 = vld [vmem:[%s4 + $0x290] sm:$0xff]
        %v3538 = vld [vmem:[%s4 + $0x298] sm:$0xff]
        %v3539 = vld [vmem:[%s4 + $0x2a0] sm:$0xff]
        %v3540 = vld [vmem:[%s4 + $0x2a8] sm:$0xff]
        %v3541 = vld [vmem:[%s4 + $0x2b0] sm:$0xff]
        %v3542 = vld [vmem:[%s4 + $0x2b8] sm:$0xff]
        %v3543 = vld [vmem:[%s4 + $0x2c0] sm:$0xff]
        %v3544 = vld [vmem:[%s4 + $0x2c8] sm:$0xff]
        %v3545 = vld [vmem:[%s4 + $0x2d0] sm:$0xff]
        %v3546 = vld [vmem:[%s4 + $0x2d8] sm:$0xff]
        %v3547 = vld [vmem:[%s4 + $0x2e0] sm:$0xff]
        %v3548 = vld [vmem:[%s4 + $0x2e8] sm:$0xff]
        %v3549 = vld [vmem:[%s4 + $0x2f0] sm:$0xff]
        %v3550 = vld [vmem:[%s4 + $0x2f8] sm:$0xff]
        %v3551 = vld [vmem:[%s4 + $0x300] sm:$0xff]
        %v3552 = vld [vmem:[%s4 + $0x308] sm:$0xff]
        %v3553 = vld [vmem:[%s4 + $0x310] sm:$0xff]
        %v3554 = vld [vmem:[%s4 + $0x318] sm:$0xff]
        %v3555 = vld [vmem:[%s4 + $0x320] sm:$0xff]
        %v3556 = vld [vmem:[%s4 + $0x328] sm:$0xff]
        %v3557 = vld [vmem:[%s4 + $0x330] sm:$0xff]
        %v3558 = vld [vmem:[%s4 + $0x338] sm:$0xff]
        %v3559 = vld [vmem:[%s4 + $0x340] sm:$0x33]
        %v3560 = vld [vmem:[%s5] sm:$0x3]
        %v3562 = vlaneseq
        %v3563 = vshrl.u32 %v3562, 7
        %v3564 = vsub.s32 0, %v3563
        %v3565 = vrot.slane %v3560, %v3564
        %v3566 = vlaneseq
        %v3567 = vshrl.u32 %v3566, 7
        %v3568 = vsub.s32 1, %v3567
        %v3569 = vrot.slane %v3560, %v3568
        %v3677 = vunpack.c.l.b16 %v3455
        %v3678 = vunpack.c.h.b16 %v3455
        %v3679 = vunpack.c.l.b16 %v3456
        %v3680 = vunpack.c.h.b16 %v3456
        %v3681 = vunpack.c.l.b16 %v3457
        %v3682 = vunpack.c.h.b16 %v3457
        %v3683 = vunpack.c.l.b16 %v3458
        %v3684 = vunpack.c.h.b16 %v3458
        %v3685 = vunpack.c.l.b16 %v3459
        %v3686 = vunpack.c.h.b16 %v3459
        %v3687 = vunpack.c.l.b16 %v3460
        %v3688 = vunpack.c.h.b16 %v3460
        %v3689 = vunpack.c.l.b16 %v3461
        %v3690 = vunpack.c.h.b16 %v3461
        %v3691 = vunpack.c.l.b16 %v3462
        %v3692 = vunpack.c.h.b16 %v3462
        %v3693 = vunpack.c.l.b16 %v3463
        %v3694 = vunpack.c.h.b16 %v3463
        %v3695 = vunpack.c.l.b16 %v3464
        %v3696 = vunpack.c.h.b16 %v3464
        %v3697 = vunpack.c.l.b16 %v3465
        %v3698 = vunpack.c.h.b16 %v3465
        %v3699 = vunpack.c.l.b16 %v3466
        %v3700 = vunpack.c.h.b16 %v3466
        %v3701 = vunpack.c.l.b16 %v3467
        %v3702 = vunpack.c.h.b16 %v3467
        %v3703 = vunpack.c.l.b16 %v3468
        %v3704 = vunpack.c.h.b16 %v3468
        %v3705 = vunpack.c.l.b16 %v3469
        %v3706 = vunpack.c.h.b16 %v3469
        %v3707 = vunpack.c.l.b16 %v3470
        %v3708 = vunpack.c.h.b16 %v3470
        %v3709 = vunpack.c.l.b16 %v3471
        %v3710 = vunpack.c.h.b16 %v3471
        %v3711 = vunpack.c.l.b16 %v3472
        %v3712 = vunpack.c.h.b16 %v3472
        %v3713 = vunpack.c.l.b16 %v3473
        %v3714 = vunpack.c.h.b16 %v3473
        %v3715 = vunpack.c.l.b16 %v3474
        %v3716 = vunpack.c.h.b16 %v3474
        %v3717 = vunpack.c.l.b16 %v3475
        %v3718 = vunpack.c.h.b16 %v3475
        %v3719 = vunpack.c.l.b16 %v3476
        %v3720 = vunpack.c.h.b16 %v3476
        %v3721 = vunpack.c.l.b16 %v3477
        %v3722 = vunpack.c.h.b16 %v3477
        %v3723 = vunpack.c.l.b16 %v3478
        %v3724 = vunpack.c.h.b16 %v3478
        %v3725 = vunpack.c.l.b16 %v3479
        %v3726 = vunpack.c.h.b16 %v3479
        %v3727 = vunpack.c.l.b16 %v3480
        %v3728 = vunpack.c.h.b16 %v3480
        %v3729 = vunpack.c.l.b16 %v3481
        %v3730 = vunpack.c.h.b16 %v3481
        %v3731 = vunpack.c.l.b16 %v3482
        %v3732 = vunpack.c.h.b16 %v3482
        %v3733 = vunpack.c.l.b16 %v3483
        %v3734 = vunpack.c.h.b16 %v3483
        %v3735 = vunpack.c.l.b16 %v3484
        %v3736 = vunpack.c.h.b16 %v3484
        %v3737 = vunpack.c.l.b16 %v3485
        %v3738 = vunpack.c.h.b16 %v3485
        %v3739 = vunpack.c.l.b16 %v3486
        %v3740 = vunpack.c.h.b16 %v3486
        %v3741 = vunpack.c.l.b16 %v3487
        %v3742 = vunpack.c.h.b16 %v3487
        %v3743 = vunpack.c.l.b16 %v3488
        %v3744 = vunpack.c.h.b16 %v3488
        %v3745 = vunpack.c.l.b16 %v3489
        %v3746 = vunpack.c.h.b16 %v3489
        %v3747 = vunpack.c.l.b16 %v3490
        %v3748 = vunpack.c.h.b16 %v3490
        %v3749 = vunpack.c.l.b16 %v3491
        %v3750 = vunpack.c.h.b16 %v3491
        %v3751 = vunpack.c.l.b16 %v3492
        %v3752 = vunpack.c.h.b16 %v3492
        %v3753 = vunpack.c.l.b16 %v3493
        %v3754 = vunpack.c.h.b16 %v3493
        %v3755 = vunpack.c.l.b16 %v3494
        %v3756 = vunpack.c.h.b16 %v3494
        %v3757 = vunpack.c.l.b16 %v3495
        %v3758 = vunpack.c.h.b16 %v3495
        %v3759 = vunpack.c.l.b16 %v3496
        %v3760 = vunpack.c.h.b16 %v3496
        %v3761 = vunpack.c.l.b16 %v3497
        %v3762 = vunpack.c.h.b16 %v3497
        %v3763 = vunpack.c.l.b16 %v3498
        %v3764 = vunpack.c.h.b16 %v3498
        %v3765 = vunpack.c.l.b16 %v3499
        %v3766 = vunpack.c.h.b16 %v3499
        %v3767 = vunpack.c.l.b16 %v3500
        %v3768 = vunpack.c.h.b16 %v3500
        %v3769 = vunpack.c.l.b16 %v3501
        %v3770 = vunpack.c.h.b16 %v3501
        %v3771 = vunpack.c.l.b16 %v3502
        %v3772 = vunpack.c.h.b16 %v3502
        %v3773 = vunpack.c.l.b16 %v3503
        %v3774 = vunpack.c.h.b16 %v3503
        %v3775 = vunpack.c.l.b16 %v3504
        %v3776 = vunpack.c.h.b16 %v3504
        %v3777 = vunpack.c.l.b16 %v3505
        %v3778 = vunpack.c.h.b16 %v3505
        %v3779 = vunpack.c.l.b16 %v3506
        %v3780 = vunpack.c.h.b16 %v3506
        %v3781 = vunpack.c.l.b16 %v3507
        %v3782 = vunpack.c.h.b16 %v3507
        %v3783 = vunpack.c.l.b16 %v3508
        %v3784 = vunpack.c.h.b16 %v3508
        %v3785 = vunpack.c.l.b16 %v3509
        %v3786 = vunpack.c.h.b16 %v3509
        %v3787 = vunpack.c.l.b16 %v3510
        %v3788 = vunpack.c.h.b16 %v3510
        %v3789 = vunpack.c.l.b16 %v3511
        %v3790 = vunpack.c.h.b16 %v3511
        %v3791 = vunpack.c.l.b16 %v3512
        %v3792 = vunpack.c.h.b16 %v3512
        %v3793 = vunpack.c.l.b16 %v3513
        %v3794 = vunpack.c.h.b16 %v3513
        %v3795 = vunpack.c.l.b16 %v3514
        %v3796 = vunpack.c.h.b16 %v3514
        %v3797 = vunpack.c.l.b16 %v3515
        %v3798 = vunpack.c.h.b16 %v3515
        %v3799 = vunpack.c.l.b16 %v3516
        %v3800 = vunpack.c.h.b16 %v3516
        %v3801 = vunpack.c.l.b16 %v3517
        %v3802 = vunpack.c.h.b16 %v3517
        %v3803 = vunpack.c.l.b16 %v3518
        %v3804 = vunpack.c.h.b16 %v3518
        %v3805 = vunpack.c.l.b16 %v3519
        %v3806 = vunpack.c.h.b16 %v3519
        %v3807 = vunpack.c.l.b16 %v3520
        %v3808 = vunpack.c.h.b16 %v3520
        %v3809 = vunpack.c.l.b16 %v3521
        %v3810 = vunpack.c.h.b16 %v3521
        %v3811 = vunpack.c.l.b16 %v3522
        %v3812 = vunpack.c.h.b16 %v3522
        %v3813 = vunpack.c.l.b16 %v3523
        %v3814 = vunpack.c.h.b16 %v3523
        %v3815 = vunpack.c.l.b16 %v3524
        %v3816 = vunpack.c.h.b16 %v3524
        %v3817 = vunpack.c.l.b16 %v3525
        %v3818 = vunpack.c.h.b16 %v3525
        %v3819 = vunpack.c.l.b16 %v3526
        %v3820 = vunpack.c.h.b16 %v3526
        %v3821 = vunpack.c.l.b16 %v3527
        %v3822 = vunpack.c.h.b16 %v3527
        %v3823 = vunpack.c.l.b16 %v3528
        %v3824 = vunpack.c.h.b16 %v3528
        %v3825 = vunpack.c.l.b16 %v3529
        %v3826 = vunpack.c.h.b16 %v3529
        %v3827 = vunpack.c.l.b16 %v3530
        %v3828 = vunpack.c.h.b16 %v3530
        %v3829 = vunpack.c.l.b16 %v3531
        %v3830 = vunpack.c.h.b16 %v3531
        %v3831 = vunpack.c.l.b16 %v3532
        %v3832 = vunpack.c.h.b16 %v3532
        %v3833 = vunpack.c.l.b16 %v3533
        %v3834 = vunpack.c.h.b16 %v3533
        %v3835 = vunpack.c.l.b16 %v3534
        %v3836 = vunpack.c.h.b16 %v3534
        %v3837 = vunpack.c.l.b16 %v3535
        %v3838 = vunpack.c.h.b16 %v3535
        %v3839 = vunpack.c.l.b16 %v3536
        %v3840 = vunpack.c.h.b16 %v3536
        %v3841 = vunpack.c.l.b16 %v3537
        %v3842 = vunpack.c.h.b16 %v3537
        %v3843 = vunpack.c.l.b16 %v3538
        %v3844 = vunpack.c.h.b16 %v3538
        %v3845 = vunpack.c.l.b16 %v3539
        %v3846 = vunpack.c.h.b16 %v3539
        %v3847 = vunpack.c.l.b16 %v3540
        %v3848 = vunpack.c.h.b16 %v3540
        %v3849 = vunpack.c.l.b16 %v3541
        %v3850 = vunpack.c.h.b16 %v3541
        %v3851 = vunpack.c.l.b16 %v3542
        %v3852 = vunpack.c.h.b16 %v3542
        %v3853 = vunpack.c.l.b16 %v3543
        %v3854 = vunpack.c.h.b16 %v3543
        %v3855 = vunpack.c.l.b16 %v3544
        %v3856 = vunpack.c.h.b16 %v3544
        %v3857 = vunpack.c.l.b16 %v3545
        %v3858 = vunpack.c.h.b16 %v3545
        %v3859 = vunpack.c.l.b16 %v3546
        %v3860 = vunpack.c.h.b16 %v3546
        %v3861 = vunpack.c.l.b16 %v3547
        %v3862 = vunpack.c.h.b16 %v3547
        %v3863 = vunpack.c.l.b16 %v3548
        %v3864 = vunpack.c.h.b16 %v3548
        %v3865 = vunpack.c.l.b16 %v3549
        %v3866 = vunpack.c.h.b16 %v3549
        %v3867 = vunpack.c.l.b16 %v3550
        %v3868 = vunpack.c.h.b16 %v3550
        %v3869 = vunpack.c.l.b16 %v3551
        %v3870 = vunpack.c.h.b16 %v3551
        %v3871 = vunpack.c.l.b16 %v3552
        %v3872 = vunpack.c.h.b16 %v3552
        %v3873 = vunpack.c.l.b16 %v3553
        %v3874 = vunpack.c.h.b16 %v3553
        %v3875 = vunpack.c.l.b16 %v3554
        %v3876 = vunpack.c.h.b16 %v3554
        %v3877 = vunpack.c.l.b16 %v3555
        %v3878 = vunpack.c.h.b16 %v3555
        %v3879 = vunpack.c.l.b16 %v3556
        %v3880 = vunpack.c.h.b16 %v3556
        %v3881 = vunpack.c.l.b16 %v3557
        %v3882 = vunpack.c.h.b16 %v3557
        %v3883 = vunpack.c.l.b16 %v3558
        %v3884 = vunpack.c.h.b16 %v3558
        %v3885 = vunpack.c.l.b16 %v3559
        %v3886 = vunpack.c.h.b16 %v3559
        %v3887 = vpack.c.b16 %v3679, %v3677
        %v3888 = vpack.c.b16 %v3680, %v3678
        %v3889 = vpack.c.b16 %v3683, %v3681
        %v3890 = vpack.c.b16 %v3684, %v3682
        %v3891 = vpack.c.b16 %v3687, %v3685
        %v3892 = vpack.c.b16 %v3688, %v3686
        %v3893 = vpack.c.b16 %v3691, %v3689
        %v3894 = vpack.c.b16 %v3692, %v3690
        %v3895 = vpack.c.b16 %v3695, %v3693
        %v3896 = vpack.c.b16 %v3696, %v3694
        %v3897 = vpack.c.b16 %v3699, %v3697
        %v3898 = vpack.c.b16 %v3700, %v3698
        %v3899 = vpack.c.b16 %v3703, %v3701
        %v3900 = vpack.c.b16 %v3704, %v3702
        %v3901 = vpack.c.b16 %v3707, %v3705
        %v3902 = vpack.c.b16 %v3708, %v3706
        %v3903 = vpack.c.b16 %v3711, %v3709
        %v3904 = vpack.c.b16 %v3712, %v3710
        %v3905 = vpack.c.b16 %v3715, %v3713
        %v3906 = vpack.c.b16 %v3716, %v3714
        %v3907 = vpack.c.b16 %v3719, %v3717
        %v3908 = vpack.c.b16 %v3720, %v3718
        %v3909 = vpack.c.b16 %v3723, %v3721
        %v3910 = vpack.c.b16 %v3724, %v3722
        %v3911 = vpack.c.b16 %v3727, %v3725
        %v3912 = vpack.c.b16 %v3728, %v3726
        %v3913 = vpack.c.b16 %v3731, %v3729
        %v3914 = vpack.c.b16 %v3732, %v3730
        %v3915 = vpack.c.b16 %v3735, %v3733
        %v3916 = vpack.c.b16 %v3736, %v3734
        %v3917 = vpack.c.b16 %v3739, %v3737
        %v3918 = vpack.c.b16 %v3740, %v3738
        %v3919 = vpack.c.b16 %v3743, %v3741
        %v3920 = vpack.c.b16 %v3744, %v3742
        %v3921 = vpack.c.b16 %v3747, %v3745
        %v3922 = vpack.c.b16 %v3748, %v3746
        %v3923 = vpack.c.b16 %v3751, %v3749
        %v3924 = vpack.c.b16 %v3752, %v3750
        %v3925 = vpack.c.b16 %v3755, %v3753
        %v3926 = vpack.c.b16 %v3756, %v3754
        %v3927 = vpack.c.b16 %v3759, %v3757
        %v3928 = vpack.c.b16 %v3760, %v3758
        %v3929 = vpack.c.b16 %v3763, %v3761
        %v3930 = vpack.c.b16 %v3764, %v3762
        %v3931 = vpack.c.b16 %v3767, %v3765
        %v3932 = vpack.c.b16 %v3768, %v3766
        %v3933 = vpack.c.b16 %v3771, %v3769
        %v3934 = vpack.c.b16 %v3772, %v3770
        %v3935 = vpack.c.b16 %v3775, %v3773
        %v3936 = vpack.c.b16 %v3776, %v3774
        %v3937 = vpack.c.b16 %v3779, %v3777
        %v3938 = vpack.c.b16 %v3780, %v3778
        %v3939 = vpack.c.b16 %v3783, %v3781
        %v3940 = vpack.c.b16 %v3784, %v3782
        %v3941 = vpack.c.b16 %v3787, %v3785
        %v3942 = vpack.c.b16 %v3788, %v3786
        %v3943 = vpack.c.b16 %v3791, %v3789
        %v3944 = vpack.c.b16 %v3792, %v3790
        %v3945 = vpack.c.b16 %v3795, %v3793
        %v3946 = vpack.c.b16 %v3796, %v3794
        %v3947 = vpack.c.b16 %v3799, %v3797
        %v3948 = vpack.c.b16 %v3800, %v3798
        %v3949 = vpack.c.b16 %v3803, %v3801
        %v3950 = vpack.c.b16 %v3804, %v3802
        %v3951 = vpack.c.b16 %v3807, %v3805
        %v3952 = vpack.c.b16 %v3808, %v3806
        %v3953 = vpack.c.b16 %v3811, %v3809
        %v3954 = vpack.c.b16 %v3812, %v3810
        %v3955 = vpack.c.b16 %v3815, %v3813
        %v3956 = vpack.c.b16 %v3816, %v3814
        %v3957 = vpack.c.b16 %v3819, %v3817
        %v3958 = vpack.c.b16 %v3820, %v3818
        %v3959 = vpack.c.b16 %v3823, %v3821
        %v3960 = vpack.c.b16 %v3824, %v3822
        %v3961 = vpack.c.b16 %v3827, %v3825
        %v3962 = vpack.c.b16 %v3828, %v3826
        %v3963 = vpack.c.b16 %v3831, %v3829
        %v3964 = vpack.c.b16 %v3832, %v3830
        %v3965 = vpack.c.b16 %v3835, %v3833
        %v3966 = vpack.c.b16 %v3836, %v3834
        %v3967 = vpack.c.b16 %v3839, %v3837
        %v3968 = vpack.c.b16 %v3840, %v3838
        %v3969 = vpack.c.b16 %v3843, %v3841
        %v3970 = vpack.c.b16 %v3844, %v3842
        %v3971 = vpack.c.b16 %v3847, %v3845
        %v3972 = vpack.c.b16 %v3848, %v3846
        %v3973 = vpack.c.b16 %v3851, %v3849
        %v3974 = vpack.c.b16 %v3852, %v3850
        %v3975 = vpack.c.b16 %v3855, %v3853
        %v3976 = vpack.c.b16 %v3856, %v3854
        %v3977 = vpack.c.b16 %v3859, %v3857
        %v3978 = vpack.c.b16 %v3860, %v3858
        %v3979 = vpack.c.b16 %v3863, %v3861
        %v3980 = vpack.c.b16 %v3864, %v3862
        %v3981 = vpack.c.b16 %v3867, %v3865
        %v3982 = vpack.c.b16 %v3868, %v3866
        %v3983 = vpack.c.b16 %v3871, %v3869
        %v3984 = vpack.c.b16 %v3872, %v3870
        %v3985 = vpack.c.b16 %v3875, %v3873
        %v3986 = vpack.c.b16 %v3876, %v3874
        %v3987 = vpack.c.b16 %v3879, %v3877
        %v3988 = vpack.c.b16 %v3880, %v3878
        %v3989 = vpack.c.b16 %v3883, %v3881
        %v3990 = vpack.c.b16 %v3884, %v3882
        %v3991 = vpack.c.b16 %v3885, %v3885
        %v3992 = vpack.c.b16 %v3886, %v3886
        %vm4097 = vcmask 547840
        %v4099 = vsel %vm4097, %v3405, 0
        %v4102 = vsel %vm4097, %v3412, 0
        %v4105 = vsel %vm4097, %v3419, 0
        %v4108 = vsel %vm4097, %v3426, 0
        %v4111 = vsel %vm4097, %v3433, 0
        %v4114 = vsel %vm4097, %v3440, 0
        %v4117 = vsel %vm4097, %v3447, 0
        %v4120 = vsel %vm4097, %v3454, 0
        %vm4122 = vcmask 1040384
        %vm4123 = vcmask 1041408
        %v4124 = vsel %vm4122, 4294967295, 65535
        %v4125 = vsel %vm4123, %v4124, 0
        %v4127 = vand.u32 %v3991, %v4125
        %v4130 = vand.u32 %v3992, %v4125
        %4132 = vmatprep.subr.bf16.mxu0 %v3888
        %4133 = vmatpush1.bf16.msra.mxu0 %v3887
        %4134 = vmatprep.subr.bf16.mxu0 %v3890
        %4135 = vmatpush1.bf16.msra.mxu0 %v3889
        %4136 = vmatprep.subr.bf16.mxu0 %v3892
        %4137 = vmatpush1.bf16.msra.mxu0 %v3891
        %4138 = vmatprep.subr.bf16.mxu0 %v3894
        %4139 = vmatpush1.bf16.msra.mxu0 %v3893
        %4140 = vmatprep.subr.bf16.mxu0 %v3896
        %4141 = vmatpush1.bf16.msra.mxu0 %v3895
        %4142 = vmatprep.subr.bf16.mxu0 %v3898
        %4143 = vmatpush1.bf16.msra.mxu0 %v3897
        %4144 = vmatprep.subr.bf16.mxu0 %v3900
        %4145 = vmatpush1.bf16.msra.mxu0 %v3899
        %4146 = vmatprep.subr.bf16.mxu0 %v3902
        %4147 = vmatpush1.bf16.msra.mxu0 %v3901
        %4148 = vmatprep.subr.bf16.mxu0 %v3904
        %4149 = vmatpush1.bf16.msra.mxu0 %v3903
        %4150 = vmatprep.subr.bf16.mxu0 %v3906
        %4151 = vmatpush1.bf16.msra.mxu0 %v3905
        %4152 = vmatprep.subr.bf16.mxu0 %v3908
        %4153 = vmatpush1.bf16.msra.mxu0 %v3907
        %4154 = vmatprep.subr.bf16.mxu0 %v3910
        %4155 = vmatpush1.bf16.msra.mxu0 %v3909
        %4156 = vmatprep.subr.bf16.mxu0 %v3912
        %4157 = vmatpush1.bf16.msra.mxu0 %v3911
        %4158 = vmatprep.subr.bf16.mxu0 %v3914
        %4159 = vmatpush1.bf16.msra.mxu0 %v3913
        %4160 = vmatprep.subr.bf16.mxu0 %v3916
        %4161 = vmatpush1.bf16.msra.mxu0 %v3915
        %4162 = vmatprep.subr.bf16.mxu0 %v3918
        %4163 = vmatpush1.bf16.msra.mxu0 %v3917
        %4164 = vmatprep.mubr.bf16.mxu0 %v3400
        %4165 = vmatmul.mubr.bf16.gmra.mrb[0].mxu0 %v3399
        %v4166 = vpop.f32.mrb[0].mxu0
        %v4167 = vadd.f32 %v3565, %v4166
        %v4168 = vpop.f32.mrb[0].mxu0
        %v4169 = vadd.f32 %v3569, %v4168
        %v4170 = vpop.f32.mrb[0].mxu0
        %v4171 = vadd.f32 %v3565, %v4170
        %v4172 = vpop.f32.mrb[0].mxu0
        %v4173 = vadd.f32 %v3569, %v4172
        %4174 = vmatprep.mubr.bf16.mxu0 %v3407
        %4175 = vmatmul.mubr.bf16.gmra.mrb[0].mxu0 %v3406
        %v4176 = vpop.f32.mrb[0].mxu0
        %v4177 = vadd.f32 %v3565, %v4176
        %v4178 = vpop.f32.mrb[0].mxu0
        %v4179 = vadd.f32 %v3569, %v4178
        %v4180 = vpop.f32.mrb[0].mxu0
        %v4181 = vadd.f32 %v3565, %v4180
        %v4182 = vpop.f32.mrb[0].mxu0
        %v4183 = vadd.f32 %v3569, %v4182
        %4184 = vmatprep.mubr.bf16.mxu0 %v3414
        %4185 = vmatmul.mubr.bf16.gmra.mrb[0].mxu0 %v3413
        %v4186 = vpop.f32.mrb[0].mxu0
        %v4187 = vadd.f32 %v3565, %v4186
        %v4188 = vpop.f32.mrb[0].mxu0
        %v4189 = vadd.f32 %v3569, %v4188
        %v4190 = vpop.f32.mrb[0].mxu0
        %v4191 = vadd.f32 %v3565, %v4190
        %v4192 = vpop.f32.mrb[0].mxu0
        %v4193 = vadd.f32 %v3569, %v4192
        %4194 = vmatprep.mubr.bf16.mxu0 %v3421
        %4195 = vmatmul.mubr.bf16.gmra.mrb[0].mxu0 %v3420
        %v4196 = vpop.f32.mrb[0].mxu0
        %v4197 = vadd.f32 %v3565, %v4196
        %v4198 = vpop.f32.mrb[0].mxu0
        %v4199 = vadd.f32 %v3569, %v4198
        %v4200 = vpop.f32.mrb[0].mxu0
        %v4201 = vadd.f32 %v3565, %v4200
        %v4202 = vpop.f32.mrb[0].mxu0
        %v4203 = vadd.f32 %v3569, %v4202
        %4204 = vmatprep.mubr.bf16.mxu0 %v3428
        %4205 = vmatmul.mubr.bf16.gmra.mrb[0].mxu0 %v3427
        %v4206 = vpop.f32.mrb[0].mxu0
        %v4207 = vadd.f32 %v3565, %v4206
        %v4208 = vpop.f32.mrb[0].mxu0
        %v4209 = vadd.f32 %v3569, %v4208
        %v4210 = vpop.f32.mrb[0].mxu0
        %v4211 = vadd.f32 %v3565, %v4210
        %v4212 = vpop.f32.mrb[0].mxu0
        %v4213 = vadd.f32 %v3569, %v4212
        %4214 = vmatprep.mubr.bf16.mxu0 %v3435
        %4215 = vmatmul.mubr.bf16.gmra.mrb[0].mxu0 %v3434
        %v4216 = vpop.f32.mrb[0].mxu0
        %v4217 = vadd.f32 %v3565, %v4216
        %v4218 = vpop.f32.mrb[0].mxu0
        %v4219 = vadd.f32 %v3569, %v4218
        %v4220 = vpop.f32.mrb[0].mxu0
        %v4221 = vadd.f32 %v3565, %v4220
        %v4222 = vpop.f32.mrb[0].mxu0
        %v4223 = vadd.f32 %v3569, %v4222
        %4224 = vmatprep.mubr.bf16.mxu0 %v3442
        %4225 = vmatmul.mubr.bf16.gmra.mrb[0].mxu0 %v3441
        %v4226 = vpop.f32.mrb[0].mxu0
        %v4227 = vadd.f32 %v3565, %v4226
        %v4228 = vpop.f32.mrb[0].mxu0
        %v4229 = vadd.f32 %v3569, %v4228
        %v4230 = vpop.f32.mrb[0].mxu0
        %v4231 = vadd.f32 %v3565, %v4230
        %v4232 = vpop.f32.mrb[0].mxu0
        %v4233 = vadd.f32 %v3569, %v4232
        %4234 = vmatprep.mubr.bf16.mxu0 %v3449
        %4235 = vmatmul.mubr.bf16.gmra.mrb[0].mxu0 %v3448
        %v4236 = vpop.f32.mrb[0].mxu0
        %v4237 = vadd.f32 %v3565, %v4236
        %v4238 = vpop.f32.mrb[0].mxu0
        %v4239 = vadd.f32 %v3569, %v4238
        %v4240 = vpop.f32.mrb[0].mxu0
        %v4241 = vadd.f32 %v3565, %v4240
        %v4242 = vpop.f32.mrb[0].mxu0
        %v4243 = vadd.f32 %v3569, %v4242
        %4244 = vdwg.mxu0
        %4245 = vmatprep.subr.bf16.mxu0 %v3920
        %4246 = vmatpush1.bf16.msra.mxu0 %v3919
        %4247 = vmatprep.subr.bf16.mxu0 %v3922
        %4248 = vmatpush1.bf16.msra.mxu0 %v3921
        %4249 = vmatprep.subr.bf16.mxu0 %v3924
        %4250 = vmatpush1.bf16.msra.mxu0 %v3923
        %4251 = vmatprep.subr.bf16.mxu0 %v3926
        %4252 = vmatpush1.bf16.msra.mxu0 %v3925
        %4253 = vmatprep.subr.bf16.mxu0 %v3928
        %4254 = vmatpush1.bf16.msra.mxu0 %v3927
        %4255 = vmatprep.subr.bf16.mxu0 %v3930
        %4256 = vmatpush1.bf16.msra.mxu0 %v3929
        %4257 = vmatprep.subr.bf16.mxu0 %v3932
        %4258 = vmatpush1.bf16.msra.mxu0 %v3931
        %4259 = vmatprep.subr.bf16.mxu0 %v3934
        %4260 = vmatpush1.bf16.msra.mxu0 %v3933
        %4261 = vmatprep.subr.bf16.mxu0 %v3936
        %4262 = vmatpush1.bf16.msra.mxu0 %v3935
        %4263 = vmatprep.subr.bf16.mxu0 %v3938
        %4264 = vmatpush1.bf16.msra.mxu0 %v3937
        %4265 = vmatprep.subr.bf16.mxu0 %v3940
        %4266 = vmatpush1.bf16.msra.mxu0 %v3939
        %4267 = vmatprep.subr.bf16.mxu0 %v3942
        %4268 = vmatpush1.bf16.msra.mxu0 %v3941
        %4269 = vmatprep.subr.bf16.mxu0 %v3944
        %4270 = vmatpush1.bf16.msra.mxu0 %v3943
        %4271 = vmatprep.subr.bf16.mxu0 %v3946
        %4272 = vmatpush1.bf16.msra.mxu0 %v3945
        %4273 = vmatprep.subr.bf16.mxu0 %v3948
        %4274 = vmatpush1.bf16.msra.mxu0 %v3947
        %4275 = vmatprep.subr.bf16.mxu0 %v3950
        %4276 = vmatpush1.bf16.msra.mxu0 %v3949
        %4277 = vmatprep.mubr.bf16.mxu0 %v3402
        %4278 = vmatmul.mubr.bf16.gmra.mrb[0].mxu0 %v3401
        %v4279 = vpop.f32.mrb[0].mxu0
        %v4280 = vadd.f32 %v4167, %v4279
        %v4281 = vpop.f32.mrb[0].mxu0
        %v4282 = vadd.f32 %v4169, %v4281
        %v4283 = vpop.f32.mrb[0].mxu0
        %v4284 = vadd.f32 %v4171, %v4283
        %v4285 = vpop.f32.mrb[0].mxu0
        %v4286 = vadd.f32 %v4173, %v4285
        %4287 = vmatprep.mubr.bf16.mxu0 %v3409
        %4288 = vmatmul.mubr.bf16.gmra.mrb[0].mxu0 %v3408
        %v4289 = vpop.f32.mrb[0].mxu0
        %v4290 = vadd.f32 %v4177, %v4289
        %v4291 = vpop.f32.mrb[0].mxu0
        %v4292 = vadd.f32 %v4179, %v4291
        %v4293 = vpop.f32.mrb[0].mxu0
        %v4294 = vadd.f32 %v4181, %v4293
        %v4295 = vpop.f32.mrb[0].mxu0
        %v4296 = vadd.f32 %v4183, %v4295
        %4297 = vmatprep.mubr.bf16.mxu0 %v3416
        %4298 = vmatmul.mubr.bf16.gmra.mrb[0].mxu0 %v3415
        %v4299 = vpop.f32.mrb[0].mxu0
        %v4300 = vadd.f32 %v4187, %v4299
        %v4301 = vpop.f32.mrb[0].mxu0
        %v4302 = vadd.f32 %v4189, %v4301
        %v4303 = vpop.f32.mrb[0].mxu0
        %v4304 = vadd.f32 %v4191, %v4303
        %v4305 = vpop.f32.mrb[0].mxu0
        %v4306 = vadd.f32 %v4193, %v4305
        %4307 = vmatprep.mubr.bf16.mxu0 %v3423
        %4308 = vmatmul.mubr.bf16.gmra.mrb[0].mxu0 %v3422
        %v4309 = vpop.f32.mrb[0].mxu0
        %v4310 = vadd.f32 %v4197, %v4309
        %v4311 = vpop.f32.mrb[0].mxu0
        %v4312 = vadd.f32 %v4199, %v4311
        %v4313 = vpop.f32.mrb[0].mxu0
        %v4314 = vadd.f32 %v4201, %v4313
        %v4315 = vpop.f32.mrb[0].mxu0
        %v4316 = vadd.f32 %v4203, %v4315
        %4317 = vmatprep.mubr.bf16.mxu0 %v3430
        %4318 = vmatmul.mubr.bf16.gmra.mrb[0].mxu0 %v3429
        %v4319 = vpop.f32.mrb[0].mxu0
        %v4320 = vadd.f32 %v4207, %v4319
        %v4321 = vpop.f32.mrb[0].mxu0
        %v4322 = vadd.f32 %v4209, %v4321
        %v4323 = vpop.f32.mrb[0].mxu0
        %v4324 = vadd.f32 %v4211, %v4323
        %v4325 = vpop.f32.mrb[0].mxu0
        %v4326 = vadd.f32 %v4213, %v4325
        %4327 = vmatprep.mubr.bf16.mxu0 %v3437
        %4328 = vmatmul.mubr.bf16.gmra.mrb[0].mxu0 %v3436
        %v4329 = vpop.f32.mrb[0].mxu0
        %v4330 = vadd.f32 %v4217, %v4329
        %v4331 = vpop.f32.mrb[0].mxu0
        %v4332 = vadd.f32 %v4219, %v4331
        %v4333 = vpop.f32.mrb[0].mxu0
        %v4334 = vadd.f32 %v4221, %v4333
        %v4335 = vpop.f32.mrb[0].mxu0
        %v4336 = vadd.f32 %v4223, %v4335
        %4337 = vmatprep.mubr.bf16.mxu0 %v3444
        %4338 = vmatmul.mubr.bf16.gmra.mrb[0].mxu0 %v3443
        %v4339 = vpop.f32.mrb[0].mxu0
        %v4340 = vadd.f32 %v4227, %v4339
        %v4341 = vpop.f32.mrb[0].mxu0
        %v4342 = vadd.f32 %v4229, %v4341
        %v4343 = vpop.f32.mrb[0].mxu0
        %v4344 = vadd.f32 %v4231, %v4343
        %v4345 = vpop.f32.mrb[0].mxu0
        %v4346 = vadd.f32 %v4233, %v4345
        %4347 = vmatprep.mubr.bf16.mxu0 %v3451
        %4348 = vmatmul.mubr.bf16.gmra.mrb[0].mxu0 %v3450
        %v4349 = vpop.f32.mrb[0].mxu0
        %v4350 = vadd.f32 %v4237, %v4349
        %v4351 = vpop.f32.mrb[0].mxu0
        %v4352 = vadd.f32 %v4239, %v4351
        %v4353 = vpop.f32.mrb[0].mxu0
        %v4354 = vadd.f32 %v4241, %v4353
        %v4355 = vpop.f32.mrb[0].mxu0
        %v4356 = vadd.f32 %v4243, %v4355
        %4357 = vdwg.mxu0
        %4358 = vmatprep.subr.bf16.mxu0 %v3952
        %4359 = vmatpush1.bf16.msra.mxu0 %v3951
        %4360 = vmatprep.subr.bf16.mxu0 %v3954
        %4361 = vmatpush1.bf16.msra.mxu0 %v3953
        %4362 = vmatprep.subr.bf16.mxu0 %v3956
        %4363 = vmatpush1.bf16.msra.mxu0 %v3955
        %4364 = vmatprep.subr.bf16.mxu0 %v3958
        %4365 = vmatpush1.bf16.msra.mxu0 %v3957
        %4366 = vmatprep.subr.bf16.mxu0 %v3960
        %4367 = vmatpush1.bf16.msra.mxu0 %v3959
        %4368 = vmatprep.subr.bf16.mxu0 %v3962
        %4369 = vmatpush1.bf16.msra.mxu0 %v3961
        %4370 = vmatprep.subr.bf16.mxu0 %v3964
        %4371 = vmatpush1.bf16.msra.mxu0 %v3963
        %4372 = vmatprep.subr.bf16.mxu0 %v3966
        %4373 = vmatpush1.bf16.msra.mxu0 %v3965
        %4374 = vmatprep.subr.bf16.mxu0 %v3968
        %4375 = vmatpush1.bf16.msra.mxu0 %v3967
        %4376 = vmatprep.subr.bf16.mxu0 %v3970
        %4377 = vmatpush1.bf16.msra.mxu0 %v3969
        %4378 = vmatprep.subr.bf16.mxu0 %v3972
        %4379 = vmatpush1.bf16.msra.mxu0 %v3971
        %4380 = vmatprep.subr.bf16.mxu0 %v3974
        %4381 = vmatpush1.bf16.msra.mxu0 %v3973
        %4382 = vmatprep.subr.bf16.mxu0 %v3976
        %4383 = vmatpush1.bf16.msra.mxu0 %v3975
        %4384 = vmatprep.subr.bf16.mxu0 %v3978
        %4385 = vmatpush1.bf16.msra.mxu0 %v3977
        %4386 = vmatprep.subr.bf16.mxu0 %v3980
        %4387 = vmatpush1.bf16.msra.mxu0 %v3979
        %4388 = vmatprep.subr.bf16.mxu0 %v3982
        %4389 = vmatpush1.bf16.msra.mxu0 %v3981
        %4390 = vmatprep.mubr.bf16.mxu0 %v3404
        %4391 = vmatmul.mubr.bf16.gmra.mrb[0].mxu0 %v3403
        %v4392 = vpop.f32.mrb[0].mxu0
        %v4393 = vadd.f32 %v4280, %v4392
        %v4394 = vpop.f32.mrb[0].mxu0
        %v4395 = vadd.f32 %v4282, %v4394
        %v4396 = vpop.f32.mrb[0].mxu0
        %v4397 = vadd.f32 %v4284, %v4396
        %v4398 = vpop.f32.mrb[0].mxu0
        %v4399 = vadd.f32 %v4286, %v4398
        %4400 = vmatprep.mubr.bf16.mxu0 %v3411
        %4401 = vmatmul.mubr.bf16.gmra.mrb[0].mxu0 %v3410
        %v4402 = vpop.f32.mrb[0].mxu0
        %v4403 = vadd.f32 %v4290, %v4402
        %v4404 = vpop.f32.mrb[0].mxu0
        %v4405 = vadd.f32 %v4292, %v4404
        %v4406 = vpop.f32.mrb[0].mxu0
        %v4407 = vadd.f32 %v4294, %v4406
        %v4408 = vpop.f32.mrb[0].mxu0
        %v4409 = vadd.f32 %v4296, %v4408
        %4410 = vmatprep.mubr.bf16.mxu0 %v3418
        %4411 = vmatmul.mubr.bf16.gmra.mrb[0].mxu0 %v3417
        %v4412 = vpop.f32.mrb[0].mxu0
        %v4413 = vadd.f32 %v4300, %v4412
        %v4414 = vpop.f32.mrb[0].mxu0
        %v4415 = vadd.f32 %v4302, %v4414
        %v4416 = vpop.f32.mrb[0].mxu0
        %v4417 = vadd.f32 %v4304, %v4416
        %v4418 = vpop.f32.mrb[0].mxu0
        %v4419 = vadd.f32 %v4306, %v4418
        %4420 = vmatprep.mubr.bf16.mxu0 %v3425
        %4421 = vmatmul.mubr.bf16.gmra.mrb[0].mxu0 %v3424
        %v4422 = vpop.f32.mrb[0].mxu0
        %v4423 = vadd.f32 %v4310, %v4422
        %v4424 = vpop.f32.mrb[0].mxu0
        %v4425 = vadd.f32 %v4312, %v4424
        %v4426 = vpop.f32.mrb[0].mxu0
        %v4427 = vadd.f32 %v4314, %v4426
        %v4428 = vpop.f32.mrb[0].mxu0
        %v4429 = vadd.f32 %v4316, %v4428
        %4430 = vmatprep.mubr.bf16.mxu0 %v3432
        %4431 = vmatmul.mubr.bf16.gmra.mrb[0].mxu0 %v3431
        %v4432 = vpop.f32.mrb[0].mxu0
        %v4433 = vadd.f32 %v4320, %v4432
        %v4434 = vpop.f32.mrb[0].mxu0
        %v4435 = vadd.f32 %v4322, %v4434
        %v4436 = vpop.f32.mrb[0].mxu0
        %v4437 = vadd.f32 %v4324, %v4436
        %v4438 = vpop.f32.mrb[0].mxu0
        %v4439 = vadd.f32 %v4326, %v4438
        %4440 = vmatprep.mubr.bf16.mxu0 %v3439
        %4441 = vmatmul.mubr.bf16.gmra.mrb[0].mxu0 %v3438
        %v4442 = vpop.f32.mrb[0].mxu0
        %v4443 = vadd.f32 %v4330, %v4442
        %v4444 = vpop.f32.mrb[0].mxu0
        %v4445 = vadd.f32 %v4332, %v4444
        %v4446 = vpop.f32.mrb[0].mxu0
        %v4447 = vadd.f32 %v4334, %v4446
        %v4448 = vpop.f32.mrb[0].mxu0
        %v4449 = vadd.f32 %v4336, %v4448
        %4450 = vmatprep.mubr.bf16.mxu0 %v3446
        %4451 = vmatmul.mubr.bf16.gmra.mrb[0].mxu0 %v3445
        %v4452 = vpop.f32.mrb[0].mxu0
        %v4453 = vadd.f32 %v4340, %v4452
        %v4454 = vpop.f32.mrb[0].mxu0
        %v4455 = vadd.f32 %v4342, %v4454
        %v4456 = vpop.f32.mrb[0].mxu0
        %v4457 = vadd.f32 %v4344, %v4456
        %v4458 = vpop.f32.mrb[0].mxu0
        %v4459 = vadd.f32 %v4346, %v4458
        %4460 = vmatprep.mubr.bf16.mxu0 %v3453
        %4461 = vmatmul.mubr.bf16.gmra.mrb[0].mxu0 %v3452
        %v4462 = vpop.f32.mrb[0].mxu0
        %v4463 = vadd.f32 %v4350, %v4462
        %v4464 = vpop.f32.mrb[0].mxu0
        %v4465 = vadd.f32 %v4352, %v4464
        %v4466 = vpop.f32.mrb[0].mxu0
        %v4467 = vadd.f32 %v4354, %v4466
        %v4468 = vpop.f32.mrb[0].mxu0
        %v4469 = vadd.f32 %v4356, %v4468
        %4470 = vdwg.mxu0
        %4471 = vmatprep.subr.bf16.mxu0 %v3984
        %4472 = vmatpush1.bf16.msra.mxu0 %v3983
        %4473 = vmatprep.subr.bf16.mxu0 %v3986
        %4474 = vmatpush1.bf16.msra.mxu0 %v3985
        %4475 = vmatprep.subr.bf16.mxu0 %v3988
        %4476 = vmatpush1.bf16.msra.mxu0 %v3987
        %4477 = vmatprep.subr.bf16.mxu0 %v3990
        %4478 = vmatpush1.bf16.msra.mxu0 %v3989
        %4479 = vmatprep.subr.bf16.mxu0 %v4130
        %4480 = vmatpush1.bf16.msra.mxu0 %v4127
        %4481 = vmatprep.subr.bf16.mxu0 0
        %4482 = vmatpush1.bf16.msra.mxu0 0
        %4483 = vmatprep.subr.bf16.mxu0 0
        %4484 = vmatpush1.bf16.msra.mxu0 0
        %4485 = vmatprep.subr.bf16.mxu0 0
        %4486 = vmatpush1.bf16.msra.mxu0 0
        %4487 = vmatprep.subr.bf16.mxu0 0
        %4488 = vmatpush1.bf16.msra.mxu0 0
        %4489 = vmatprep.subr.bf16.mxu0 0
        %4490 = vmatpush1.bf16.msra.mxu0 0
        %4491 = vmatprep.subr.bf16.mxu0 0
        %4492 = vmatpush1.bf16.msra.mxu0 0
        %4493 = vmatprep.subr.bf16.mxu0 0
        %4494 = vmatpush1.bf16.msra.mxu0 0
        %4495 = vmatprep.subr.bf16.mxu0 0
        %4496 = vmatpush1.bf16.msra.mxu0 0
        %4497 = vmatprep.subr.bf16.mxu0 0
        %4498 = vmatpush1.bf16.msra.mxu0 0
        %4499 = vmatprep.subr.bf16.mxu0 0
        %4500 = vmatpush1.bf16.msra.mxu0 0
        %4501 = vmatprep.subr.bf16.mxu0 0
        %4502 = vmatpush1.bf16.msra.mxu0 0
        %4503 = vmatprep.mubr.bf16.mxu0 0
        %4504 = vmatmul.mubr.bf16.gmra.mrb[0].mxu0 %v4099
        %v4505 = vpop.f32.mrb[0].mxu0
        %v4506 = vadd.f32 %v4393, %v4505
        %v4507 = vpop.f32.mrb[0].mxu0
        %v4508 = vadd.f32 %v4395, %v4507
        %v4509 = vpop.f32.mrb[0].mxu0
        %v4510 = vadd.f32 %v4397, %v4509
        %v4511 = vpop.f32.mrb[0].mxu0
        %v4512 = vadd.f32 %v4399, %v4511
        %4513 = vmatprep.mubr.bf16.mxu0 0
        %4514 = vmatmul.mubr.bf16.gmra.mrb[0].mxu0 %v4102
        %v4515 = vpop.f32.mrb[0].mxu0
        %v4516 = vadd.f32 %v4403, %v4515
        %v4517 = vpop.f32.mrb[0].mxu0
        %v4518 = vadd.f32 %v4405, %v4517
        %v4519 = vpop.f32.mrb[0].mxu0
        %v4520 = vadd.f32 %v4407, %v4519
        %v4521 = vpop.f32.mrb[0].mxu0
        %v4522 = vadd.f32 %v4409, %v4521
        %4523 = vmatprep.mubr.bf16.mxu0 0
        %4524 = vmatmul.mubr.bf16.gmra.mrb[0].mxu0 %v4105
        %v4525 = vpop.f32.mrb[0].mxu0
        %v4526 = vadd.f32 %v4413, %v4525
        %v4527 = vpop.f32.mrb[0].mxu0
        %v4528 = vadd.f32 %v4415, %v4527
        %v4529 = vpop.f32.mrb[0].mxu0
        %v4530 = vadd.f32 %v4417, %v4529
        %v4531 = vpop.f32.mrb[0].mxu0
        %v4532 = vadd.f32 %v4419, %v4531
        %4533 = vmatprep.mubr.bf16.mxu0 0
        %4534 = vmatmul.mubr.bf16.gmra.mrb[0].mxu0 %v4108
        %v4535 = vpop.f32.mrb[0].mxu0
        %v4536 = vadd.f32 %v4423, %v4535
        %v4537 = vpop.f32.mrb[0].mxu0
        %v4538 = vadd.f32 %v4425, %v4537
        %v4539 = vpop.f32.mrb[0].mxu0
        %v4540 = vadd.f32 %v4427, %v4539
        %v4541 = vpop.f32.mrb[0].mxu0
        %v4542 = vadd.f32 %v4429, %v4541
        %4543 = vmatprep.mubr.bf16.mxu0 0
        %4544 = vmatmul.mubr.bf16.gmra.mrb[0].mxu0 %v4111
        %v4545 = vpop.f32.mrb[0].mxu0
        %v4546 = vadd.f32 %v4433, %v4545
        %v4547 = vpop.f32.mrb[0].mxu0
        %v4548 = vadd.f32 %v4435, %v4547
        %v4549 = vpop.f32.mrb[0].mxu0
        %v4550 = vadd.f32 %v4437, %v4549
        %v4551 = vpop.f32.mrb[0].mxu0
        %v4552 = vadd.f32 %v4439, %v4551
        %4553 = vmatprep.mubr.bf16.mxu0 0
        %4554 = vmatmul.mubr.bf16.gmra.mrb[0].mxu0 %v4114
        %v4555 = vpop.f32.mrb[0].mxu0
        %v4556 = vadd.f32 %v4443, %v4555
        %v4557 = vpop.f32.mrb[0].mxu0
        %v4558 = vadd.f32 %v4445, %v4557
        %v4559 = vpop.f32.mrb[0].mxu0
        %v4560 = vadd.f32 %v4447, %v4559
        %v4561 = vpop.f32.mrb[0].mxu0
        %v4562 = vadd.f32 %v4449, %v4561
        %4563 = vmatprep.mubr.bf16.mxu0 0
        %4564 = vmatmul.mubr.bf16.gmra.mrb[0].mxu0 %v4117
        %v4565 = vpop.f32.mrb[0].mxu0
        %v4566 = vadd.f32 %v4453, %v4565
        %v4567 = vpop.f32.mrb[0].mxu0
        %v4568 = vadd.f32 %v4455, %v4567
        %v4569 = vpop.f32.mrb[0].mxu0
        %v4570 = vadd.f32 %v4457, %v4569
        %v4571 = vpop.f32.mrb[0].mxu0
        %v4572 = vadd.f32 %v4459, %v4571
        %4573 = vmatprep.mubr.bf16.mxu0 0
        %4574 = vmatmul.mubr.bf16.gmra.mrb[0].mxu0 %v4120
        %v4575 = vpop.f32.mrb[0].mxu0
        %v4576 = vadd.f32 %v4463, %v4575
        %v4577 = vpop.f32.mrb[0].mxu0
        %v4578 = vadd.f32 %v4465, %v4577
        %v4579 = vpop.f32.mrb[0].mxu0
        %v4580 = vadd.f32 %v4467, %v4579
        %v4581 = vpop.f32.mrb[0].mxu0
        %v4582 = vadd.f32 %v4469, %v4581
        %4583 = vdwg.mxu0
        %v4584 = vmax.f32 %v4506, 0.0
        %v4585 = vmax.f32 %v4508, 0.0
        %v4586 = vmax.f32 %v4510, 0.0
        %v4587 = vmax.f32 %v4512, 0.0
        %v4588 = vmax.f32 %v4516, 0.0
        %v4589 = vmax.f32 %v4518, 0.0
        %v4590 = vmax.f32 %v4520, 0.0
        %v4591 = vmax.f32 %v4522, 0.0
        %v4592 = vmax.f32 %v4526, 0.0
        %v4593 = vmax.f32 %v4528, 0.0
        %v4594 = vmax.f32 %v4530, 0.0
        %v4595 = vmax.f32 %v4532, 0.0
        %v4596 = vmax.f32 %v4536, 0.0
        %v4597 = vmax.f32 %v4538, 0.0
        %v4598 = vmax.f32 %v4540, 0.0
        %v4599 = vmax.f32 %v4542, 0.0
        %v4600 = vmax.f32 %v4546, 0.0
        %v4601 = vmax.f32 %v4548, 0.0
        %v4602 = vmax.f32 %v4550, 0.0
        %v4603 = vmax.f32 %v4552, 0.0
        %v4604 = vmax.f32 %v4556, 0.0
        %v4605 = vmax.f32 %v4558, 0.0
        %v4606 = vmax.f32 %v4560, 0.0
        %v4607 = vmax.f32 %v4562, 0.0
        %v4608 = vmax.f32 %v4566, 0.0
        %v4609 = vmax.f32 %v4568, 0.0
        %v4610 = vmax.f32 %v4570, 0.0
        %v4611 = vmax.f32 %v4572, 0.0
        %v4612 = vmax.f32 %v4576, 0.0
        %v4613 = vmax.f32 %v4578, 0.0
        %v4614 = vmax.f32 %v4580, 0.0
        %v4615 = vmax.f32 %v4582, 0.0
        %v4648 = vrot.slane %v4584, 1
        %v4649 = vrot.slane %v4586, 1
        %v4650 = vsel %vm506, %v4648, %v4649
        %v4651 = vrot.slane %v4585, 1
        %v4652 = vrot.slane %v4587, 1
        %v4653 = vsel %vm506, %v4651, %v4652
        %v4654 = vrot.slane %v4588, 1
        %v4655 = vsel %vm506, %v4649, %v4654
        %v4656 = vrot.slane %v4589, 1
        %v4657 = vsel %vm506, %v4652, %v4656
        %v4658 = vrot.slane %v4590, 1
        %v4659 = vsel %vm506, %v4654, %v4658
        %v4660 = vrot.slane %v4591, 1
        %v4661 = vsel %vm506, %v4656, %v4660
        %v4662 = vrot.slane %v4592, 1
        %v4663 = vsel %vm506, %v4658, %v4662
        %v4664 = vrot.slane %v4593, 1
        %v4665 = vsel %vm506, %v4660, %v4664
        %v4666 = vrot.slane %v4594, 1
        %v4667 = vsel %vm506, %v4662, %v4666
        %v4668 = vrot.slane %v4595, 1
        %v4669 = vsel %vm506, %v4664, %v4668
        %v4670 = vrot.slane %v4596, 1
        %v4671 = vsel %vm506, %v4666, %v4670
        %v4672 = vrot.slane %v4597, 1
        %v4673 = vsel %vm506, %v4668, %v4672
        %v4674 = vrot.slane %v4598, 1
        %v4675 = vsel %vm506, %v4670, %v4674
        %v4676 = vrot.slane %v4599, 1
        %v4677 = vsel %vm506, %v4672, %v4676
        %v4678 = vrot.slane %v4600, 1
        %v4679 = vsel %vm506, %v4674, %v4678
        %v4680 = vrot.slane %v4601, 1
        %v4681 = vsel %vm506, %v4676, %v4680
        %v4682 = vrot.slane %v4602, 1
        %v4683 = vsel %vm506, %v4678, %v4682
        %v4684 = vrot.slane %v4603, 1
        %v4685 = vsel %vm506, %v4680, %v4684
        %v4686 = vrot.slane %v4604, 1
        %v4687 = vsel %vm506, %v4682, %v4686
        %v4688 = vrot.slane %v4605, 1
        %v4689 = vsel %vm506, %v4684, %v4688
        %v4690 = vrot.slane %v4606, 1
        %v4691 = vsel %vm506, %v4686, %v4690
        %v4692 = vrot.slane %v4607, 1
        %v4693 = vsel %vm506, %v4688, %v4692
        %v4694 = vrot.slane %v4608, 1
        %v4695 = vsel %vm506, %v4690, %v4694
        %v4696 = vrot.slane %v4609, 1
        %v4697 = vsel %vm506, %v4692, %v4696
        %v4698 = vrot.slane %v4610, 1
        %v4699 = vsel %vm506, %v4694, %v4698
        %v4700 = vrot.slane %v4611, 1
        %v4701 = vsel %vm506, %v4696, %v4700
        %v4702 = vrot.slane %v4612, 1
        %v4703 = vsel %vm506, %v4698, %v4702
        %v4704 = vrot.slane %v4613, 1
        %v4705 = vsel %vm506, %v4700, %v4704
        %v4706 = vrot.slane %v4614, 1
        %v4707 = vsel %vm506, %v4702, %v4706
        %v4708 = vrot.slane %v4615, 1
        %v4709 = vsel %vm506, %v4704, %v4708
        %v4742 = vmax.f32 %v4584, %v4650
        %v4743 = vmax.f32 %v4585, %v4653
        %v4744 = vmax.f32 %v4586, %v4655
        %v4745 = vmax.f32 %v4587, %v4657
        %v4746 = vmax.f32 %v4588, %v4659
        %v4747 = vmax.f32 %v4589, %v4661
        %v4748 = vmax.f32 %v4590, %v4663
        %v4749 = vmax.f32 %v4591, %v4665
        %v4750 = vmax.f32 %v4592, %v4667
        %v4751 = vmax.f32 %v4593, %v4669
        %v4752 = vmax.f32 %v4594, %v4671
        %v4753 = vmax.f32 %v4595, %v4673
        %v4754 = vmax.f32 %v4596, %v4675
        %v4755 = vmax.f32 %v4597, %v4677
        %v4756 = vmax.f32 %v4598, %v4679
        %v4757 = vmax.f32 %v4599, %v4681
        %v4758 = vmax.f32 %v4600, %v4683
        %v4759 = vmax.f32 %v4601, %v4685
        %v4760 = vmax.f32 %v4602, %v4687
        %v4761 = vmax.f32 %v4603, %v4689
        %v4762 = vmax.f32 %v4604, %v4691
        %v4763 = vmax.f32 %v4605, %v4693
        %v4764 = vmax.f32 %v4606, %v4695
        %v4765 = vmax.f32 %v4607, %v4697
        %v4766 = vmax.f32 %v4608, %v4699
        %v4767 = vmax.f32 %v4609, %v4701
        %v4768 = vmax.f32 %v4610, %v4703
        %v4769 = vmax.f32 %v4611, %v4705
        %v4770 = vmax.f32 %v4612, %v4707
        %v4771 = vmax.f32 %v4613, %v4709
        %v4772 = vmax.f32 %v4614, %v4706
        %v4773 = vmax.f32 %v4615, %v4708
        %4806 = vrot.lane.b32.xlu0 %v4742, 127
        %v4807 = vpop.permute.xlu0 %4806
        %4808 = vrot.lane.b32.xlu0 %v4743, 127
        %v4809 = vpop.permute.xlu0 %4808
        %4810 = vrot.lane.b32.xlu0 %v4744, 127
        %v4811 = vpop.permute.xlu0 %4810
        %4812 = vrot.lane.b32.xlu0 %v4745, 127
        %v4813 = vpop.permute.xlu0 %4812
        %4814 = vrot.lane.b32.xlu0 %v4746, 127
        %v4815 = vpop.permute.xlu0 %4814
        %4816 = vrot.lane.b32.xlu0 %v4747, 127
        %v4817 = vpop.permute.xlu0 %4816
        %4818 = vrot.lane.b32.xlu0 %v4748, 127
        %v4819 = vpop.permute.xlu0 %4818
        %4820 = vrot.lane.b32.xlu0 %v4749, 127
        %v4821 = vpop.permute.xlu0 %4820
        %4822 = vrot.lane.b32.xlu0 %v4750, 127
        %v4823 = vpop.permute.xlu0 %4822
        %4824 = vrot.lane.b32.xlu0 %v4751, 127
        %v4825 = vpop.permute.xlu0 %4824
        %4826 = vrot.lane.b32.xlu0 %v4752, 127
        %v4827 = vpop.permute.xlu0 %4826
        %4828 = vrot.lane.b32.xlu0 %v4753, 127
        %v4829 = vpop.permute.xlu0 %4828
        %4830 = vrot.lane.b32.xlu0 %v4754, 127
        %v4831 = vpop.permute.xlu0 %4830
        %4832 = vrot.lane.b32.xlu0 %v4755, 127
        %v4833 = vpop.permute.xlu0 %4832
        %4834 = vrot.lane.b32.xlu0 %v4756, 127
        %v4835 = vpop.permute.xlu0 %4834
        %4836 = vrot.lane.b32.xlu0 %v4757, 127
        %v4837 = vpop.permute.xlu0 %4836
        %4838 = vrot.lane.b32.xlu0 %v4758, 127
        %v4839 = vpop.permute.xlu0 %4838
        %4840 = vrot.lane.b32.xlu0 %v4759, 127
        %v4841 = vpop.permute.xlu0 %4840
        %4842 = vrot.lane.b32.xlu0 %v4760, 127
        %v4843 = vpop.permute.xlu0 %4842
        %4844 = vrot.lane.b32.xlu0 %v4761, 127
        %v4845 = vpop.permute.xlu0 %4844
        %4846 = vrot.lane.b32.xlu0 %v4762, 127
        %v4847 = vpop.permute.xlu0 %4846
        %4848 = vrot.lane.b32.xlu0 %v4763, 127
        %v4849 = vpop.permute.xlu0 %4848
        %4850 = vrot.lane.b32.xlu0 %v4764, 127
        %v4851 = vpop.permute.xlu0 %4850
        %4852 = vrot.lane.b32.xlu0 %v4765, 127
        %v4853 = vpop.permute.xlu0 %4852
        %4854 = vrot.lane.b32.xlu0 %v4766, 127
        %v4855 = vpop.permute.xlu0 %4854
        %4856 = vrot.lane.b32.xlu0 %v4767, 127
        %v4857 = vpop.permute.xlu0 %4856
        %4858 = vrot.lane.b32.xlu0 %v4768, 127
        %v4859 = vpop.permute.xlu0 %4858
        %4860 = vrot.lane.b32.xlu0 %v4769, 127
        %v4861 = vpop.permute.xlu0 %4860
        %4862 = vrot.lane.b32.xlu0 %v4770, 127
        %v4863 = vpop.permute.xlu0 %4862
        %4864 = vrot.lane.b32.xlu0 %v4771, 127
        %v4865 = vpop.permute.xlu0 %4864
        %4866 = vrot.lane.b32.xlu0 %v4772, 127
        %v4867 = vpop.permute.xlu0 %4866
        %4868 = vrot.lane.b32.xlu0 %v4773, 127
        %v4869 = vpop.permute.xlu0 %4868
        %v4870 = vsel %vm2160, %v4807, %v4809
        %v4871 = vsel %vm2160, %v4811, %v4813
        %v4872 = vsel %vm2160, %v4815, %v4817
        %v4873 = vsel %vm2160, %v4819, %v4821
        %v4874 = vsel %vm2160, %v4823, %v4825
        %v4875 = vsel %vm2160, %v4827, %v4829
        %v4876 = vsel %vm2160, %v4831, %v4833
        %v4877 = vsel %vm2160, %v4835, %v4837
        %v4878 = vsel %vm2160, %v4839, %v4841
        %v4879 = vsel %vm2160, %v4843, %v4845
        %v4880 = vsel %vm2160, %v4847, %v4849
        %v4881 = vsel %vm2160, %v4851, %v4853
        %v4882 = vsel %vm2160, %v4855, %v4857
        %v4883 = vsel %vm2160, %v4859, %v4861
        %v4884 = vsel %vm2160, %v4863, %v4865
        %v4885 = vsel %vm2160, %v4867, %v4869
        %v4918 = vmax.f32 %v4742, %v4870
        %v4919 = vmax.f32 %v4743, %v4809
        %v4920 = vmax.f32 %v4744, %v4871
        %v4921 = vmax.f32 %v4745, %v4813
        %v4922 = vmax.f32 %v4746, %v4872
        %v4923 = vmax.f32 %v4747, %v4817
        %v4924 = vmax.f32 %v4748, %v4873
        %v4925 = vmax.f32 %v4749, %v4821
        %v4926 = vmax.f32 %v4750, %v4874
        %v4927 = vmax.f32 %v4751, %v4825
        %v4928 = vmax.f32 %v4752, %v4875
        %v4929 = vmax.f32 %v4753, %v4829
        %v4930 = vmax.f32 %v4754, %v4876
        %v4931 = vmax.f32 %v4755, %v4833
        %v4932 = vmax.f32 %v4756, %v4877
        %v4933 = vmax.f32 %v4757, %v4837
        %v4934 = vmax.f32 %v4758, %v4878
        %v4935 = vmax.f32 %v4759, %v4841
        %v4936 = vmax.f32 %v4760, %v4879
        %v4937 = vmax.f32 %v4761, %v4845
        %v4938 = vmax.f32 %v4762, %v4880
        %v4939 = vmax.f32 %v4763, %v4849
        %v4940 = vmax.f32 %v4764, %v4881
        %v4941 = vmax.f32 %v4765, %v4853
        %v4942 = vmax.f32 %v4766, %v4882
        %v4943 = vmax.f32 %v4767, %v4857
        %v4944 = vmax.f32 %v4768, %v4883
        %v4945 = vmax.f32 %v4769, %v4861
        %v4946 = vmax.f32 %v4770, %v4884
        %v4947 = vmax.f32 %v4771, %v4865
        %v4948 = vmax.f32 %v4772, %v4885
        %v4949 = vmax.f32 %v4773, %v4869
        %v4950 = vpack.c.bf16 %v4920, %v4918
        %v4951 = vpack.c.bf16 %v4921, %v4919
        %v4952 = vpack.c.bf16 %v4924, %v4922
        %v4953 = vpack.c.bf16 %v4925, %v4923
        %v4954 = vpack.c.bf16 %v4928, %v4926
        %v4955 = vpack.c.bf16 %v4929, %v4927
        %v4956 = vpack.c.bf16 %v4932, %v4930
        %v4957 = vpack.c.bf16 %v4933, %v4931
        %v4958 = vpack.c.bf16 %v4936, %v4934
        %v4959 = vpack.c.bf16 %v4937, %v4935
        %v4960 = vpack.c.bf16 %v4940, %v4938
        %v4961 = vpack.c.bf16 %v4941, %v4939
        %v4962 = vpack.c.bf16 %v4944, %v4942
        %v4963 = vpack.c.bf16 %v4945, %v4943
        %v4964 = vpack.c.bf16 %v4948, %v4946
        %v4965 = vpack.c.bf16 %v4949, %v4947
        %v4966 = vld [vmem:[%s6] sm:$0xf]
        %v4968 = vsel %vm2441, %v4966, 0
        %v4971 = vand.u32 %v4964, %v2467
        %v4974 = vand.u32 %v4965, %v2467
        %4976 = vmatprep.subr.bf16.mxu0 %v4951
        %4977 = vmatpush1.bf16.msra.mxu0 %v4950
        %4978 = vmatprep.subr.bf16.mxu0 %v4953
        %4979 = vmatpush1.bf16.msra.mxu0 %v4952
        %4980 = vmatprep.subr.bf16.mxu0 %v4955
        %4981 = vmatpush1.bf16.msra.mxu0 %v4954
        %4982 = vmatprep.subr.bf16.mxu0 %v4957
        %4983 = vmatpush1.bf16.msra.mxu0 %v4956
        %4984 = vmatprep.subr.bf16.mxu0 %v4959
        %4985 = vmatpush1.bf16.msra.mxu0 %v4958
        %4986 = vmatprep.subr.bf16.mxu0 %v4961
        %4987 = vmatpush1.bf16.msra.mxu0 %v4960
        %4988 = vmatprep.subr.bf16.mxu0 %v4963
        %4989 = vmatpush1.bf16.msra.mxu0 %v4962
        %4990 = vmatprep.subr.bf16.mxu0 %v4974
        %4991 = vmatpush1.bf16.msra.mxu0 %v4971
        %4992 = vmatprep.subr.bf16.mxu0 0
        %4993 = vmatpush1.bf16.msra.mxu0 0
        %4994 = vmatprep.subr.bf16.mxu0 0
        %4995 = vmatpush1.bf16.msra.mxu0 0
        %4996 = vmatprep.subr.bf16.mxu0 0
        %4997 = vmatpush1.bf16.msra.mxu0 0
        %4998 = vmatprep.subr.bf16.mxu0 0
        %4999 = vmatpush1.bf16.msra.mxu0 0
        %5000 = vmatprep.subr.bf16.mxu0 0
        %5001 = vmatpush1.bf16.msra.mxu0 0
        %5002 = vmatprep.subr.bf16.mxu0 0
        %5003 = vmatpush1.bf16.msra.mxu0 0
        %5004 = vmatprep.subr.bf16.mxu0 0
        %5005 = vmatpush1.bf16.msra.mxu0 0
        %5006 = vmatprep.subr.bf16.mxu0 0
        %5007 = vmatpush1.bf16.msra.mxu0 0
        %5008 = vmatprep.mubr.bf16.mxu0 0
        %5009 = vmatmul.mubr.bf16.gmra.mrb[0].mxu0 %v4968
        %v5010 = vpop.f32.mrb[0].mxu0
        %v5011 = vadd.f32 0.0, %v5010
        %v5012 = vpop.f32.mrb[0].mxu0
        %v5013 = vadd.f32 0.0, %v5012
        %v5014 = vpop.f32.mrb[0].mxu0
        %v5015 = vpop.f32.mrb[0].mxu0
        %5016 = vdwg.mxu0
        %s5017 = scalar_lea.vmem %s6, 4
        %v5018 = vld [vmem:[%s5017] sm:$0xf]
        %v5020 = vsel %vm2441, %v5018, 0
        %5022 = vmatprep.subr.bf16.mxu0 %v4951
        %5023 = vmatpush1.bf16.msra.mxu0 %v4950
        %5024 = vmatprep.subr.bf16.mxu0 %v4953
        %5025 = vmatpush1.bf16.msra.mxu0 %v4952
        %5026 = vmatprep.subr.bf16.mxu0 %v4955
        %5027 = vmatpush1.bf16.msra.mxu0 %v4954
        %5028 = vmatprep.subr.bf16.mxu0 %v4957
        %5029 = vmatpush1.bf16.msra.mxu0 %v4956
        %5030 = vmatprep.subr.bf16.mxu0 %v4959
        %5031 = vmatpush1.bf16.msra.mxu0 %v4958
        %5032 = vmatprep.subr.bf16.mxu0 %v4961
        %5033 = vmatpush1.bf16.msra.mxu0 %v4960
        %5034 = vmatprep.subr.bf16.mxu0 %v4963
        %5035 = vmatpush1.bf16.msra.mxu0 %v4962
        %5036 = vmatprep.subr.bf16.mxu0 %v4974
        %5037 = vmatpush1.bf16.msra.mxu0 %v4971
        %5038 = vmatprep.subr.bf16.mxu0 0
        %5039 = vmatpush1.bf16.msra.mxu0 0
        %5040 = vmatprep.subr.bf16.mxu0 0
        %5041 = vmatpush1.bf16.msra.mxu0 0
        %5042 = vmatprep.subr.bf16.mxu0 0
        %5043 = vmatpush1.bf16.msra.mxu0 0
        %5044 = vmatprep.subr.bf16.mxu0 0
        %5045 = vmatpush1.bf16.msra.mxu0 0
        %5046 = vmatprep.subr.bf16.mxu0 0
        %5047 = vmatpush1.bf16.msra.mxu0 0
        %5048 = vmatprep.subr.bf16.mxu0 0
        %5049 = vmatpush1.bf16.msra.mxu0 0
        %5050 = vmatprep.subr.bf16.mxu0 0
        %5051 = vmatpush1.bf16.msra.mxu0 0
        %5052 = vmatprep.subr.bf16.mxu0 0
        %5053 = vmatpush1.bf16.msra.mxu0 0
        %5054 = vmatprep.mubr.bf16.mxu0 0
        %5055 = vmatmul.mubr.bf16.gmra.mrb[0].mxu0 %v5020
        %v5056 = vpop.f32.mrb[0].mxu0
        %v5057 = vadd.f32 0.0, %v5056
        %v5058 = vpop.f32.mrb[0].mxu0
        %v5059 = vadd.f32 0.0, %v5058
        %v5060 = vpop.f32.mrb[0].mxu0
        %v5061 = vpop.f32.mrb[0].mxu0
        %5062 = vdwg.mxu0
        %s5063 = scalar_lea.vmem %s6, 8
        %v5064 = vld [vmem:[%s5063] sm:$0xf]
        %v5066 = vsel %vm2441, %v5064, 0
        %5068 = vmatprep.subr.bf16.mxu0 %v4951
        %5069 = vmatpush1.bf16.msra.mxu0 %v4950
        %5070 = vmatprep.subr.bf16.mxu0 %v4953
        %5071 = vmatpush1.bf16.msra.mxu0 %v4952
        %5072 = vmatprep.subr.bf16.mxu0 %v4955
        %5073 = vmatpush1.bf16.msra.mxu0 %v4954
        %5074 = vmatprep.subr.bf16.mxu0 %v4957
        %5075 = vmatpush1.bf16.msra.mxu0 %v4956
        %5076 = vmatprep.subr.bf16.mxu0 %v4959
        %5077 = vmatpush1.bf16.msra.mxu0 %v4958
        %5078 = vmatprep.subr.bf16.mxu0 %v4961
        %5079 = vmatpush1.bf16.msra.mxu0 %v4960
        %5080 = vmatprep.subr.bf16.mxu0 %v4963
        %5081 = vmatpush1.bf16.msra.mxu0 %v4962
        %5082 = vmatprep.subr.bf16.mxu0 %v4974
        %5083 = vmatpush1.bf16.msra.mxu0 %v4971
        %5084 = vmatprep.subr.bf16.mxu0 0
        %5085 = vmatpush1.bf16.msra.mxu0 0
        %5086 = vmatprep.subr.bf16.mxu0 0
        %5087 = vmatpush1.bf16.msra.mxu0 0
        %5088 = vmatprep.subr.bf16.mxu0 0
        %5089 = vmatpush1.bf16.msra.mxu0 0
        %5090 = vmatprep.subr.bf16.mxu0 0
        %5091 = vmatpush1.bf16.msra.mxu0 0
        %5092 = vmatprep.subr.bf16.mxu0 0
        %5093 = vmatpush1.bf16.msra.mxu0 0
        %5094 = vmatprep.subr.bf16.mxu0 0
        %5095 = vmatpush1.bf16.msra.mxu0 0
        %5096 = vmatprep.subr.bf16.mxu0 0
        %5097 = vmatpush1.bf16.msra.mxu0 0
        %5098 = vmatprep.subr.bf16.mxu0 0
        %5099 = vmatpush1.bf16.msra.mxu0 0
        %5100 = vmatprep.mubr.bf16.mxu0 0
        %5101 = vmatmul.mubr.bf16.gmra.mrb[0].mxu0 %v5066
        %v5102 = vpop.f32.mrb[0].mxu0
        %v5103 = vadd.f32 0.0, %v5102
        %v5104 = vpop.f32.mrb[0].mxu0
        %v5105 = vadd.f32 0.0, %v5104
        %v5106 = vpop.f32.mrb[0].mxu0
        %v5107 = vpop.f32.mrb[0].mxu0
        %5108 = vdwg.mxu0
        %s5109 = scalar_lea.vmem %s6, 12
        %v5110 = vld [vmem:[%s5109] sm:$0xf]
        %v5112 = vsel %vm2441, %v5110, 0
        %5114 = vmatprep.subr.bf16.mxu0 %v4951
        %5115 = vmatpush1.bf16.msra.mxu0 %v4950
        %5116 = vmatprep.subr.bf16.mxu0 %v4953
        %5117 = vmatpush1.bf16.msra.mxu0 %v4952
        %5118 = vmatprep.subr.bf16.mxu0 %v4955
        %5119 = vmatpush1.bf16.msra.mxu0 %v4954
        %5120 = vmatprep.subr.bf16.mxu0 %v4957
        %5121 = vmatpush1.bf16.msra.mxu0 %v4956
        %5122 = vmatprep.subr.bf16.mxu0 %v4959
        %5123 = vmatpush1.bf16.msra.mxu0 %v4958
        %5124 = vmatprep.subr.bf16.mxu0 %v4961
        %5125 = vmatpush1.bf16.msra.mxu0 %v4960
        %5126 = vmatprep.subr.bf16.mxu0 %v4963
        %5127 = vmatpush1.bf16.msra.mxu0 %v4962
        %5128 = vmatprep.subr.bf16.mxu0 %v4974
        %5129 = vmatpush1.bf16.msra.mxu0 %v4971
        %5130 = vmatprep.subr.bf16.mxu0 0
        %5131 = vmatpush1.bf16.msra.mxu0 0
        %5132 = vmatprep.subr.bf16.mxu0 0
        %5133 = vmatpush1.bf16.msra.mxu0 0
        %5134 = vmatprep.subr.bf16.mxu0 0
        %5135 = vmatpush1.bf16.msra.mxu0 0
        %5136 = vmatprep.subr.bf16.mxu0 0
        %5137 = vmatpush1.bf16.msra.mxu0 0
        %5138 = vmatprep.subr.bf16.mxu0 0
        %5139 = vmatpush1.bf16.msra.mxu0 0
        %5140 = vmatprep.subr.bf16.mxu0 0
        %5141 = vmatpush1.bf16.msra.mxu0 0
        %5142 = vmatprep.subr.bf16.mxu0 0
        %5143 = vmatpush1.bf16.msra.mxu0 0
        %5144 = vmatprep.subr.bf16.mxu0 0
        %5145 = vmatpush1.bf16.msra.mxu0 0
        %5146 = vmatprep.mubr.bf16.mxu0 0
        %5147 = vmatmul.mubr.bf16.gmra.mrb[0].mxu0 %v5112
        %v5148 = vpop.f32.mrb[0].mxu0
        %v5149 = vadd.f32 0.0, %v5148
        %v5150 = vpop.f32.mrb[0].mxu0
        %v5151 = vadd.f32 0.0, %v5150
        %v5152 = vpop.f32.mrb[0].mxu0
        %v5153 = vpop.f32.mrb[0].mxu0
        %5154 = vdwg.mxu0
        %s5155 = scalar_lea.vmem %s6, 16
        %v5156 = vld [vmem:[%s5155] sm:$0xf]
        %v5158 = vsel %vm2441, %v5156, 0
        %5160 = vmatprep.subr.bf16.mxu0 %v4951
        %5161 = vmatpush1.bf16.msra.mxu0 %v4950
        %5162 = vmatprep.subr.bf16.mxu0 %v4953
        %5163 = vmatpush1.bf16.msra.mxu0 %v4952
        %5164 = vmatprep.subr.bf16.mxu0 %v4955
        %5165 = vmatpush1.bf16.msra.mxu0 %v4954
        %5166 = vmatprep.subr.bf16.mxu0 %v4957
        %5167 = vmatpush1.bf16.msra.mxu0 %v4956
        %5168 = vmatprep.subr.bf16.mxu0 %v4959
        %5169 = vmatpush1.bf16.msra.mxu0 %v4958
        %5170 = vmatprep.subr.bf16.mxu0 %v4961
        %5171 = vmatpush1.bf16.msra.mxu0 %v4960
        %5172 = vmatprep.subr.bf16.mxu0 %v4963
        %5173 = vmatpush1.bf16.msra.mxu0 %v4962
        %5174 = vmatprep.subr.bf16.mxu0 %v4974
        %5175 = vmatpush1.bf16.msra.mxu0 %v4971
        %5176 = vmatprep.subr.bf16.mxu0 0
        %5177 = vmatpush1.bf16.msra.mxu0 0
        %5178 = vmatprep.subr.bf16.mxu0 0
        %5179 = vmatpush1.bf16.msra.mxu0 0
        %5180 = vmatprep.subr.bf16.mxu0 0
        %5181 = vmatpush1.bf16.msra.mxu0 0
        %5182 = vmatprep.subr.bf16.mxu0 0
        %5183 = vmatpush1.bf16.msra.mxu0 0
        %5184 = vmatprep.subr.bf16.mxu0 0
        %5185 = vmatpush1.bf16.msra.mxu0 0
        %5186 = vmatprep.subr.bf16.mxu0 0
        %5187 = vmatpush1.bf16.msra.mxu0 0
        %5188 = vmatprep.subr.bf16.mxu0 0
        %5189 = vmatpush1.bf16.msra.mxu0 0
        %5190 = vmatprep.subr.bf16.mxu0 0
        %5191 = vmatpush1.bf16.msra.mxu0 0
        %5192 = vmatprep.mubr.bf16.mxu0 0
        %5193 = vmatmul.mubr.bf16.gmra.mrb[0].mxu0 %v5158
        %v5194 = vpop.f32.mrb[0].mxu0
        %v5195 = vadd.f32 0.0, %v5194
        %v5196 = vpop.f32.mrb[0].mxu0
        %v5197 = vadd.f32 0.0, %v5196
        %v5198 = vpop.f32.mrb[0].mxu0
        %v5199 = vpop.f32.mrb[0].mxu0
        %5200 = vdwg.mxu0
        %5203 = vrot.lane.b32.xlu0 %v5057, 31
        %v5204 = vpop.permute.xlu0 %5203
        %5205 = vrot.lane.b32.xlu0 %v5059, 31
        %v5206 = vpop.permute.xlu0 %5205
        %vm5207 = vcmask 252928
        %v5208 = vsel %vm5207, %v5204, %v5206
        %5213 = vrot.lane.b32.xlu0 %v5103, 62
        %v5214 = vpop.permute.xlu0 %5213
        %5215 = vrot.lane.b32.xlu0 %v5105, 62
        %v5216 = vpop.permute.xlu0 %5215
        %vm5217 = vcmask 506880
        %v5218 = vsel %vm5217, %v5214, %v5216
        %5223 = vrot.lane.b32.xlu0 %v5149, 93
        %v5224 = vpop.permute.xlu0 %5223
        %5225 = vrot.lane.b32.xlu0 %v5151, 93
        %v5226 = vpop.permute.xlu0 %5225
        %vm5227 = vcmask 760832
        %v5228 = vsel %vm5227, %v5224, %v5226
        %5233 = vrot.lane.b32.xlu0 %v5195, 124
        %v5234 = vpop.permute.xlu0 %5233
        %5235 = vrot.lane.b32.xlu0 %v5197, 124
        %v5236 = vpop.permute.xlu0 %5235
        %vm5237 = vcmask 1014784
        %v5238 = vsel %vm5237, %v5234, %v5236
        %v5242 = vsel %vm5207, %v5013, %v5204
        %v5243 = vsel %vm5217, %v5208, %v5214
        %v5244 = vsel %vm5227, %v5218, %v5224
        %v5245 = vsel %vm5237, %v5228, %v5234
        %v5246 = vpack.c.bf16 %v5011, %v5011
        %v5247 = vpack.c.bf16 %v5242, %v5242
        %v5248 = vpack.c.bf16 %v5243, %v5243
        %v5249 = vpack.c.bf16 %v5244, %v5244
        %v5250 = vpack.c.bf16 %v5245, %v5245
        %v5251 = vpack.c.bf16 %v5238, %v5238
        %v5252 = vpack.c.bf16 %v5236, %v5236
        %v5253 = vld [vmem:[%s7] sm:$0xf]
        %v5254 = vld [vmem:[%s7 + $0x4] sm:$0xf]
        %v5255 = vld [vmem:[%s7 + $0x8] sm:$0xf]
        %v5256 = vld [vmem:[%s7 + $0xc] sm:$0xf]
        %v5257 = vld [vmem:[%s7 + $0x10] sm:$0xf]
        %v5258 = vld [vmem:[%s7 + $0x14] sm:$0xf]
        %v5259 = vld [vmem:[%s7 + $0x18] sm:$0xf]
        %v5260 = vld [vmem:[%s7 + $0x1c] sm:$0xf]
        %v5261 = vld [vmem:[%s7 + $0x20] sm:$0xf]
        %v5262 = vld [vmem:[%s7 + $0x24] sm:$0xf]
        %v5263 = vld [vmem:[%s7 + $0x28] sm:$0xf]
        %v5264 = vld [vmem:[%s7 + $0x2c] sm:$0xf]
        %v5265 = vld [vmem:[%s7 + $0x30] sm:$0xf]
        %v5266 = vld [vmem:[%s7 + $0x34] sm:$0xf]
        %v5267 = vld [vmem:[%s7 + $0x38] sm:$0xf]
        %v5268 = vld [vmem:[%s7 + $0x3c] sm:$0xf]
        %v5269 = vld [vmem:[%s7 + $0x40] sm:$0xf]
        %v5270 = vld [vmem:[%s7 + $0x44] sm:$0xf]
        %v5271 = vld [vmem:[%s7 + $0x48] sm:$0xf]
        %v5272 = vld [vmem:[%s7 + $0x4c] sm:$0xf]
        %v5273 = vld [vmem:[%s7 + $0x50] sm:$0xf]
        %v5274 = vld [vmem:[%s7 + $0x54] sm:$0xf]
        %v5275 = vld [vmem:[%s7 + $0x58] sm:$0xf]
        %v5276 = vld [vmem:[%s7 + $0x5c] sm:$0xf]
        %v5277 = vld [vmem:[%s7 + $0x60] sm:$0xf]
        %v5278 = vld [vmem:[%s7 + $0x64] sm:$0xf]
        %v5279 = vld [vmem:[%s7 + $0x68] sm:$0xf]
        %v5280 = vld [vmem:[%s7 + $0x6c] sm:$0xf]
        %v5281 = vld [vmem:[%s7 + $0x70] sm:$0xf]
        %v5282 = vld [vmem:[%s7 + $0x74] sm:$0xf]
        %v5283 = vld [vmem:[%s7 + $0x78] sm:$0xf]
        %v5284 = vld [vmem:[%s7 + $0x7c] sm:$0xf]
        %v5285 = vld [vmem:[%s7 + $0x80] sm:$0xf]
        %v5286 = vld [vmem:[%s7 + $0x84] sm:$0xf]
        %v5287 = vld [vmem:[%s7 + $0x88] sm:$0xf]
        %v5288 = vld [vmem:[%s7 + $0x8c] sm:$0xf]
        %v5289 = vld [vmem:[%s7 + $0x90] sm:$0xf]
        %v5290 = vld [vmem:[%s7 + $0x94] sm:$0xf]
        %v5291 = vld [vmem:[%s7 + $0x98] sm:$0xf]
        %v5292 = vld [vmem:[%s7 + $0x9c] sm:$0xf]
        %v5293 = vld [vmem:[%s7 + $0xa0] sm:$0xf]
        %v5294 = vld [vmem:[%s7 + $0xa4] sm:$0xf]
        %v5295 = vld [vmem:[%s7 + $0xa8] sm:$0xf]
        %v5296 = vld [vmem:[%s7 + $0xac] sm:$0xf]
        %v5297 = vld [vmem:[%s7 + $0xb0] sm:$0xf]
        %v5298 = vld [vmem:[%s7 + $0xb4] sm:$0xf]
        %v5299 = vld [vmem:[%s7 + $0xb8] sm:$0xf]
        %v5300 = vld [vmem:[%s7 + $0xbc] sm:$0xf]
        %v5301 = vld [vmem:[%s7 + $0xc0] sm:$0xf]
        %v5302 = vld [vmem:[%s7 + $0xc4] sm:$0xf]
        %v5303 = vld [vmem:[%s7 + $0xc8] sm:$0xf]
        %v5304 = vld [vmem:[%s7 + $0xcc] sm:$0xf]
        %v5305 = vld [vmem:[%s7 + $0xd0] sm:$0xf]
        %v5306 = vld [vmem:[%s7 + $0xd4] sm:$0xf]
        %v5307 = vld [vmem:[%s7 + $0xd8] sm:$0xf]
        %v5308 = vld [vmem:[%s7 + $0xdc] sm:$0xf]
        %v5309 = vld [vmem:[%s7 + $0xe0] sm:$0xf]
        %v5310 = vld [vmem:[%s7 + $0xe4] sm:$0xf]
        %v5311 = vld [vmem:[%s7 + $0xe8] sm:$0xf]
        %v5312 = vld [vmem:[%s7 + $0xec] sm:$0xf]
        %v5313 = vld [vmem:[%s7 + $0xf0] sm:$0xf]
        %v5314 = vld [vmem:[%s7 + $0xf4] sm:$0xf]
        %v5315 = vld [vmem:[%s7 + $0xf8] sm:$0xf]
        %v5316 = vld [vmem:[%s7 + $0xfc] sm:$0xf]
        %v5317 = vld [vmem:[%s7 + $0x100] sm:$0xf]
        %v5318 = vld [vmem:[%s7 + $0x104] sm:$0xf]
        %v5319 = vld [vmem:[%s7 + $0x108] sm:$0xf]
        %v5320 = vld [vmem:[%s7 + $0x10c] sm:$0xf]
        %v5321 = vld [vmem:[%s7 + $0x110] sm:$0xf]
        %v5322 = vld [vmem:[%s7 + $0x114] sm:$0xf]
        %v5323 = vld [vmem:[%s7 + $0x118] sm:$0xf]
        %v5324 = vld [vmem:[%s7 + $0x11c] sm:$0xf]
        %v5325 = vld [vmem:[%s7 + $0x120] sm:$0xf]
        %v5326 = vld [vmem:[%s7 + $0x124] sm:$0xf]
        %v5327 = vld [vmem:[%s7 + $0x128] sm:$0xf]
        %v5328 = vld [vmem:[%s7 + $0x12c] sm:$0xf]
        %v5329 = vld [vmem:[%s7 + $0x130] sm:$0xf]
        %v5330 = vld [vmem:[%s7 + $0x134] sm:$0xf]
        %v5331 = vld [vmem:[%s7 + $0x138] sm:$0xf]
        %v5332 = vld [vmem:[%s7 + $0x13c] sm:$0xf]
        %v5333 = vld [vmem:[%s7 + $0x140] sm:$0xf]
        %v5334 = vld [vmem:[%s7 + $0x144] sm:$0xf]
        %v5335 = vld [vmem:[%s7 + $0x148] sm:$0xf]
        %v5336 = vld [vmem:[%s7 + $0x14c] sm:$0xf]
        %v5337 = vld [vmem:[%s7 + $0x150] sm:$0xf]
        %v5338 = vld [vmem:[%s7 + $0x154] sm:$0xf]
        %v5339 = vld [vmem:[%s7 + $0x158] sm:$0xf]
        %v5340 = vld [vmem:[%s7 + $0x15c] sm:$0xf]
        %v5341 = vld [vmem:[%s7 + $0x160] sm:$0xf]
        %v5342 = vld [vmem:[%s7 + $0x164] sm:$0xf]
        %v5343 = vld [vmem:[%s7 + $0x168] sm:$0xf]
        %v5344 = vld [vmem:[%s7 + $0x16c] sm:$0xf]
        %v5345 = vld [vmem:[%s7 + $0x170] sm:$0xf]
        %v5346 = vld [vmem:[%s7 + $0x174] sm:$0xf]
        %v5347 = vld [vmem:[%s7 + $0x178] sm:$0xf]
        %v5348 = vld [vmem:[%s7 + $0x17c] sm:$0xf]
        %v5349 = vld [vmem:[%s7 + $0x180] sm:$0xf]
        %v5350 = vld [vmem:[%s7 + $0x184] sm:$0xf]
        %v5351 = vld [vmem:[%s7 + $0x188] sm:$0xf]
        %v5352 = vld [vmem:[%s7 + $0x18c] sm:$0x3]
        %v5353 = vld [vmem:[%s8] sm:$0x1]
        %v5355 = vlaneseq
        %v5356 = vshrl.u32 %v5355, 7
        %v5357 = vsub.s32 0, %v5356
        %v5358 = vrot.slane %v5353, %v5357
        %v5460 = vunpack.c.l.b16 %v5253
        %v5461 = vunpack.c.l.b16 %v5254
        %v5462 = vunpack.c.l.b16 %v5255
        %v5463 = vunpack.c.l.b16 %v5256
        %v5464 = vunpack.c.l.b16 %v5257
        %v5465 = vunpack.c.l.b16 %v5258
        %v5466 = vunpack.c.l.b16 %v5259
        %v5467 = vunpack.c.l.b16 %v5260
        %v5468 = vunpack.c.l.b16 %v5261
        %v5469 = vunpack.c.l.b16 %v5262
        %v5470 = vunpack.c.l.b16 %v5263
        %v5471 = vunpack.c.l.b16 %v5264
        %v5472 = vunpack.c.l.b16 %v5265
        %v5473 = vunpack.c.l.b16 %v5266
        %v5474 = vunpack.c.l.b16 %v5267
        %v5475 = vunpack.c.l.b16 %v5268
        %v5476 = vunpack.c.l.b16 %v5269
        %v5477 = vunpack.c.l.b16 %v5270
        %v5478 = vunpack.c.l.b16 %v5271
        %v5479 = vunpack.c.l.b16 %v5272
        %v5480 = vunpack.c.l.b16 %v5273
        %v5481 = vunpack.c.l.b16 %v5274
        %v5482 = vunpack.c.l.b16 %v5275
        %v5483 = vunpack.c.l.b16 %v5276
        %v5484 = vunpack.c.l.b16 %v5277
        %v5485 = vunpack.c.l.b16 %v5278
        %v5486 = vunpack.c.l.b16 %v5279
        %v5487 = vunpack.c.l.b16 %v5280
        %v5488 = vunpack.c.l.b16 %v5281
        %v5489 = vunpack.c.l.b16 %v5282
        %v5490 = vunpack.c.l.b16 %v5283
        %v5491 = vunpack.c.l.b16 %v5284
        %v5492 = vunpack.c.l.b16 %v5285
        %v5493 = vunpack.c.l.b16 %v5286
        %v5494 = vunpack.c.l.b16 %v5287
        %v5495 = vunpack.c.l.b16 %v5288
        %v5496 = vunpack.c.l.b16 %v5289
        %v5497 = vunpack.c.l.b16 %v5290
        %v5498 = vunpack.c.l.b16 %v5291
        %v5499 = vunpack.c.l.b16 %v5292
        %v5500 = vunpack.c.l.b16 %v5293
        %v5501 = vunpack.c.l.b16 %v5294
        %v5502 = vunpack.c.l.b16 %v5295
        %v5503 = vunpack.c.l.b16 %v5296
        %v5504 = vunpack.c.l.b16 %v5297
        %v5505 = vunpack.c.l.b16 %v5298
        %v5506 = vunpack.c.l.b16 %v5299
        %v5507 = vunpack.c.l.b16 %v5300
        %v5508 = vunpack.c.l.b16 %v5301
        %v5509 = vunpack.c.l.b16 %v5302
        %v5510 = vunpack.c.l.b16 %v5303
        %v5511 = vunpack.c.l.b16 %v5304
        %v5512 = vunpack.c.l.b16 %v5305
        %v5513 = vunpack.c.l.b16 %v5306
        %v5514 = vunpack.c.l.b16 %v5307
        %v5515 = vunpack.c.l.b16 %v5308
        %v5516 = vunpack.c.l.b16 %v5309
        %v5517 = vunpack.c.l.b16 %v5310
        %v5518 = vunpack.c.l.b16 %v5311
        %v5519 = vunpack.c.l.b16 %v5312
        %v5520 = vunpack.c.l.b16 %v5313
        %v5521 = vunpack.c.l.b16 %v5314
        %v5522 = vunpack.c.l.b16 %v5315
        %v5523 = vunpack.c.l.b16 %v5316
        %v5524 = vunpack.c.l.b16 %v5317
        %v5525 = vunpack.c.l.b16 %v5318
        %v5526 = vunpack.c.l.b16 %v5319
        %v5527 = vunpack.c.l.b16 %v5320
        %v5528 = vunpack.c.l.b16 %v5321
        %v5529 = vunpack.c.l.b16 %v5322
        %v5530 = vunpack.c.l.b16 %v5323
        %v5531 = vunpack.c.l.b16 %v5324
        %v5532 = vunpack.c.l.b16 %v5325
        %v5533 = vunpack.c.l.b16 %v5326
        %v5534 = vunpack.c.l.b16 %v5327
        %v5535 = vunpack.c.l.b16 %v5328
        %v5536 = vunpack.c.l.b16 %v5329
        %v5537 = vunpack.c.l.b16 %v5330
        %v5538 = vunpack.c.l.b16 %v5331
        %v5539 = vunpack.c.l.b16 %v5332
        %v5540 = vunpack.c.l.b16 %v5333
        %v5541 = vunpack.c.l.b16 %v5334
        %v5542 = vunpack.c.l.b16 %v5335
        %v5543 = vunpack.c.l.b16 %v5336
        %v5544 = vunpack.c.l.b16 %v5337
        %v5545 = vunpack.c.l.b16 %v5338
        %v5546 = vunpack.c.l.b16 %v5339
        %v5547 = vunpack.c.l.b16 %v5340
        %v5548 = vunpack.c.l.b16 %v5341
        %v5549 = vunpack.c.l.b16 %v5342
        %v5550 = vunpack.c.l.b16 %v5343
        %v5551 = vunpack.c.l.b16 %v5344
        %v5552 = vunpack.c.l.b16 %v5345
        %v5553 = vunpack.c.l.b16 %v5346
        %v5554 = vunpack.c.l.b16 %v5347
        %v5555 = vunpack.c.l.b16 %v5348
        %v5556 = vunpack.c.l.b16 %v5349
        %v5557 = vunpack.c.l.b16 %v5350
        %v5558 = vunpack.c.l.b16 %v5351
        %v5559 = vunpack.c.l.b16 %v5352
        %v5560 = vpack.c.b16 %v5461, %v5460
        %v5561 = vpack.c.b16 %v5463, %v5462
        %v5562 = vpack.c.b16 %v5465, %v5464
        %v5563 = vpack.c.b16 %v5467, %v5466
        %v5564 = vpack.c.b16 %v5469, %v5468
        %v5565 = vpack.c.b16 %v5471, %v5470
        %v5566 = vpack.c.b16 %v5473, %v5472
        %v5567 = vpack.c.b16 %v5475, %v5474
        %v5568 = vpack.c.b16 %v5477, %v5476
        %v5569 = vpack.c.b16 %v5479, %v5478
        %v5570 = vpack.c.b16 %v5481, %v5480
        %v5571 = vpack.c.b16 %v5483, %v5482
        %v5572 = vpack.c.b16 %v5485, %v5484
        %v5573 = vpack.c.b16 %v5487, %v5486
        %v5574 = vpack.c.b16 %v5489, %v5488
        %v5575 = vpack.c.b16 %v5491, %v5490
        %v5576 = vpack.c.b16 %v5493, %v5492
        %v5577 = vpack.c.b16 %v5495, %v5494
        %v5578 = vpack.c.b16 %v5497, %v5496
        %v5579 = vpack.c.b16 %v5499, %v5498
        %v5580 = vpack.c.b16 %v5501, %v5500
        %v5581 = vpack.c.b16 %v5503, %v5502
        %v5582 = vpack.c.b16 %v5505, %v5504
        %v5583 = vpack.c.b16 %v5507, %v5506
        %v5584 = vpack.c.b16 %v5509, %v5508
        %v5585 = vpack.c.b16 %v5511, %v5510
        %v5586 = vpack.c.b16 %v5513, %v5512
        %v5587 = vpack.c.b16 %v5515, %v5514
        %v5588 = vpack.c.b16 %v5517, %v5516
        %v5589 = vpack.c.b16 %v5519, %v5518
        %v5590 = vpack.c.b16 %v5521, %v5520
        %v5591 = vpack.c.b16 %v5523, %v5522
        %v5592 = vpack.c.b16 %v5525, %v5524
        %v5593 = vpack.c.b16 %v5527, %v5526
        %v5594 = vpack.c.b16 %v5529, %v5528
        %v5595 = vpack.c.b16 %v5531, %v5530
        %v5596 = vpack.c.b16 %v5533, %v5532
        %v5597 = vpack.c.b16 %v5535, %v5534
        %v5598 = vpack.c.b16 %v5537, %v5536
        %v5599 = vpack.c.b16 %v5539, %v5538
        %v5600 = vpack.c.b16 %v5541, %v5540
        %v5601 = vpack.c.b16 %v5543, %v5542
        %v5602 = vpack.c.b16 %v5545, %v5544
        %v5603 = vpack.c.b16 %v5547, %v5546
        %v5604 = vpack.c.b16 %v5549, %v5548
        %v5605 = vpack.c.b16 %v5551, %v5550
        %v5606 = vpack.c.b16 %v5553, %v5552
        %v5607 = vpack.c.b16 %v5555, %v5554
        %v5608 = vpack.c.b16 %v5557, %v5556
        %v5609 = vpack.c.b16 %v5559, %v5558
        %vm5659 = vcmask 220160
        %v5661 = vsel %vm5659, %v5252, 0
        %v5664 = vand.u32 %v5609, %v2467
        %5666 = vmatprep.subr.bf16.mxu0 0
        %5667 = vmatpush1.bf16.msra.mxu0 %v5560
        %5668 = vmatprep.subr.bf16.mxu0 0
        %5669 = vmatpush1.bf16.msra.mxu0 %v5561
        %5670 = vmatprep.subr.bf16.mxu0 0
        %5671 = vmatpush1.bf16.msra.mxu0 %v5562
        %5672 = vmatprep.subr.bf16.mxu0 0
        %5673 = vmatpush1.bf16.msra.mxu0 %v5563
        %5674 = vmatprep.subr.bf16.mxu0 0
        %5675 = vmatpush1.bf16.msra.mxu0 %v5564
        %5676 = vmatprep.subr.bf16.mxu0 0
        %5677 = vmatpush1.bf16.msra.mxu0 %v5565
        %5678 = vmatprep.subr.bf16.mxu0 0
        %5679 = vmatpush1.bf16.msra.mxu0 %v5566
        %5680 = vmatprep.subr.bf16.mxu0 0
        %5681 = vmatpush1.bf16.msra.mxu0 %v5567
        %5682 = vmatprep.subr.bf16.mxu0 0
        %5683 = vmatpush1.bf16.msra.mxu0 %v5568
        %5684 = vmatprep.subr.bf16.mxu0 0
        %5685 = vmatpush1.bf16.msra.mxu0 %v5569
        %5686 = vmatprep.subr.bf16.mxu0 0
        %5687 = vmatpush1.bf16.msra.mxu0 %v5570
        %5688 = vmatprep.subr.bf16.mxu0 0
        %5689 = vmatpush1.bf16.msra.mxu0 %v5571
        %5690 = vmatprep.subr.bf16.mxu0 0
        %5691 = vmatpush1.bf16.msra.mxu0 %v5572
        %5692 = vmatprep.subr.bf16.mxu0 0
        %5693 = vmatpush1.bf16.msra.mxu0 %v5573
        %5694 = vmatprep.subr.bf16.mxu0 0
        %5695 = vmatpush1.bf16.msra.mxu0 %v5574
        %5696 = vmatprep.subr.bf16.mxu0 0
        %5697 = vmatpush1.bf16.msra.mxu0 %v5575
        %5698 = vmatprep.mubr.bf16.mxu0 %v5247
        %5699 = vmatmul.mubr.bf16.gmra.mrb[0].mxu0 %v5246
        %v5700 = vpop.f32.mrb[0].mxu0
        %v5701 = vadd.f32 %v5358, %v5700
        %v5702 = vpop.f32.mrb[0].mxu0
        %v5703 = vpop.f32.mrb[0].mxu0
        %v5704 = vpop.f32.mrb[0].mxu0
        %5705 = vdwg.mxu0
        %5706 = vmatprep.subr.bf16.mxu0 0
        %5707 = vmatpush1.bf16.msra.mxu0 %v5576
        %5708 = vmatprep.subr.bf16.mxu0 0
        %5709 = vmatpush1.bf16.msra.mxu0 %v5577
        %5710 = vmatprep.subr.bf16.mxu0 0
        %5711 = vmatpush1.bf16.msra.mxu0 %v5578
        %5712 = vmatprep.subr.bf16.mxu0 0
        %5713 = vmatpush1.bf16.msra.mxu0 %v5579
        %5714 = vmatprep.subr.bf16.mxu0 0
        %5715 = vmatpush1.bf16.msra.mxu0 %v5580
        %5716 = vmatprep.subr.bf16.mxu0 0
        %5717 = vmatpush1.bf16.msra.mxu0 %v5581
        %5718 = vmatprep.subr.bf16.mxu0 0
        %5719 = vmatpush1.bf16.msra.mxu0 %v5582
        %5720 = vmatprep.subr.bf16.mxu0 0
        %5721 = vmatpush1.bf16.msra.mxu0 %v5583
        %5722 = vmatprep.subr.bf16.mxu0 0
        %5723 = vmatpush1.bf16.msra.mxu0 %v5584
        %5724 = vmatprep.subr.bf16.mxu0 0
        %5725 = vmatpush1.bf16.msra.mxu0 %v5585
        %5726 = vmatprep.subr.bf16.mxu0 0
        %5727 = vmatpush1.bf16.msra.mxu0 %v5586
        %5728 = vmatprep.subr.bf16.mxu0 0
        %5729 = vmatpush1.bf16.msra.mxu0 %v5587
        %5730 = vmatprep.subr.bf16.mxu0 0
        %5731 = vmatpush1.bf16.msra.mxu0 %v5588
        %5732 = vmatprep.subr.bf16.mxu0 0
        %5733 = vmatpush1.bf16.msra.mxu0 %v5589
        %5734 = vmatprep.subr.bf16.mxu0 0
        %5735 = vmatpush1.bf16.msra.mxu0 %v5590
        %5736 = vmatprep.subr.bf16.mxu0 0
        %5737 = vmatpush1.bf16.msra.mxu0 %v5591
        %5738 = vmatprep.mubr.bf16.mxu0 %v5249
        %5739 = vmatmul.mubr.bf16.gmra.mrb[0].mxu0 %v5248
        %v5740 = vpop.f32.mrb[0].mxu0
        %v5741 = vadd.f32 %v5701, %v5740
        %v5742 = vpop.f32.mrb[0].mxu0
        %v5743 = vpop.f32.mrb[0].mxu0
        %v5744 = vpop.f32.mrb[0].mxu0
        %5745 = vdwg.mxu0
        %5746 = vmatprep.subr.bf16.mxu0 0
        %5747 = vmatpush1.bf16.msra.mxu0 %v5592
        %5748 = vmatprep.subr.bf16.mxu0 0
        %5749 = vmatpush1.bf16.msra.mxu0 %v5593
        %5750 = vmatprep.subr.bf16.mxu0 0
        %5751 = vmatpush1.bf16.msra.mxu0 %v5594
        %5752 = vmatprep.subr.bf16.mxu0 0
        %5753 = vmatpush1.bf16.msra.mxu0 %v5595
        %5754 = vmatprep.subr.bf16.mxu0 0
        %5755 = vmatpush1.bf16.msra.mxu0 %v5596
        %5756 = vmatprep.subr.bf16.mxu0 0
        %5757 = vmatpush1.bf16.msra.mxu0 %v5597
        %5758 = vmatprep.subr.bf16.mxu0 0
        %5759 = vmatpush1.bf16.msra.mxu0 %v5598
        %5760 = vmatprep.subr.bf16.mxu0 0
        %5761 = vmatpush1.bf16.msra.mxu0 %v5599
        %5762 = vmatprep.subr.bf16.mxu0 0
        %5763 = vmatpush1.bf16.msra.mxu0 %v5600
        %5764 = vmatprep.subr.bf16.mxu0 0
        %5765 = vmatpush1.bf16.msra.mxu0 %v5601
        %5766 = vmatprep.subr.bf16.mxu0 0
        %5767 = vmatpush1.bf16.msra.mxu0 %v5602
        %5768 = vmatprep.subr.bf16.mxu0 0
        %5769 = vmatpush1.bf16.msra.mxu0 %v5603
        %5770 = vmatprep.subr.bf16.mxu0 0
        %5771 = vmatpush1.bf16.msra.mxu0 %v5604
        %5772 = vmatprep.subr.bf16.mxu0 0
        %5773 = vmatpush1.bf16.msra.mxu0 %v5605
        %5774 = vmatprep.subr.bf16.mxu0 0
        %5775 = vmatpush1.bf16.msra.mxu0 %v5606
        %5776 = vmatprep.subr.bf16.mxu0 0
        %5777 = vmatpush1.bf16.msra.mxu0 %v5607
        %5778 = vmatprep.mubr.bf16.mxu0 %v5251
        %5779 = vmatmul.mubr.bf16.gmra.mrb[0].mxu0 %v5250
        %v5780 = vpop.f32.mrb[0].mxu0
        %v5781 = vadd.f32 %v5741, %v5780
        %v5782 = vpop.f32.mrb[0].mxu0
        %v5783 = vpop.f32.mrb[0].mxu0
        %v5784 = vpop.f32.mrb[0].mxu0
        %5785 = vdwg.mxu0
        %5786 = vmatprep.subr.bf16.mxu0 0
        %5787 = vmatpush1.bf16.msra.mxu0 %v5608
        %5788 = vmatprep.subr.bf16.mxu0 0
        %5789 = vmatpush1.bf16.msra.mxu0 %v5664
        %5790 = vmatprep.subr.bf16.mxu0 0
        %5791 = vmatpush1.bf16.msra.mxu0 0
        %5792 = vmatprep.subr.bf16.mxu0 0
        %5793 = vmatpush1.bf16.msra.mxu0 0
        %5794 = vmatprep.subr.bf16.mxu0 0
        %5795 = vmatpush1.bf16.msra.mxu0 0
        %5796 = vmatprep.subr.bf16.mxu0 0
        %5797 = vmatpush1.bf16.msra.mxu0 0
        %5798 = vmatprep.subr.bf16.mxu0 0
        %5799 = vmatpush1.bf16.msra.mxu0 0
        %5800 = vmatprep.subr.bf16.mxu0 0
        %5801 = vmatpush1.bf16.msra.mxu0 0
        %5802 = vmatprep.subr.bf16.mxu0 0
        %5803 = vmatpush1.bf16.msra.mxu0 0
        %5804 = vmatprep.subr.bf16.mxu0 0
        %5805 = vmatpush1.bf16.msra.mxu0 0
        %5806 = vmatprep.subr.bf16.mxu0 0
        %5807 = vmatpush1.bf16.msra.mxu0 0
        %5808 = vmatprep.subr.bf16.mxu0 0
        %5809 = vmatpush1.bf16.msra.mxu0 0
        %5810 = vmatprep.subr.bf16.mxu0 0
        %5811 = vmatpush1.bf16.msra.mxu0 0
        %5812 = vmatprep.subr.bf16.mxu0 0
        %5813 = vmatpush1.bf16.msra.mxu0 0
        %5814 = vmatprep.subr.bf16.mxu0 0
        %5815 = vmatpush1.bf16.msra.mxu0 0
        %5816 = vmatprep.subr.bf16.mxu0 0
        %5817 = vmatpush1.bf16.msra.mxu0 0
        %5818 = vmatprep.mubr.bf16.mxu0 0
        %5819 = vmatmul.mubr.bf16.gmra.mrb[0].mxu0 %v5661
        %v5820 = vpop.f32.mrb[0].mxu0
        %v5821 = vadd.f32 %v5781, %v5820
        %v5822 = vpop.f32.mrb[0].mxu0
        %v5823 = vpop.f32.mrb[0].mxu0
        %v5824 = vpop.f32.mrb[0].mxu0
        %5825 = vdwg.mxu0
        %v5826 = vmax.f32 %v5821, 0.0
        %v5827 = vpack.c.bf16 %v5826, %v5826
        %v5828 = vld [vmem:[%s9] sm:$0xf]
        %v5829 = vld [vmem:[%s9 + $0x4] sm:$0xf]
        %v5830 = vld [vmem:[%s9 + $0x8] sm:$0xf]
        %v5831 = vld [vmem:[%s9 + $0xc] sm:$0xf]
        %v5832 = vld [vmem:[%s9 + $0x10] sm:$0xf]
        %v5833 = vld [vmem:[%s9 + $0x14] sm:$0xf]
        %v5834 = vld [vmem:[%s9 + $0x18] sm:$0xf]
        %v5835 = vld [vmem:[%s9 + $0x1c] sm:$0xf]
        %v5836 = vld [vmem:[%s9 + $0x20] sm:$0xf]
        %v5837 = vld [vmem:[%s9 + $0x24] sm:$0xf]
        %v5838 = vld [vmem:[%s9 + $0x28] sm:$0xf]
        %v5839 = vld [vmem:[%s9 + $0x2c] sm:$0xf]
        %v5840 = vld [vmem:[%s9 + $0x30] sm:$0xf]
        %v5841 = vld [vmem:[%s9 + $0x34] sm:$0xf]
        %v5842 = vld [vmem:[%s9 + $0x38] sm:$0xf]
        %v5843 = vld [vmem:[%s10] sm:$0x1]
        %v5845 = vlaneseq
        %v5846 = vshrl.u32 %v5845, 7
        %v5847 = vsub.s32 0, %v5846
        %v5848 = vrot.slane %v5843, %v5847
        %v5865 = vunpack.c.l.b16 %v5828
        %v5866 = vunpack.c.l.b16 %v5829
        %v5867 = vunpack.c.l.b16 %v5830
        %v5868 = vunpack.c.l.b16 %v5831
        %v5869 = vunpack.c.l.b16 %v5832
        %v5870 = vunpack.c.l.b16 %v5833
        %v5871 = vunpack.c.l.b16 %v5834
        %v5872 = vunpack.c.l.b16 %v5835
        %v5873 = vunpack.c.l.b16 %v5836
        %v5874 = vunpack.c.l.b16 %v5837
        %v5875 = vunpack.c.l.b16 %v5838
        %v5876 = vunpack.c.l.b16 %v5839
        %v5877 = vunpack.c.l.b16 %v5840
        %v5878 = vunpack.c.l.b16 %v5841
        %v5879 = vunpack.c.l.b16 %v5842
        %v5880 = vpack.c.b16 %v5866, %v5865
        %v5881 = vpack.c.b16 %v5868, %v5867
        %v5882 = vpack.c.b16 %v5870, %v5869
        %v5883 = vpack.c.b16 %v5872, %v5871
        %v5884 = vpack.c.b16 %v5874, %v5873
        %v5885 = vpack.c.b16 %v5876, %v5875
        %v5886 = vpack.c.b16 %v5878, %v5877
        %v5887 = vpack.c.b16 %v5879, %v5879
        %vm5895 = vcmask 982016
        %v5897 = vsel %vm5895, %v5827, 0
        %v5900 = vsel %vm986, %v5887, 0
        %5902 = vmatprep.subr.bf16.mxu0 0
        %5903 = vmatpush1.bf16.msra.mxu0 %v5880
        %5904 = vmatprep.subr.bf16.mxu0 0
        %5905 = vmatpush1.bf16.msra.mxu0 %v5881
        %5906 = vmatprep.subr.bf16.mxu0 0
        %5907 = vmatpush1.bf16.msra.mxu0 %v5882
        %5908 = vmatprep.subr.bf16.mxu0 0
        %5909 = vmatpush1.bf16.msra.mxu0 %v5883
        %5910 = vmatprep.subr.bf16.mxu0 0
        %5911 = vmatpush1.bf16.msra.mxu0 %v5884
        %5912 = vmatprep.subr.bf16.mxu0 0
        %5913 = vmatpush1.bf16.msra.mxu0 %v5885
        %5914 = vmatprep.subr.bf16.mxu0 0
        %5915 = vmatpush1.bf16.msra.mxu0 %v5886
        %5916 = vmatprep.subr.bf16.mxu0 0
        %5917 = vmatpush1.bf16.msra.mxu0 %v5900
        %5918 = vmatprep.subr.bf16.mxu0 0
        %5919 = vmatpush1.bf16.msra.mxu0 0
        %5920 = vmatprep.subr.bf16.mxu0 0
        %5921 = vmatpush1.bf16.msra.mxu0 0
        %5922 = vmatprep.subr.bf16.mxu0 0
        %5923 = vmatpush1.bf16.msra.mxu0 0
        %5924 = vmatprep.subr.bf16.mxu0 0
        %5925 = vmatpush1.bf16.msra.mxu0 0
        %5926 = vmatprep.subr.bf16.mxu0 0
        %5927 = vmatpush1.bf16.msra.mxu0 0
        %5928 = vmatprep.subr.bf16.mxu0 0
        %5929 = vmatpush1.bf16.msra.mxu0 0
        %5930 = vmatprep.subr.bf16.mxu0 0
        %5931 = vmatpush1.bf16.msra.mxu0 0
        %5932 = vmatprep.subr.bf16.mxu0 0
        %5933 = vmatpush1.bf16.msra.mxu0 0
        %5934 = vmatprep.mubr.bf16.mxu0 0
        %5935 = vmatmul.mubr.bf16.gmra.mrb[0].mxu0 %v5897
        %v5936 = vpop.f32.mrb[0].mxu0
        %v5937 = vadd.f32 %v5848, %v5936
        %v5938 = vpop.f32.mrb[0].mxu0
        %v5939 = vpop.f32.mrb[0].mxu0
        %v5940 = vpop.f32.mrb[0].mxu0
        %5941 = vdwg.mxu0
        %v5942 = vmax.f32 %v5937, 0.0
        %v5943 = vpack.c.bf16 %v5942, %v5942
        %v5944 = vld [vmem:[%s11] sm:$0xf]
        %v5945 = vld [vmem:[%s11 + $0x4] sm:$0xf]
        %v5946 = vld [vmem:[%s11 + $0x8] sm:$0xf]
        %v5947 = vld [vmem:[%s11 + $0xc] sm:$0xf]
        %v5948 = vld [vmem:[%s11 + $0x10] sm:$0xf]
        %v5949 = vld [vmem:[%s11 + $0x14] sm:$0xf]
        %v5950 = vld [vmem:[%s11 + $0x18] sm:$0xf]
        %v5951 = vld [vmem:[%s11 + $0x1c] sm:$0xf]
        %v5952 = vld [vmem:[%s11 + $0x20] sm:$0xf]
        %v5953 = vld [vmem:[%s11 + $0x24] sm:$0xf]
        %v5954 = vld [vmem:[%s11 + $0x28] sm:$0x3]
        %v5955 = vld [vmem:[%s12] sm:$0x1]
        %v5957 = vlaneseq
        %v5958 = vshrl.u32 %v5957, 7
        %v5959 = vsub.s32 0, %v5958
        %v5960 = vrot.slane %v5955, %v5959
        %v5973 = vunpack.c.l.b16 %v5944
        %v5974 = vunpack.c.l.b16 %v5945
        %v5975 = vunpack.c.l.b16 %v5946
        %v5976 = vunpack.c.l.b16 %v5947
        %v5977 = vunpack.c.l.b16 %v5948
        %v5978 = vunpack.c.l.b16 %v5949
        %v5979 = vunpack.c.l.b16 %v5950
        %v5980 = vunpack.c.l.b16 %v5951
        %v5981 = vunpack.c.l.b16 %v5952
        %v5982 = vunpack.c.l.b16 %v5953
        %v5983 = vunpack.c.l.b16 %v5954
        %v5984 = vpack.c.b16 %v5974, %v5973
        %v5985 = vpack.c.b16 %v5976, %v5975
        %v5986 = vpack.c.b16 %v5978, %v5977
        %v5987 = vpack.c.b16 %v5980, %v5979
        %v5988 = vpack.c.b16 %v5982, %v5981
        %v5989 = vpack.c.b16 %v5983, %v5983
        %vm5995 = vcmask 687104
        %v5997 = vsel %vm5995, %v5943, 0
        %v6000 = vsel %vm4123, %v5989, 0
        %6002 = vmatprep.subr.bf16.mxu0 0
        %6003 = vmatpush1.bf16.msra.mxu0 %v5984
        %6004 = vmatprep.subr.bf16.mxu0 0
        %6005 = vmatpush1.bf16.msra.mxu0 %v5985
        %6006 = vmatprep.subr.bf16.mxu0 0
        %6007 = vmatpush1.bf16.msra.mxu0 %v5986
        %6008 = vmatprep.subr.bf16.mxu0 0
        %6009 = vmatpush1.bf16.msra.mxu0 %v5987
        %6010 = vmatprep.subr.bf16.mxu0 0
        %6011 = vmatpush1.bf16.msra.mxu0 %v5988
        %6012 = vmatprep.subr.bf16.mxu0 0
        %6013 = vmatpush1.bf16.msra.mxu0 %v6000
        %6014 = vmatprep.subr.bf16.mxu0 0
        %6015 = vmatpush1.bf16.msra.mxu0 0
        %6016 = vmatprep.subr.bf16.mxu0 0
        %6017 = vmatpush1.bf16.msra.mxu0 0
        %6018 = vmatprep.subr.bf16.mxu0 0
        %6019 = vmatpush1.bf16.msra.mxu0 0
        %6020 = vmatprep.subr.bf16.mxu0 0
        %6021 = vmatpush1.bf16.msra.mxu0 0
        %6022 = vmatprep.subr.bf16.mxu0 0
        %6023 = vmatpush1.bf16.msra.mxu0 0
        %6024 = vmatprep.subr.bf16.mxu0 0
        %6025 = vmatpush1.bf16.msra.mxu0 0
        %6026 = vmatprep.subr.bf16.mxu0 0
        %6027 = vmatpush1.bf16.msra.mxu0 0
        %6028 = vmatprep.subr.bf16.mxu0 0
        %6029 = vmatpush1.bf16.msra.mxu0 0
        %6030 = vmatprep.subr.bf16.mxu0 0
        %6031 = vmatpush1.bf16.msra.mxu0 0
        %6032 = vmatprep.subr.bf16.mxu0 0
        %6033 = vmatpush1.bf16.msra.mxu0 0
        %6034 = vmatprep.mubr.bf16.mxu0 0
        %6035 = vmatmul.mubr.bf16.gmra.mrb[0].mxu0 %v5997
        %v6036 = vpop.f32.mrb[0].mxu0
        %v6037 = vadd.f32 %v5960, %v6036
        %v6038 = vpop.f32.mrb[0].mxu0
        %v6039 = vpop.f32.mrb[0].mxu0
        %v6040 = vpop.f32.mrb[0].mxu0
        %6041 = vdwg.mxu0
        %6042 = vst [vmem:[%s434] sm:$0xff] %v6037
        %s6043 = sand.u32 %s313, 1
        %s6044 = scalar_lea.sflag [#allocation3], %s6043
        %s6045 = sand.u32 %s313, 1
        %s6046 = smul.addr %s6045, 8
        %s6047 = scalar_lea.vmem [#allocation2], %s6046
        // Predicated region
        $region73: #{lenet_forward.1} parent=71 // pred_check
          %p6048 = pneg %p323
        $region74: #{lenet_forward.1} parent=71 // pred_check_branch
          %6050 = sbr.rel (%p6048) target = $region76
        $region75: #{lenet_forward.1} parent=71 // pred_region
          %s6052 = ssub.s32 128, 128
          %6053 = vsyncadd %s6044, %s6052
          %s6054 = smul.addr %s27, 128
          %s6055 = scalar_lea.hbm %s13, %s6054
          %s6057 = sshll.u32 %s6047, 4
          %s6058 = int_to_ptr.vmem [resolvable:$true] %s6057
          %6060 = dma.vmem_to_hbm [thread:$0]  %s6058, 128, %s6055, %s6044
        $region76: #{lenet_forward.1} parent=71 // pred_fallthru
          _
      $region72: #{lenet_forward.1} parent=5 // pred_fallthru
        _
      %p6061 = scmp.le.s32.totalorder 2, %s22
      // Predicated region
      $region77: #{lenet_forward.1} parent=5 // pred_check
        %p6062 = pneg %p6061
      $region78: #{lenet_forward.1} parent=5 // pred_check_branch
        %6064 = sbr.rel (%p6062) target = $region80
      $region79: #{lenet_forward.1} parent=5 // pred_region
        %s6065 = ssub.s32 %s22, 2
        // Predicated region
        $region81: #{lenet_forward.1} parent=79 // pred_check
          %p6066 = pneg %p329
        $region82: #{lenet_forward.1} parent=79 // pred_check_branch
          %6068 = sbr.rel (%p6066) target = $region84
        $region83: #{lenet_forward.1} parent=79 // pred_region
          %s6069 = sand.u32 %s314, 1
          %s6070 = scalar_lea.sflag [#allocation3], %s6069
          %s6071 = sand.u32 %s314, 1
          %s6072 = smul.addr %s6071, 8
          %s6073 = scalar_lea.vmem [#allocation2], %s6072
          %6074 = dma.done %s6070, 128
        $region84: #{lenet_forward.1} parent=79 // pred_fallthru
          _
      $region80: #{lenet_forward.1} parent=5 // pred_fallthru
        _
    $region6: #{lenet_forward.1} parent=1 // loop_footer
      %s26 = sadd.s32 1, %s22
    $region7: #{lenet_forward.1} parent=1 // loop_footer_branch
      %21 = sbr.rel target = $region3
    $region8: #{lenet_forward.1} parent=1 // loop_exit
      _
    %6075 = vsyncpa [#allocation3], 1
    %s6076 = scalar_lea.sflag [#allocation3], 1
    %6077 = vsyncpa %s6076, 1

</llo_original>
